<compile_context>
chip_gen: v7x
topology: tpu7x:2x2x1
jax: 0.10.0
libtpu: 0.0.40
codegen_flags: <defaults>
</compile_context>

<pallas_src>
import functools

import numpy as np
import jax
import jax.numpy as jnp
from jax.experimental import pallas as pl
from jax.experimental.pallas import tpu as pltpu

LRELU_SLOPE = 0.2
BN_EPS = 1e-5
VMEM_LIMIT_BYTES = 48 * 1024 * 1024   # explicit scoped-VMEM cap (< v7x 64 MiB)


def _round_up(x, m):
    return (x + m - 1) // m * m


# ----------------------------- Pallas kernel ---------------------------------
def _conv_gemm_kernel(a_ref, w_ref, o_ref, *rest, post_sigmoid, with_stats):
    """K-tiled im2col GEMM tile with fused epilogue.

    grid = (j: OC tiles, i: M tiles, k: K tiles); k is the reduction axis.
    Outputs: conv result tile (f32) and, optionally, per-channel sum /
    sum-of-squares (BatchNorm batch stats) accumulated in a (0, j) output
    block that is revisited consecutively across all (i, k) steps.
    """
    if with_stats:
        sum_ref, ssq_ref, acc_ref = rest
    else:
        (acc_ref,) = rest

    @pl.when(pl.program_id(2) == 0)
    def _init_acc():
        acc_ref[...] = jnp.zeros_like(acc_ref)

    acc_ref[...] += jnp.dot(a_ref[...], w_ref[...],
                            preferred_element_type=jnp.float32)

    last_k = pl.program_id(2) == pl.num_programs(2) - 1

    if with_stats:
        @pl.when(last_k & (pl.program_id(1) == 0))
        def _init_stats():
            sum_ref[...] = jnp.zeros_like(sum_ref)
            ssq_ref[...] = jnp.zeros_like(ssq_ref)

    @pl.when(last_k)
    def _finalize():
        acc = acc_ref[...]
        if post_sigmoid:
            acc = 1.0 / (1.0 + jnp.exp(-acc))
        o_ref[...] = acc.astype(o_ref.dtype)
        if with_stats:
            sum_ref[...] += jnp.sum(acc, axis=0, keepdims=True)
            ssq_ref[...] += jnp.sum(acc * acc, axis=0, keepdims=True)


# ------------------------------- conv glue ------------------------------------
def _im2col(x_nhwc, k, stride, pad):
    n, h, w, c = x_nhwc.shape
    xp = jnp.pad(x_nhwc, ((0, 0), (pad, pad), (pad, pad), (0, 0)))
    oh = (h + 2 * pad - k) // stride + 1
    ow = (w + 2 * pad - k) // stride + 1
    cols = []
    for i in range(k):
        for j in range(k):
            cols.append(xp[:, i:i + stride * oh:stride,
                           j:j + stride * ow:stride, :])
    patches = jnp.stack(cols, axis=3)              # (N, OH, OW, KH*KW, C)
    return patches.reshape(n * oh * ow, k * k * c), (n, oh, ow)


def conv2d_pallas(x_nhwc, w_oihw, stride, pad, *, post_sigmoid=False,
                  with_stats=False):
    """4x4 conv, no bias, via K-tiled bf16 GEMM with f32 accumulation.

    Returns y_nhwc (f32); if with_stats, also per-channel (mean, var) of y
    (training-mode BatchNorm statistics) accumulated inside the kernel.
    """
    oc, ic, kh, kw = w_oihw.shape

    # bf16 GEMM operands; the (already activated) NHWC input is cast before
    # im2col so the inflated patch matrix is materialized in bf16.
    a, (n, oh, ow) = _im2col(x_nhwc.astype(jnp.bfloat16), kh, stride, pad)
    w_gemm = jnp.transpose(w_oihw, (2, 3, 1, 0)).reshape(kh * kw * ic, oc)
    w_gemm = w_gemm.astype(jnp.bfloat16)

    m, k_raw = a.shape

    # Tile selection: lane-dense K/OC, ~<5 MiB of VMEM per step (fits v7x).
    tn = 256 if oc > 128 else 128
    oc_pad = _round_up(oc, tn)
    tk = 512 if k_raw >= 512 else _round_up(k_raw, 128)
    k_pad = _round_up(k_raw, tk)
    tm = min(512, _round_up(m, 8))
    m_pad = _round_up(m, tm)

    a_p = jnp.pad(a, ((0, m_pad - m), (0, k_pad - k_raw)))
    w_p = jnp.pad(w_gemm, ((0, k_pad - k_raw), (0, oc_pad - oc)))

    n_j, n_i, n_k = oc_pad // tn, m_pad // tm, k_pad // tk

    out_shape = [jax.ShapeDtypeStruct((m_pad, oc_pad), jnp.float32)]
    out_specs = [pl.BlockSpec((tm, tn), lambda j, i, k: (i, j))]
    if with_stats:
        out_shape += [jax.ShapeDtypeStruct((1, oc_pad), jnp.float32)] * 2
        out_specs += [pl.BlockSpec((1, tn), lambda j, i, k: (0, j))] * 2

    cost = pl.CostEstimate(
        flops=2 * m_pad * k_pad * oc_pad,
        transcendentals=m_pad * oc_pad if post_sigmoid else 0,
        bytes_accessed=(m_pad * k_pad * 2 + k_pad * oc_pad * 2
                        + m_pad * oc_pad * 4))

    kernel = functools.partial(_conv_gemm_kernel, post_sigmoid=post_sigmoid,
                               with_stats=with_stats)
    res = pl.pallas_call(
        kernel,
        out_shape=out_shape,
        grid_spec=pltpu.PrefetchScalarGridSpec(
            num_scalar_prefetch=0,
            grid=(n_j, n_i, n_k),
            in_specs=[pl.BlockSpec((tm, tk), lambda j, i, k: (i, k)),
                      pl.BlockSpec((tk, tn), lambda j, i, k: (k, j))],
            out_specs=out_specs,
            scratch_shapes=[pltpu.VMEM((tm, tn), jnp.float32)]),
        compiler_params=pltpu.CompilerParams(
            dimension_semantics=(("parallel", "arbitrary", "arbitrary")
                                 if with_stats else
                                 ("parallel", "parallel", "arbitrary")),
            vmem_limit_bytes=VMEM_LIMIT_BYTES),
        cost_estimate=cost,
    )(a_p, w_p)

    y = res[0][:m, :oc].reshape(n, oh, ow, oc)
    if not with_stats:
        return y
    count = jnp.float32(m)                      # real (unpadded) rows only
    mean = res[1][0, :oc] / count
    var = res[2][0, :oc] / count - mean * mean  # biased (training-mode) var
    return y, mean, var


# --------------------------- activation glue ----------------------------------
def _leaky(x):
    return jnp.where(x >= 0, x, x * LRELU_SLOPE)


def _bn_leaky(x, mean, var):
    # training-mode BatchNorm2d (gamma=1, beta=0) fused with the next layer's
    # LeakyReLU(0.2), applied once on the un-inflated NHWC activation.
    x = (x - mean) * jax.lax.rsqrt(var + BN_EPS)
    return _leaky(x)


# ------------------------------ forward pass ----------------------------------
@jax.jit
def unet_encoder_forward(x_nchw, params):
    x = jnp.transpose(x_nchw, (0, 2, 3, 1)).astype(jnp.float32)            # NHWC
    x1 = conv2d_pallas(x, params["w1"], 2, 1)                              # L1
    x2, m2, v2 = conv2d_pallas(_leaky(x1), params["w2"], 2, 1,
                               with_stats=True)                            # L2
    x3, m3, v3 = conv2d_pallas(_bn_leaky(x2, m2, v2), params["w3"], 2, 1,
                               with_stats=True)                            # L3
    x4, m4, v4 = conv2d_pallas(_bn_leaky(x3, m3, v3), params["w4"], 1, 1,
                               with_stats=True)                            # L4
    y = conv2d_pallas(_bn_leaky(x4, m4, v4), params["w5"], 1, 1,
                      post_sigmoid=True)                                   # L5
    return jnp.transpose(y, (0, 3, 1, 2))                                  # NCHW


# ------------------------------ JAX reference ----------------------------------
def _conv_ref(x, w, stride, pad):
    return jax.lax.conv_general_dilated(
        x, w, (stride, stride), ((pad, pad), (pad, pad)),
        dimension_numbers=("NCHW", "OIHW", "NCHW"),
        precision=jax.lax.Precision.HIGHEST)


def ref_forward(x, p, emulate_bf16_inputs=False):
    if emulate_bf16_inputs:
        q = lambda t: t.astype(jnp.bfloat16).astype(jnp.float32)
    else:
        q = lambda t: t
    lrelu = lambda t: jnp.where(t >= 0, t, t * LRELU_SLOPE)

    def bn(t):
        m = jnp.mean(t, axis=(0, 2, 3), keepdims=True)
        v = jnp.mean(t * t, axis=(0, 2, 3), keepdims=True) - m * m
        return (t - m) * jax.lax.rsqrt(v + BN_EPS)

    conv = lambda t, w, s: _conv_ref(q(t), q(w), s, 1)
    x1 = conv(x, p["w1"], 2)
    x2 = bn(conv(lrelu(x1), p["w2"], 2))
    x3 = bn(conv(lrelu(x2), p["w3"], 2))
    x4 = bn(conv(lrelu(x3), p["w4"], 1))
    return jax.nn.sigmoid(conv(lrelu(x4), p["w5"], 1))


# ---------------------------------- main ---------------------------------------
if __name__ == "__main__":
    nc, nf = 3, 8               # nf scaled down from 128 for a small demo
    N, H, W = 2, 32, 32

    key = jax.random.PRNGKey(0)
    ks = jax.random.split(key, 6)
    params = {
        "w1": 0.1 * jax.random.normal(ks[1], (nf, nc, 4, 4), jnp.float32),
        "w2": 0.1 * jax.random.normal(ks[2], (nf * 2, nf, 4, 4), jnp.float32),
        "w3": 0.1 * jax.random.normal(ks[3], (nf * 4, nf * 2, 4, 4), jnp.float32),
        "w4": 0.1 * jax.random.normal(ks[4], (nf * 8, nf * 4, 4, 4), jnp.float32),
        "w5": 0.1 * jax.random.normal(ks[5], (1, nf * 8, 4, 4), jnp.float32),
    }
    x = jax.random.normal(ks[0], (N, nc, H, W), jnp.float32)

    out = jax.block_until_ready(unet_encoder_forward(x, params))
    assert out.shape == (N, 1, 2, 2), out.shape

    # Tight check vs. a reference with identical bf16 operand rounding
    # (kernel accumulates in f32; only summation order differs).
    ref_q = jax.block_until_ready(
        jax.jit(functools.partial(ref_forward, emulate_bf16_inputs=True))(x, params))
    np.testing.assert_allclose(np.asarray(out), np.asarray(ref_q),
                               rtol=5e-3, atol=5e-3)

    # Loose sanity check vs. the pure-f32 module semantics.
    ref_f32 = jax.block_until_ready(
        jax.jit(functools.partial(ref_forward, emulate_bf16_inputs=False))(x, params))
    np.testing.assert_allclose(np.asarray(out), np.asarray(ref_f32),
                               rtol=1e-1, atol=8e-2)

    print("KERNEL_OK")
</pallas_src>

<mosaic_0001>
module attributes {stable_mosaic.version = 11 : i64} {
  func.func @_conv_gemm_kernel(%arg0: i32, %arg1: i32, %arg2: i32, %arg3: memref<512x128xbf16, #tpu.memory_space<vmem>>, %arg4: memref<128x128xbf16, #tpu.memory_space<vmem>>, %arg5: memref<512x128xf32, #tpu.memory_space<vmem>>, %arg6: memref<512x128xf32, #tpu.memory_space<vmem>>) attributes {dimension_semantics = [#tpu.dimension_semantics<parallel>, #tpu.dimension_semantics<parallel>, #tpu.dimension_semantics<arbitrary>], iteration_bounds = array<i64: 1, 1, 1>, scalar_prefetch = 0 : i64, scratch_operands = 1 : i64, tpu.core_type = #tpu.core_type<tc>, window_params = [{transform_indices = @transform_0, window_bounds = array<i64: 512, 128>}, {transform_indices = @transform_1, window_bounds = array<i64: 128, 128>}, {transform_indices = @transform_2, window_bounds = array<i64: 512, 128>}]} {
    %c0_i32 = arith.constant 0 : i32
    %0 = arith.cmpi eq, %arg2, %c0_i32 : i32
    %1 = arith.extui %0 : i1 to i32
    %c0_i32_0 = arith.constant 0 : i32
    %2 = arith.cmpi ne, %1, %c0_i32_0 : i32
    scf.if %2 {
      %cst_10 = arith.constant 0.000000e+00 : f32
      %12 = vector.broadcast %cst_10 : f32 to vector<512x128xf32>
      %c0_11 = arith.constant 0 : index
      %c0_12 = arith.constant 0 : index
      %13 = vector.load %arg6[%c0_11, %c0_12] : memref<512x128xf32, #tpu.memory_space<vmem>>, vector<512x128xf32>
      tpu.vector_store %arg6[%c0_11, %c0_12], %12 {strides = array<i32>} : memref<512x128xf32, #tpu.memory_space<vmem>>, vector<512x128xf32>,
    } else {
    }
    %c0 = arith.constant 0 : index
    %c0_1 = arith.constant 0 : index
    %3 = vector.load %arg6[%c0, %c0_1] : memref<512x128xf32, #tpu.memory_space<vmem>>, vector<512x128xf32>
    %c0_2 = arith.constant 0 : index
    %c0_3 = arith.constant 0 : index
    %4 = vector.load %arg3[%c0_2, %c0_3] : memref<512x128xbf16, #tpu.memory_space<vmem>>, vector<512x128xbf16>
    %c0_4 = arith.constant 0 : index
    %c0_5 = arith.constant 0 : index
    %5 = vector.load %arg4[%c0_4, %c0_5] : memref<128x128xbf16, #tpu.memory_space<vmem>>, vector<128x128xbf16>
    %cst = arith.constant dense<0.000000e+00> : vector<512x128xf32>
    %6 = tpu.matmul %4, %5, %cst {dimension_numbers = #tpu.dot_dimension_numbers<[1], [0], [0], [1], [0, 0, 1, 1], [], []>} : vector<512x128xbf16>, vector<128x128xbf16>, vector<512x128xf32> -> vector<512x128xf32>
    %7 = arith.addf %3, %6 : vector<512x128xf32>
    %c0_6 = arith.constant 0 : index
    %c0_7 = arith.constant 0 : index
    %8 = vector.load %arg6[%c0_6, %c0_7] : memref<512x128xf32, #tpu.memory_space<vmem>>, vector<512x128xf32>
    tpu.vector_store %arg6[%c0_6, %c0_7], %7 {strides = array<i32>} : memref<512x128xf32, #tpu.memory_space<vmem>>, vector<512x128xf32>,
    %c0_i32_8 = arith.constant 0 : i32
    %9 = arith.cmpi eq, %arg2, %c0_i32_8 : i32
    %10 = arith.extui %9 : i1 to i32
    %c0_i32_9 = arith.constant 0 : i32
    %11 = arith.cmpi ne, %10, %c0_i32_9 : i32
    scf.if %11 {
      %c0_10 = arith.constant 0 : index
      %c0_11 = arith.constant 0 : index
      %12 = vector.load %arg6[%c0_10, %c0_11] : memref<512x128xf32, #tpu.memory_space<vmem>>, vector<512x128xf32>
      %c0_12 = arith.constant 0 : index
      %c0_13 = arith.constant 0 : index
      %13 = vector.load %arg5[%c0_12, %c0_13] : memref<512x128xf32, #tpu.memory_space<vmem>>, vector<512x128xf32>
      tpu.vector_store %arg5[%c0_12, %c0_13], %12 {strides = array<i32>} : memref<512x128xf32, #tpu.memory_space<vmem>>, vector<512x128xf32>,
    } else {
    }
    return
  }
  func.func @transform_0(%arg0: i32, %arg1: i32, %arg2: i32) -> (i32, i32) {
    %c0_i32 = arith.constant 0 : i32
    return %arg1, %arg2 : i32, i32
  }
  func.func @transform_1(%arg0: i32, %arg1: i32, %arg2: i32) -> (i32, i32) {
    %c0_i32 = arith.constant 0 : i32
    return %arg2, %arg0 : i32, i32
  }
  func.func @transform_2(%arg0: i32, %arg1: i32, %arg2: i32) -> (i32, i32) {
    %c0_i32 = arith.constant 0 : i32
    return %arg1, %arg0 : i32, i32
  }
}

module attributes {stable_mosaic.version = 11 : i64} {
  func.func @_conv_gemm_kernel(%arg0: i32, %arg1: i32, %arg2: i32, %arg3: memref<128x128xbf16, #tpu.memory_space<vmem>>, %arg4: memref<128x128xbf16, #tpu.memory_space<vmem>>, %arg5: memref<128x128xf32, #tpu.memory_space<vmem>>, %arg6: memref<1x128xf32, #tpu.memory_space<vmem>>, %arg7: memref<1x128xf32, #tpu.memory_space<vmem>>, %arg8: memref<128x128xf32, #tpu.memory_space<vmem>>) attributes {dimension_semantics = [#tpu.dimension_semantics<parallel>, #tpu.dimension_semantics<arbitrary>, #tpu.dimension_semantics<arbitrary>], iteration_bounds = array<i64: 1, 1, 1>, scalar_prefetch = 0 : i64, scratch_operands = 1 : i64, tpu.core_type = #tpu.core_type<tc>, window_params = [{transform_indices = @transform_0, window_bounds = array<i64: 128, 128>}, {transform_indices = @transform_1, window_bounds = array<i64: 128, 128>}, {transform_indices = @transform_2, window_bounds = array<i64: 128, 128>}, {transform_indices = @transform_3, window_bounds = array<i64: 1, 128>}, {transform_indices = @transform_4, window_bounds = array<i64: 1, 128>}]} {
    %c0_i32 = arith.constant 0 : i32
    %0 = arith.cmpi eq, %arg2, %c0_i32 : i32
    %1 = arith.extui %0 : i1 to i32
    %c0_i32_0 = arith.constant 0 : i32
    %2 = arith.cmpi ne, %1, %c0_i32_0 : i32
    scf.if %2 {
      %cst_12 = arith.constant 0.000000e+00 : f32
      %16 = vector.broadcast %cst_12 : f32 to vector<128x128xf32>
      %c0_13 = arith.constant 0 : index
      %c0_14 = arith.constant 0 : index
      %17 = vector.load %arg8[%c0_13, %c0_14] : memref<128x128xf32, #tpu.memory_space<vmem>>, vector<128x128xf32>
      tpu.vector_store %arg8[%c0_13, %c0_14], %16 {strides = array<i32>} : memref<128x128xf32, #tpu.memory_space<vmem>>, vector<128x128xf32>,
    } else {
    }
    %c0 = arith.constant 0 : index
    %c0_1 = arith.constant 0 : index
    %3 = vector.load %arg8[%c0, %c0_1] : memref<128x128xf32, #tpu.memory_space<vmem>>, vector<128x128xf32>
    %c0_2 = arith.constant 0 : index
    %c0_3 = arith.constant 0 : index
    %4 = vector.load %arg3[%c0_2, %c0_3] : memref<128x128xbf16, #tpu.memory_space<vmem>>, vector<128x128xbf16>
    %c0_4 = arith.constant 0 : index
    %c0_5 = arith.constant 0 : index
    %5 = vector.load %arg4[%c0_4, %c0_5] : memref<128x128xbf16, #tpu.memory_space<vmem>>, vector<128x128xbf16>
    %cst = arith.constant dense<0.000000e+00> : vector<128x128xf32>
    %6 = tpu.matmul %4, %5, %cst {dimension_numbers = #tpu.dot_dimension_numbers<[1], [0], [0], [1], [0, 0, 1, 1], [], []>} : vector<128x128xbf16>, vector<128x128xbf16>, vector<128x128xf32> -> vector<128x128xf32>
    %7 = arith.addf %3, %6 : vector<128x128xf32>
    %c0_6 = arith.constant 0 : index
    %c0_7 = arith.constant 0 : index
    %8 = vector.load %arg8[%c0_6, %c0_7] : memref<128x128xf32, #tpu.memory_space<vmem>>, vector<128x128xf32>
    tpu.vector_store %arg8[%c0_6, %c0_7], %7 {strides = array<i32>} : memref<128x128xf32, #tpu.memory_space<vmem>>, vector<128x128xf32>,
    %c0_i32_8 = arith.constant 0 : i32
    %9 = arith.cmpi eq, %arg2, %c0_i32_8 : i32
    %c0_i32_9 = arith.constant 0 : i32
    %10 = arith.cmpi eq, %arg1, %c0_i32_9 : i32
    %11 = arith.andi %9, %10 : i1
    %12 = arith.extui %11 : i1 to i32
    %c0_i32_10 = arith.constant 0 : i32
    %13 = arith.cmpi ne, %12, %c0_i32_10 : i32
    scf.if %13 {
      %cst_12 = arith.constant 0.000000e+00 : f32
      %16 = vector.broadcast %cst_12 : f32 to vector<1x128xf32>
      %c0_13 = arith.constant 0 : index
      %c0_14 = arith.constant 0 : index
      %17 = vector.load %arg6[%c0_13, %c0_14] : memref<1x128xf32, #tpu.memory_space<vmem>>, vector<1x128xf32>
      tpu.vector_store %arg6[%c0_13, %c0_14], %16 {strides = array<i32>} : memref<1x128xf32, #tpu.memory_space<vmem>>, vector<1x128xf32>,
      %cst_15 = arith.constant 0.000000e+00 : f32
      %18 = vector.broadcast %cst_15 : f32 to vector<1x128xf32>
      %c0_16 = arith.constant 0 : index
      %c0_17 = arith.constant 0 : index
      %19 = vector.load %arg7[%c0_16, %c0_17] : memref<1x128xf32, #tpu.memory_space<vmem>>, vector<1x128xf32>
      tpu.vector_store %arg7[%c0_16, %c0_17], %18 {strides = array<i32>} : memref<1x128xf32, #tpu.memory_space<vmem>>, vector<1x128xf32>,
    } else {
    }
    %14 = arith.extui %9 : i1 to i32
    %c0_i32_11 = arith.constant 0 : i32
    %15 = arith.cmpi ne, %14, %c0_i32_11 : i32
    scf.if %15 {
      %c0_12 = arith.constant 0 : index
      %c0_13 = arith.constant 0 : index
      %16 = vector.load %arg8[%c0_12, %c0_13] : memref<128x128xf32, #tpu.memory_space<vmem>>, vector<128x128xf32>
      %c0_14 = arith.constant 0 : index
      %c0_15 = arith.constant 0 : index
      %17 = vector.load %arg5[%c0_14, %c0_15] : memref<128x128xf32, #tpu.memory_space<vmem>>, vector<128x128xf32>
      tpu.vector_store %arg5[%c0_14, %c0_15], %16 {strides = array<i32>} : memref<128x128xf32, #tpu.memory_space<vmem>>, vector<128x128xf32>,
      %c0_16 = arith.constant 0 : index
      %c0_17 = arith.constant 0 : index
      %18 = vector.load %arg6[%c0_16, %c0_17] : memref<1x128xf32, #tpu.memory_space<vmem>>, vector<1x128xf32>
      %cst_18 = arith.constant dense<0.000000e+00> : vector<128xf32>
      %19 = vector.multi_reduction <add>, %16, %cst_18 [0] : vector<128x128xf32> to vector<128xf32>
      %20 = vector.shape_cast %19 : vector<128xf32> to vector<1x128xf32>
      %21 = arith.addf %18, %20 : vector<1x128xf32>
      %c0_19 = arith.constant 0 : index
      %c0_20 = arith.constant 0 : index
      %22 = vector.load %arg6[%c0_19, %c0_20] : memref<1x128xf32, #tpu.memory_space<vmem>>, vector<1x128xf32>
      tpu.vector_store %arg6[%c0_19, %c0_20], %21 {strides = array<i32>} : memref<1x128xf32, #tpu.memory_space<vmem>>, vector<1x128xf32>,
      %c0_21 = arith.constant 0 : index
      %c0_22 = arith.constant 0 : index
      %23 = vector.load %arg7[%c0_21, %c0_22] : memref<1x128xf32, #tpu.memory_space<vmem>>, vector<1x128xf32>
      %24 = arith.mulf %16, %16 : vector<128x128xf32>
      %cst_23 = arith.constant dense<0.000000e+00> : vector<128xf32>
      %25 = vector.multi_reduction <add>, %24, %cst_23 [0] : vector<128x128xf32> to vector<128xf32>
      %26 = vector.shape_cast %25 : vector<128xf32> to vector<1x128xf32>
      %27 = arith.addf %23, %26 : vector<1x128xf32>
      %c0_24 = arith.constant 0 : index
      %c0_25 = arith.constant 0 : index
      %28 = vector.load %arg7[%c0_24, %c0_25] : memref<1x128xf32, #tpu.memory_space<vmem>>, vector<1x128xf32>
      tpu.vector_store %arg7[%c0_24, %c0_25], %27 {strides = array<i32>} : memref<1x128xf32, #tpu.memory_space<vmem>>, vector<1x128xf32>,
    } else {
    }
    return
  }
  func.func @transform_0(%arg0: i32, %arg1: i32, %arg2: i32) -> (i32, i32) {
    %c0_i32 = arith.constant 0 : i32
    return %arg1, %arg2 : i32, i32
  }
  func.func @transform_1(%arg0: i32, %arg1: i32, %arg2: i32) -> (i32, i32) {
    %c0_i32 = arith.constant 0 : i32
    return %arg2, %arg0 : i32, i32
  }
  func.func @transform_2(%arg0: i32, %arg1: i32, %arg2: i32) -> (i32, i32) {
    %c0_i32 = arith.constant 0 : i32
    return %arg1, %arg0 : i32, i32
  }
  func.func @transform_3(%arg0: i32, %arg1: i32, %arg2: i32) -> (i32, i32) {
    %c0_i32 = arith.constant 0 : i32
    %c0_i32_0 = arith.constant 0 : i32
    return %c0_i32, %arg0 : i32, i32
  }
  func.func @transform_4(%arg0: i32, %arg1: i32, %arg2: i32) -> (i32, i32) {
    %c0_i32 = arith.constant 0 : i32
    %c0_i32_0 = arith.constant 0 : i32
    return %c0_i32, %arg0 : i32, i32
  }
}

module attributes {stable_mosaic.version = 11 : i64} {
  func.func @_conv_gemm_kernel(%arg0: i32, %arg1: i32, %arg2: i32, %arg3: memref<32x256xbf16, #tpu.memory_space<vmem>>, %arg4: memref<256x128xbf16, #tpu.memory_space<vmem>>, %arg5: memref<32x128xf32, #tpu.memory_space<vmem>>, %arg6: memref<1x128xf32, #tpu.memory_space<vmem>>, %arg7: memref<1x128xf32, #tpu.memory_space<vmem>>, %arg8: memref<32x128xf32, #tpu.memory_space<vmem>>) attributes {dimension_semantics = [#tpu.dimension_semantics<parallel>, #tpu.dimension_semantics<arbitrary>, #tpu.dimension_semantics<arbitrary>], iteration_bounds = array<i64: 1, 1, 1>, scalar_prefetch = 0 : i64, scratch_operands = 1 : i64, tpu.core_type = #tpu.core_type<tc>, window_params = [{transform_indices = @transform_0, window_bounds = array<i64: 32, 256>}, {transform_indices = @transform_1, window_bounds = array<i64: 256, 128>}, {transform_indices = @transform_2, window_bounds = array<i64: 32, 128>}, {transform_indices = @transform_3, window_bounds = array<i64: 1, 128>}, {transform_indices = @transform_4, window_bounds = array<i64: 1, 128>}]} {
    %c0_i32 = arith.constant 0 : i32
    %0 = arith.cmpi eq, %arg2, %c0_i32 : i32
    %1 = arith.extui %0 : i1 to i32
    %c0_i32_0 = arith.constant 0 : i32
    %2 = arith.cmpi ne, %1, %c0_i32_0 : i32
    scf.if %2 {
      %cst_12 = arith.constant 0.000000e+00 : f32
      %16 = vector.broadcast %cst_12 : f32 to vector<32x128xf32>
      %c0_13 = arith.constant 0 : index
      %c0_14 = arith.constant 0 : index
      %17 = vector.load %arg8[%c0_13, %c0_14] : memref<32x128xf32, #tpu.memory_space<vmem>>, vector<32x128xf32>
      tpu.vector_store %arg8[%c0_13, %c0_14], %16 {strides = array<i32>} : memref<32x128xf32, #tpu.memory_space<vmem>>, vector<32x128xf32>,
    } else {
    }
    %c0 = arith.constant 0 : index
    %c0_1 = arith.constant 0 : index
    %3 = vector.load %arg8[%c0, %c0_1] : memref<32x128xf32, #tpu.memory_space<vmem>>, vector<32x128xf32>
    %c0_2 = arith.constant 0 : index
    %c0_3 = arith.constant 0 : index
    %4 = vector.load %arg3[%c0_2, %c0_3] : memref<32x256xbf16, #tpu.memory_space<vmem>>, vector<32x256xbf16>
    %c0_4 = arith.constant 0 : index
    %c0_5 = arith.constant 0 : index
    %5 = vector.load %arg4[%c0_4, %c0_5] : memref<256x128xbf16, #tpu.memory_space<vmem>>, vector<256x128xbf16>
    %cst = arith.constant dense<0.000000e+00> : vector<32x128xf32>
    %6 = tpu.matmul %4, %5, %cst {dimension_numbers = #tpu.dot_dimension_numbers<[1], [0], [0], [1], [0, 0, 1, 1], [], []>} : vector<32x256xbf16>, vector<256x128xbf16>, vector<32x128xf32> -> vector<32x128xf32>
    %7 = arith.addf %3, %6 : vector<32x128xf32>
    %c0_6 = arith.constant 0 : index
    %c0_7 = arith.constant 0 : index
    %8 = vector.load %arg8[%c0_6, %c0_7] : memref<32x128xf32, #tpu.memory_space<vmem>>, vector<32x128xf32>
    tpu.vector_store %arg8[%c0_6, %c0_7], %7 {strides = array<i32>} : memref<32x128xf32, #tpu.memory_space<vmem>>, vector<32x128xf32>,
    %c0_i32_8 = arith.constant 0 : i32
    %9 = arith.cmpi eq, %arg2, %c0_i32_8 : i32
    %c0_i32_9 = arith.constant 0 : i32
    %10 = arith.cmpi eq, %arg1, %c0_i32_9 : i32
    %11 = arith.andi %9, %10 : i1
    %12 = arith.extui %11 : i1 to i32
    %c0_i32_10 = arith.constant 0 : i32
    %13 = arith.cmpi ne, %12, %c0_i32_10 : i32
    scf.if %13 {
      %cst_12 = arith.constant 0.000000e+00 : f32
      %16 = vector.broadcast %cst_12 : f32 to vector<1x128xf32>
      %c0_13 = arith.constant 0 : index
      %c0_14 = arith.constant 0 : index
      %17 = vector.load %arg6[%c0_13, %c0_14] : memref<1x128xf32, #tpu.memory_space<vmem>>, vector<1x128xf32>
      tpu.vector_store %arg6[%c0_13, %c0_14], %16 {strides = array<i32>} : memref<1x128xf32, #tpu.memory_space<vmem>>, vector<1x128xf32>,
      %cst_15 = arith.constant 0.000000e+00 : f32
      %18 = vector.broadcast %cst_15 : f32 to vector<1x128xf32>
      %c0_16 = arith.constant 0 : index
      %c0_17 = arith.constant 0 : index
      %19 = vector.load %arg7[%c0_16, %c0_17] : memref<1x128xf32, #tpu.memory_space<vmem>>, vector<1x128xf32>
      tpu.vector_store %arg7[%c0_16, %c0_17], %18 {strides = array<i32>} : memref<1x128xf32, #tpu.memory_space<vmem>>, vector<1x128xf32>,
    } else {
    }
    %14 = arith.extui %9 : i1 to i32
    %c0_i32_11 = arith.constant 0 : i32
    %15 = arith.cmpi ne, %14, %c0_i32_11 : i32
    scf.if %15 {
      %c0_12 = arith.constant 0 : index
      %c0_13 = arith.constant 0 : index
      %16 = vector.load %arg8[%c0_12, %c0_13] : memref<32x128xf32, #tpu.memory_space<vmem>>, vector<32x128xf32>
      %c0_14 = arith.constant 0 : index
      %c0_15 = arith.constant 0 : index
      %17 = vector.load %arg5[%c0_14, %c0_15] : memref<32x128xf32, #tpu.memory_space<vmem>>, vector<32x128xf32>
      tpu.vector_store %arg5[%c0_14, %c0_15], %16 {strides = array<i32>} : memref<32x128xf32, #tpu.memory_space<vmem>>, vector<32x128xf32>,
      %c0_16 = arith.constant 0 : index
      %c0_17 = arith.constant 0 : index
      %18 = vector.load %arg6[%c0_16, %c0_17] : memref<1x128xf32, #tpu.memory_space<vmem>>, vector<1x128xf32>
      %cst_18 = arith.constant dense<0.000000e+00> : vector<128xf32>
      %19 = vector.multi_reduction <add>, %16, %cst_18 [0] : vector<32x128xf32> to vector<128xf32>
      %20 = vector.shape_cast %19 : vector<128xf32> to vector<1x128xf32>
      %21 = arith.addf %18, %20 : vector<1x128xf32>
      %c0_19 = arith.constant 0 : index
      %c0_20 = arith.constant 0 : index
      %22 = vector.load %arg6[%c0_19, %c0_20] : memref<1x128xf32, #tpu.memory_space<vmem>>, vector<1x128xf32>
      tpu.vector_store %arg6[%c0_19, %c0_20], %21 {strides = array<i32>} : memref<1x128xf32, #tpu.memory_space<vmem>>, vector<1x128xf32>,
      %c0_21 = arith.constant 0 : index
      %c0_22 = arith.constant 0 : index
      %23 = vector.load %arg7[%c0_21, %c0_22] : memref<1x128xf32, #tpu.memory_space<vmem>>, vector<1x128xf32>
      %24 = arith.mulf %16, %16 : vector<32x128xf32>
      %cst_23 = arith.constant dense<0.000000e+00> : vector<128xf32>
      %25 = vector.multi_reduction <add>, %24, %cst_23 [0] : vector<32x128xf32> to vector<128xf32>
      %26 = vector.shape_cast %25 : vector<128xf32> to vector<1x128xf32>
      %27 = arith.addf %23, %26 : vector<1x128xf32>
      %c0_24 = arith.constant 0 : index
      %c0_25 = arith.constant 0 : index
      %28 = vector.load %arg7[%c0_24, %c0_25] : memref<1x128xf32, #tpu.memory_space<vmem>>, vector<1x128xf32>
      tpu.vector_store %arg7[%c0_24, %c0_25], %27 {strides = array<i32>} : memref<1x128xf32, #tpu.memory_space<vmem>>, vector<1x128xf32>,
    } else {
    }
    return
  }
  func.func @transform_0(%arg0: i32, %arg1: i32, %arg2: i32) -> (i32, i32) {
    %c0_i32 = arith.constant 0 : i32
    return %arg1, %arg2 : i32, i32
  }
  func.func @transform_1(%arg0: i32, %arg1: i32, %arg2: i32) -> (i32, i32) {
    %c0_i32 = arith.constant 0 : i32
    return %arg2, %arg0 : i32, i32
  }
  func.func @transform_2(%arg0: i32, %arg1: i32, %arg2: i32) -> (i32, i32) {
    %c0_i32 = arith.constant 0 : i32
    return %arg1, %arg0 : i32, i32
  }
  func.func @transform_3(%arg0: i32, %arg1: i32, %arg2: i32) -> (i32, i32) {
    %c0_i32 = arith.constant 0 : i32
    %c0_i32_0 = arith.constant 0 : i32
    return %c0_i32, %arg0 : i32, i32
  }
  func.func @transform_4(%arg0: i32, %arg1: i32, %arg2: i32) -> (i32, i32) {
    %c0_i32 = arith.constant 0 : i32
    %c0_i32_0 = arith.constant 0 : i32
    return %c0_i32, %arg0 : i32, i32
  }
}

module attributes {stable_mosaic.version = 11 : i64} {
  func.func @_conv_gemm_kernel(%arg0: i32, %arg1: i32, %arg2: i32, %arg3: memref<24x512xbf16, #tpu.memory_space<vmem>>, %arg4: memref<512x128xbf16, #tpu.memory_space<vmem>>, %arg5: memref<24x128xf32, #tpu.memory_space<vmem>>, %arg6: memref<1x128xf32, #tpu.memory_space<vmem>>, %arg7: memref<1x128xf32, #tpu.memory_space<vmem>>, %arg8: memref<24x128xf32, #tpu.memory_space<vmem>>) attributes {dimension_semantics = [#tpu.dimension_semantics<parallel>, #tpu.dimension_semantics<arbitrary>, #tpu.dimension_semantics<arbitrary>], iteration_bounds = array<i64: 1, 1, 1>, scalar_prefetch = 0 : i64, scratch_operands = 1 : i64, tpu.core_type = #tpu.core_type<tc>, window_params = [{transform_indices = @transform_0, window_bounds = array<i64: 24, 512>}, {transform_indices = @transform_1, window_bounds = array<i64: 512, 128>}, {transform_indices = @transform_2, window_bounds = array<i64: 24, 128>}, {transform_indices = @transform_3, window_bounds = array<i64: 1, 128>}, {transform_indices = @transform_4, window_bounds = array<i64: 1, 128>}]} {
    %c0_i32 = arith.constant 0 : i32
    %0 = arith.cmpi eq, %arg2, %c0_i32 : i32
    %1 = arith.extui %0 : i1 to i32
    %c0_i32_0 = arith.constant 0 : i32
    %2 = arith.cmpi ne, %1, %c0_i32_0 : i32
    scf.if %2 {
      %cst_12 = arith.constant 0.000000e+00 : f32
      %16 = vector.broadcast %cst_12 : f32 to vector<24x128xf32>
      %c0_13 = arith.constant 0 : index
      %c0_14 = arith.constant 0 : index
      %17 = vector.load %arg8[%c0_13, %c0_14] : memref<24x128xf32, #tpu.memory_space<vmem>>, vector<24x128xf32>
      tpu.vector_store %arg8[%c0_13, %c0_14], %16 {strides = array<i32>} : memref<24x128xf32, #tpu.memory_space<vmem>>, vector<24x128xf32>,
    } else {
    }
    %c0 = arith.constant 0 : index
    %c0_1 = arith.constant 0 : index
    %3 = vector.load %arg8[%c0, %c0_1] : memref<24x128xf32, #tpu.memory_space<vmem>>, vector<24x128xf32>
    %c0_2 = arith.constant 0 : index
    %c0_3 = arith.constant 0 : index
    %4 = vector.load %arg3[%c0_2, %c0_3] : memref<24x512xbf16, #tpu.memory_space<vmem>>, vector<24x512xbf16>
    %c0_4 = arith.constant 0 : index
    %c0_5 = arith.constant 0 : index
    %5 = vector.load %arg4[%c0_4, %c0_5] : memref<512x128xbf16, #tpu.memory_space<vmem>>, vector<512x128xbf16>
    %cst = arith.constant dense<0.000000e+00> : vector<24x128xf32>
    %6 = tpu.matmul %4, %5, %cst {dimension_numbers = #tpu.dot_dimension_numbers<[1], [0], [0], [1], [0, 0, 1, 1], [], []>} : vector<24x512xbf16>, vector<512x128xbf16>, vector<24x128xf32> -> vector<24x128xf32>
    %7 = arith.addf %3, %6 : vector<24x128xf32>
    %c0_6 = arith.constant 0 : index
    %c0_7 = arith.constant 0 : index
    %8 = vector.load %arg8[%c0_6, %c0_7] : memref<24x128xf32, #tpu.memory_space<vmem>>, vector<24x128xf32>
    tpu.vector_store %arg8[%c0_6, %c0_7], %7 {strides = array<i32>} : memref<24x128xf32, #tpu.memory_space<vmem>>, vector<24x128xf32>,
    %c0_i32_8 = arith.constant 0 : i32
    %9 = arith.cmpi eq, %arg2, %c0_i32_8 : i32
    %c0_i32_9 = arith.constant 0 : i32
    %10 = arith.cmpi eq, %arg1, %c0_i32_9 : i32
    %11 = arith.andi %9, %10 : i1
    %12 = arith.extui %11 : i1 to i32
    %c0_i32_10 = arith.constant 0 : i32
    %13 = arith.cmpi ne, %12, %c0_i32_10 : i32
    scf.if %13 {
      %cst_12 = arith.constant 0.000000e+00 : f32
      %16 = vector.broadcast %cst_12 : f32 to vector<1x128xf32>
      %c0_13 = arith.constant 0 : index
      %c0_14 = arith.constant 0 : index
      %17 = vector.load %arg6[%c0_13, %c0_14] : memref<1x128xf32, #tpu.memory_space<vmem>>, vector<1x128xf32>
      tpu.vector_store %arg6[%c0_13, %c0_14], %16 {strides = array<i32>} : memref<1x128xf32, #tpu.memory_space<vmem>>, vector<1x128xf32>,
      %cst_15 = arith.constant 0.000000e+00 : f32
      %18 = vector.broadcast %cst_15 : f32 to vector<1x128xf32>
      %c0_16 = arith.constant 0 : index
      %c0_17 = arith.constant 0 : index
      %19 = vector.load %arg7[%c0_16, %c0_17] : memref<1x128xf32, #tpu.memory_space<vmem>>, vector<1x128xf32>
      tpu.vector_store %arg7[%c0_16, %c0_17], %18 {strides = array<i32>} : memref<1x128xf32, #tpu.memory_space<vmem>>, vector<1x128xf32>,
    } else {
    }
    %14 = arith.extui %9 : i1 to i32
    %c0_i32_11 = arith.constant 0 : i32
    %15 = arith.cmpi ne, %14, %c0_i32_11 : i32
    scf.if %15 {
      %c0_12 = arith.constant 0 : index
      %c0_13 = arith.constant 0 : index
      %16 = vector.load %arg8[%c0_12, %c0_13] : memref<24x128xf32, #tpu.memory_space<vmem>>, vector<24x128xf32>
      %c0_14 = arith.constant 0 : index
      %c0_15 = arith.constant 0 : index
      %17 = vector.load %arg5[%c0_14, %c0_15] : memref<24x128xf32, #tpu.memory_space<vmem>>, vector<24x128xf32>
      tpu.vector_store %arg5[%c0_14, %c0_15], %16 {strides = array<i32>} : memref<24x128xf32, #tpu.memory_space<vmem>>, vector<24x128xf32>,
      %c0_16 = arith.constant 0 : index
      %c0_17 = arith.constant 0 : index
      %18 = vector.load %arg6[%c0_16, %c0_17] : memref<1x128xf32, #tpu.memory_space<vmem>>, vector<1x128xf32>
      %cst_18 = arith.constant dense<0.000000e+00> : vector<128xf32>
      %19 = vector.multi_reduction <add>, %16, %cst_18 [0] : vector<24x128xf32> to vector<128xf32>
      %20 = vector.shape_cast %19 : vector<128xf32> to vector<1x128xf32>
      %21 = arith.addf %18, %20 : vector<1x128xf32>
      %c0_19 = arith.constant 0 : index
      %c0_20 = arith.constant 0 : index
      %22 = vector.load %arg6[%c0_19, %c0_20] : memref<1x128xf32, #tpu.memory_space<vmem>>, vector<1x128xf32>
      tpu.vector_store %arg6[%c0_19, %c0_20], %21 {strides = array<i32>} : memref<1x128xf32, #tpu.memory_space<vmem>>, vector<1x128xf32>,
      %c0_21 = arith.constant 0 : index
      %c0_22 = arith.constant 0 : index
      %23 = vector.load %arg7[%c0_21, %c0_22] : memref<1x128xf32, #tpu.memory_space<vmem>>, vector<1x128xf32>
      %24 = arith.mulf %16, %16 : vector<24x128xf32>
      %cst_23 = arith.constant dense<0.000000e+00> : vector<128xf32>
      %25 = vector.multi_reduction <add>, %24, %cst_23 [0] : vector<24x128xf32> to vector<128xf32>
      %26 = vector.shape_cast %25 : vector<128xf32> to vector<1x128xf32>
      %27 = arith.addf %23, %26 : vector<1x128xf32>
      %c0_24 = arith.constant 0 : index
      %c0_25 = arith.constant 0 : index
      %28 = vector.load %arg7[%c0_24, %c0_25] : memref<1x128xf32, #tpu.memory_space<vmem>>, vector<1x128xf32>
      tpu.vector_store %arg7[%c0_24, %c0_25], %27 {strides = array<i32>} : memref<1x128xf32, #tpu.memory_space<vmem>>, vector<1x128xf32>,
    } else {
    }
    return
  }
  func.func @transform_0(%arg0: i32, %arg1: i32, %arg2: i32) -> (i32, i32) {
    %c0_i32 = arith.constant 0 : i32
    return %arg1, %arg2 : i32, i32
  }
  func.func @transform_1(%arg0: i32, %arg1: i32, %arg2: i32) -> (i32, i32) {
    %c0_i32 = arith.constant 0 : i32
    return %arg2, %arg0 : i32, i32
  }
  func.func @transform_2(%arg0: i32, %arg1: i32, %arg2: i32) -> (i32, i32) {
    %c0_i32 = arith.constant 0 : i32
    return %arg1, %arg0 : i32, i32
  }
  func.func @transform_3(%arg0: i32, %arg1: i32, %arg2: i32) -> (i32, i32) {
    %c0_i32 = arith.constant 0 : i32
    %c0_i32_0 = arith.constant 0 : i32
    return %c0_i32, %arg0 : i32, i32
  }
  func.func @transform_4(%arg0: i32, %arg1: i32, %arg2: i32) -> (i32, i32) {
    %c0_i32 = arith.constant 0 : i32
    %c0_i32_0 = arith.constant 0 : i32
    return %c0_i32, %arg0 : i32, i32
  }
}

module attributes {stable_mosaic.version = 11 : i64} {
  func.func @_conv_gemm_kernel(%arg0: i32, %arg1: i32, %arg2: i32, %arg3: memref<8x512xbf16, #tpu.memory_space<vmem>>, %arg4: memref<512x128xbf16, #tpu.memory_space<vmem>>, %arg5: memref<8x128xf32, #tpu.memory_space<vmem>>, %arg6: memref<8x128xf32, #tpu.memory_space<vmem>>) attributes {dimension_semantics = [#tpu.dimension_semantics<parallel>, #tpu.dimension_semantics<parallel>, #tpu.dimension_semantics<arbitrary>], iteration_bounds = array<i64: 1, 1, 2>, scalar_prefetch = 0 : i64, scratch_operands = 1 : i64, tpu.core_type = #tpu.core_type<tc>, window_params = [{transform_indices = @transform_0, window_bounds = array<i64: 8, 512>}, {transform_indices = @transform_1, window_bounds = array<i64: 512, 128>}, {transform_indices = @transform_2, window_bounds = array<i64: 8, 128>}]} {
    %c0_i32 = arith.constant 0 : i32
    %0 = arith.cmpi eq, %arg2, %c0_i32 : i32
    %1 = arith.extui %0 : i1 to i32
    %c0_i32_0 = arith.constant 0 : i32
    %2 = arith.cmpi ne, %1, %c0_i32_0 : i32
    scf.if %2 {
      %cst_9 = arith.constant 0.000000e+00 : f32
      %12 = vector.broadcast %cst_9 : f32 to vector<8x128xf32>
      %c0_10 = arith.constant 0 : index
      %c0_11 = arith.constant 0 : index
      %13 = vector.load %arg6[%c0_10, %c0_11] : memref<8x128xf32, #tpu.memory_space<vmem>>, vector<8x128xf32>
      tpu.vector_store %arg6[%c0_10, %c0_11], %12 {strides = array<i32>} : memref<8x128xf32, #tpu.memory_space<vmem>>, vector<8x128xf32>,
    } else {
    }
    %c0 = arith.constant 0 : index
    %c0_1 = arith.constant 0 : index
    %3 = vector.load %arg6[%c0, %c0_1] : memref<8x128xf32, #tpu.memory_space<vmem>>, vector<8x128xf32>
    %c0_2 = arith.constant 0 : index
    %c0_3 = arith.constant 0 : index
    %4 = vector.load %arg3[%c0_2, %c0_3] : memref<8x512xbf16, #tpu.memory_space<vmem>>, vector<8x512xbf16>
    %c0_4 = arith.constant 0 : index
    %c0_5 = arith.constant 0 : index
    %5 = vector.load %arg4[%c0_4, %c0_5] : memref<512x128xbf16, #tpu.memory_space<vmem>>, vector<512x128xbf16>
    %cst = arith.constant dense<0.000000e+00> : vector<8x128xf32>
    %6 = tpu.matmul %4, %5, %cst {dimension_numbers = #tpu.dot_dimension_numbers<[1], [0], [0], [1], [0, 0, 1, 1], [], []>} : vector<8x512xbf16>, vector<512x128xbf16>, vector<8x128xf32> -> vector<8x128xf32>
    %7 = arith.addf %3, %6 : vector<8x128xf32>
    %c0_6 = arith.constant 0 : index
    %c0_7 = arith.constant 0 : index
    %8 = vector.load %arg6[%c0_6, %c0_7] : memref<8x128xf32, #tpu.memory_space<vmem>>, vector<8x128xf32>
    tpu.vector_store %arg6[%c0_6, %c0_7], %7 {strides = array<i32>} : memref<8x128xf32, #tpu.memory_space<vmem>>, vector<8x128xf32>,
    %c1_i32 = arith.constant 1 : i32
    %9 = arith.cmpi eq, %arg2, %c1_i32 : i32
    %10 = arith.extui %9 : i1 to i32
    %c0_i32_8 = arith.constant 0 : i32
    %11 = arith.cmpi ne, %10, %c0_i32_8 : i32
    scf.if %11 {
      %c0_9 = arith.constant 0 : index
      %c0_10 = arith.constant 0 : index
      %12 = vector.load %arg6[%c0_9, %c0_10] : memref<8x128xf32, #tpu.memory_space<vmem>>, vector<8x128xf32>
      %cst_11 = arith.constant 0.000000e+00 : f32
      %13 = vector.broadcast %cst_11 : f32 to vector<8x128xf32>
      %14 = arith.subf %13, %12 : vector<8x128xf32>
      %15 = math.exp %14 : vector<8x128xf32>
      %cst_12 = arith.constant 1.000000e+00 : f32
      %16 = vector.broadcast %cst_12 : f32 to vector<8x128xf32>
      %17 = arith.addf %16, %15 : vector<8x128xf32>
      %cst_13 = arith.constant 1.000000e+00 : f32
      %18 = vector.broadcast %cst_13 : f32 to vector<8x128xf32>
      %19 = arith.divf %18, %17 : vector<8x128xf32>
      %c0_14 = arith.constant 0 : index
      %c0_15 = arith.constant 0 : index
      %20 = vector.load %arg5[%c0_14, %c0_15] : memref<8x128xf32, #tpu.memory_space<vmem>>, vector<8x128xf32>
      tpu.vector_store %arg5[%c0_14, %c0_15], %19 {strides = array<i32>} : memref<8x128xf32, #tpu.memory_space<vmem>>, vector<8x128xf32>,
    } else {
    }
    return
  }
  func.func @transform_0(%arg0: i32, %arg1: i32, %arg2: i32) -> (i32, i32) {
    %c0_i32 = arith.constant 0 : i32
    return %arg1, %arg2 : i32, i32
  }
  func.func @transform_1(%arg0: i32, %arg1: i32, %arg2: i32) -> (i32, i32) {
    %c0_i32 = arith.constant 0 : i32
    return %arg2, %arg0 : i32, i32
  }
  func.func @transform_2(%arg0: i32, %arg1: i32, %arg2: i32) -> (i32, i32) {
    %c0_i32 = arith.constant 0 : i32
    return %arg1, %arg0 : i32, i32
  }
}

</mosaic_0001>

<llo_original>
// kernel: unet_encoder_forward.5
$region0: #{unet_encoder_forward.5}
  #allocation0 [shape = 'u32[]', space=smem, size = 0x4, offset = 0x4, fixed_abs, tag = 'smem constant byte address 0x4 - core index']
  #allocation1 [shape = 'u32[144,128]{1,0:T(1,128)}', space=vmem, size = 0x12000, scoped, tag = 'internal scratch']
  #allocation2 [shape = 'f32[512,128]{1,0:T(8,128)}', space=vmem, size = 0x40000, scoped, tag = 'scratch operand']
  %s0 = inlined_call_operand.vmem [shape: bf16[512,128], index: 0, kind: input, shape index: {}]
  %s1 = inlined_call_operand.vmem [shape: bf16[128,128], index: 1, kind: input, shape index: {}]
  %s2 = inlined_call_operand.vmem [shape: f32[512,128], index: 2, kind: output, shape index: {}]
  %s3 = sld [smem:[#allocation0]]
  $region26: #{unet_encoder_forward.5} parent=0
    _
  %s5 = ssub.s32 1, %s3
  %s6 = scalar_select 0, %s5, %s3
  // Predicated region
  $region2: #{unet_encoder_forward.5} parent=0 // pred_check
    _
  $region3: #{unet_encoder_forward.5} parent=0 // pred_check_branch
    %8 = sbr.rel (0) target = $region5
  $region4: #{unet_encoder_forward.5} parent=0 // pred_region
    _
  $region5: #{unet_encoder_forward.5} parent=0 // pred_fallthru
    _
  // Predicated region
  $region6: #{unet_encoder_forward.5} parent=0 // pred_check
    _
  $region7: #{unet_encoder_forward.5} parent=0 // pred_check_branch
    %10 = sbr.rel (0) target = $region9
  $region8: #{unet_encoder_forward.5} parent=0 // pred_region
    _
  $region9: #{unet_encoder_forward.5} parent=0 // pred_fallthru
    _
  %p12 = scmp.eq.s32.totalorder 0, 0
  // Predicated region
  $region10: #{unet_encoder_forward.5} parent=0 // pred_check
    %p13 = pneg %p12
  $region11: #{unet_encoder_forward.5} parent=0 // pred_check_branch
    %15 = sbr.rel (%p13) target = $region13
  $region12: #{unet_encoder_forward.5} parent=0 // pred_region
    %16 = vst [vmem:[#allocation2] sm:$0xff] 0.0
    %17 = vst [vmem:[#allocation2 + $0x8] sm:$0xff] 0.0
    %18 = vst [vmem:[#allocation2 + $0x10] sm:$0xff] 0.0
    %19 = vst [vmem:[#allocation2 + $0x18] sm:$0xff] 0.0
    %20 = vst [vmem:[#allocation2 + $0x20] sm:$0xff] 0.0
    %21 = vst [vmem:[#allocation2 + $0x28] sm:$0xff] 0.0
    %22 = vst [vmem:[#allocation2 + $0x30] sm:$0xff] 0.0
    %23 = vst [vmem:[#allocation2 + $0x38] sm:$0xff] 0.0
    %24 = vst [vmem:[#allocation2 + $0x40] sm:$0xff] 0.0
    %25 = vst [vmem:[#allocation2 + $0x48] sm:$0xff] 0.0
    %26 = vst [vmem:[#allocation2 + $0x50] sm:$0xff] 0.0
    %27 = vst [vmem:[#allocation2 + $0x58] sm:$0xff] 0.0
    %28 = vst [vmem:[#allocation2 + $0x60] sm:$0xff] 0.0
    %29 = vst [vmem:[#allocation2 + $0x68] sm:$0xff] 0.0
    %30 = vst [vmem:[#allocation2 + $0x70] sm:$0xff] 0.0
    %31 = vst [vmem:[#allocation2 + $0x78] sm:$0xff] 0.0
    %32 = vst [vmem:[#allocation2 + $0x80] sm:$0xff] 0.0
    %33 = vst [vmem:[#allocation2 + $0x88] sm:$0xff] 0.0
    %34 = vst [vmem:[#allocation2 + $0x90] sm:$0xff] 0.0
    %35 = vst [vmem:[#allocation2 + $0x98] sm:$0xff] 0.0
    %36 = vst [vmem:[#allocation2 + $0xa0] sm:$0xff] 0.0
    %37 = vst [vmem:[#allocation2 + $0xa8] sm:$0xff] 0.0
    %38 = vst [vmem:[#allocation2 + $0xb0] sm:$0xff] 0.0
    %39 = vst [vmem:[#allocation2 + $0xb8] sm:$0xff] 0.0
    %40 = vst [vmem:[#allocation2 + $0xc0] sm:$0xff] 0.0
    %41 = vst [vmem:[#allocation2 + $0xc8] sm:$0xff] 0.0
    %42 = vst [vmem:[#allocation2 + $0xd0] sm:$0xff] 0.0
    %43 = vst [vmem:[#allocation2 + $0xd8] sm:$0xff] 0.0
    %44 = vst [vmem:[#allocation2 + $0xe0] sm:$0xff] 0.0
    %45 = vst [vmem:[#allocation2 + $0xe8] sm:$0xff] 0.0
    %46 = vst [vmem:[#allocation2 + $0xf0] sm:$0xff] 0.0
    %47 = vst [vmem:[#allocation2 + $0xf8] sm:$0xff] 0.0
    %48 = vst [vmem:[#allocation2 + $0x100] sm:$0xff] 0.0
    %49 = vst [vmem:[#allocation2 + $0x108] sm:$0xff] 0.0
    %50 = vst [vmem:[#allocation2 + $0x110] sm:$0xff] 0.0
    %51 = vst [vmem:[#allocation2 + $0x118] sm:$0xff] 0.0
    %52 = vst [vmem:[#allocation2 + $0x120] sm:$0xff] 0.0
    %53 = vst [vmem:[#allocation2 + $0x128] sm:$0xff] 0.0
    %54 = vst [vmem:[#allocation2 + $0x130] sm:$0xff] 0.0
    %55 = vst [vmem:[#allocation2 + $0x138] sm:$0xff] 0.0
    %56 = vst [vmem:[#allocation2 + $0x140] sm:$0xff] 0.0
    %57 = vst [vmem:[#allocation2 + $0x148] sm:$0xff] 0.0
    %58 = vst [vmem:[#allocation2 + $0x150] sm:$0xff] 0.0
    %59 = vst [vmem:[#allocation2 + $0x158] sm:$0xff] 0.0
    %60 = vst [vmem:[#allocation2 + $0x160] sm:$0xff] 0.0
    %61 = vst [vmem:[#allocation2 + $0x168] sm:$0xff] 0.0
    %62 = vst [vmem:[#allocation2 + $0x170] sm:$0xff] 0.0
    %63 = vst [vmem:[#allocation2 + $0x178] sm:$0xff] 0.0
    %64 = vst [vmem:[#allocation2 + $0x180] sm:$0xff] 0.0
    %65 = vst [vmem:[#allocation2 + $0x188] sm:$0xff] 0.0
    %66 = vst [vmem:[#allocation2 + $0x190] sm:$0xff] 0.0
    %67 = vst [vmem:[#allocation2 + $0x198] sm:$0xff] 0.0
    %68 = vst [vmem:[#allocation2 + $0x1a0] sm:$0xff] 0.0
    %69 = vst [vmem:[#allocation2 + $0x1a8] sm:$0xff] 0.0
    %70 = vst [vmem:[#allocation2 + $0x1b0] sm:$0xff] 0.0
    %71 = vst [vmem:[#allocation2 + $0x1b8] sm:$0xff] 0.0
    %72 = vst [vmem:[#allocation2 + $0x1c0] sm:$0xff] 0.0
    %73 = vst [vmem:[#allocation2 + $0x1c8] sm:$0xff] 0.0
    %74 = vst [vmem:[#allocation2 + $0x1d0] sm:$0xff] 0.0
    %75 = vst [vmem:[#allocation2 + $0x1d8] sm:$0xff] 0.0
    %76 = vst [vmem:[#allocation2 + $0x1e0] sm:$0xff] 0.0
    %77 = vst [vmem:[#allocation2 + $0x1e8] sm:$0xff] 0.0
    %78 = vst [vmem:[#allocation2 + $0x1f0] sm:$0xff] 0.0
    %79 = vst [vmem:[#allocation2 + $0x1f8] sm:$0xff] 0.0
  $region13: #{unet_encoder_forward.5} parent=0 // pred_fallthru
    _
  %v80 = vld [vmem:[#allocation2] sm:$0xff]
  %v81 = vld [vmem:[#allocation2 + $0x8] sm:$0xff]
  %v82 = vld [vmem:[#allocation2 + $0x10] sm:$0xff]
  %v83 = vld [vmem:[#allocation2 + $0x18] sm:$0xff]
  %v84 = vld [vmem:[#allocation2 + $0x20] sm:$0xff]
  %v85 = vld [vmem:[#allocation2 + $0x28] sm:$0xff]
  %v86 = vld [vmem:[#allocation2 + $0x30] sm:$0xff]
  %v87 = vld [vmem:[#allocation2 + $0x38] sm:$0xff]
  %v88 = vld [vmem:[#allocation2 + $0x40] sm:$0xff]
  %v89 = vld [vmem:[#allocation2 + $0x48] sm:$0xff]
  %v90 = vld [vmem:[#allocation2 + $0x50] sm:$0xff]
  %v91 = vld [vmem:[#allocation2 + $0x58] sm:$0xff]
  %v92 = vld [vmem:[#allocation2 + $0x60] sm:$0xff]
  %v93 = vld [vmem:[#allocation2 + $0x68] sm:$0xff]
  %v94 = vld [vmem:[#allocation2 + $0x70] sm:$0xff]
  %v95 = vld [vmem:[#allocation2 + $0x78] sm:$0xff]
  %v96 = vld [vmem:[#allocation2 + $0x80] sm:$0xff]
  %v97 = vld [vmem:[#allocation2 + $0x88] sm:$0xff]
  %v98 = vld [vmem:[#allocation2 + $0x90] sm:$0xff]
  %v99 = vld [vmem:[#allocation2 + $0x98] sm:$0xff]
  %v100 = vld [vmem:[#allocation2 + $0xa0] sm:$0xff]
  %v101 = vld [vmem:[#allocation2 + $0xa8] sm:$0xff]
  %v102 = vld [vmem:[#allocation2 + $0xb0] sm:$0xff]
  %v103 = vld [vmem:[#allocation2 + $0xb8] sm:$0xff]
  %v104 = vld [vmem:[#allocation2 + $0xc0] sm:$0xff]
  %v105 = vld [vmem:[#allocation2 + $0xc8] sm:$0xff]
  %v106 = vld [vmem:[#allocation2 + $0xd0] sm:$0xff]
  %v107 = vld [vmem:[#allocation2 + $0xd8] sm:$0xff]
  %v108 = vld [vmem:[#allocation2 + $0xe0] sm:$0xff]
  %v109 = vld [vmem:[#allocation2 + $0xe8] sm:$0xff]
  %v110 = vld [vmem:[#allocation2 + $0xf0] sm:$0xff]
  %v111 = vld [vmem:[#allocation2 + $0xf8] sm:$0xff]
  %v112 = vld [vmem:[#allocation2 + $0x100] sm:$0xff]
  %v113 = vld [vmem:[#allocation2 + $0x108] sm:$0xff]
  %v114 = vld [vmem:[#allocation2 + $0x110] sm:$0xff]
  %v115 = vld [vmem:[#allocation2 + $0x118] sm:$0xff]
  %v116 = vld [vmem:[#allocation2 + $0x120] sm:$0xff]
  %v117 = vld [vmem:[#allocation2 + $0x128] sm:$0xff]
  %v118 = vld [vmem:[#allocation2 + $0x130] sm:$0xff]
  %v119 = vld [vmem:[#allocation2 + $0x138] sm:$0xff]
  %v120 = vld [vmem:[#allocation2 + $0x140] sm:$0xff]
  %v121 = vld [vmem:[#allocation2 + $0x148] sm:$0xff]
  %v122 = vld [vmem:[#allocation2 + $0x150] sm:$0xff]
  %v123 = vld [vmem:[#allocation2 + $0x158] sm:$0xff]
  %v124 = vld [vmem:[#allocation2 + $0x160] sm:$0xff]
  %v125 = vld [vmem:[#allocation2 + $0x168] sm:$0xff]
  %v126 = vld [vmem:[#allocation2 + $0x170] sm:$0xff]
  %v127 = vld [vmem:[#allocation2 + $0x178] sm:$0xff]
  %v128 = vld [vmem:[#allocation2 + $0x180] sm:$0xff]
  %v129 = vld [vmem:[#allocation2 + $0x188] sm:$0xff]
  %v130 = vld [vmem:[#allocation2 + $0x190] sm:$0xff]
  %v131 = vld [vmem:[#allocation2 + $0x198] sm:$0xff]
  %v132 = vld [vmem:[#allocation2 + $0x1a0] sm:$0xff]
  %v133 = vld [vmem:[#allocation2 + $0x1a8] sm:$0xff]
  %v134 = vld [vmem:[#allocation2 + $0x1b0] sm:$0xff]
  %v135 = vld [vmem:[#allocation2 + $0x1b8] sm:$0xff]
  %v136 = vld [vmem:[#allocation2 + $0x1c0] sm:$0xff]
  %v137 = vld [vmem:[#allocation2 + $0x1c8] sm:$0xff]
  %v138 = vld [vmem:[#allocation2 + $0x1d0] sm:$0xff]
  %v139 = vld [vmem:[#allocation2 + $0x1d8] sm:$0xff]
  %v140 = vld [vmem:[#allocation2 + $0x1e0] sm:$0xff]
  %v141 = vld [vmem:[#allocation2 + $0x1e8] sm:$0xff]
  %v142 = vld [vmem:[#allocation2 + $0x1f0] sm:$0xff]
  %v143 = vld [vmem:[#allocation2 + $0x1f8] sm:$0xff]
  %v144 = vld [vmem:[%s0] sm:$0xf]
  %v145 = vld [vmem:[%s0 + $0x4] sm:$0xf]
  %v146 = vld [vmem:[%s0 + $0x8] sm:$0xf]
  %v147 = vld [vmem:[%s0 + $0xc] sm:$0xf]
  %v148 = vld [vmem:[%s0 + $0x10] sm:$0xf]
  %v149 = vld [vmem:[%s0 + $0x14] sm:$0xf]
  %v150 = vld [vmem:[%s0 + $0x18] sm:$0xf]
  %v151 = vld [vmem:[%s0 + $0x1c] sm:$0xf]
  %v152 = vld [vmem:[%s0 + $0x20] sm:$0xf]
  %v153 = vld [vmem:[%s0 + $0x24] sm:$0xf]
  %v154 = vld [vmem:[%s0 + $0x28] sm:$0xf]
  %v155 = vld [vmem:[%s0 + $0x2c] sm:$0xf]
  %v156 = vld [vmem:[%s0 + $0x30] sm:$0xf]
  %v157 = vld [vmem:[%s0 + $0x34] sm:$0xf]
  %v158 = vld [vmem:[%s0 + $0x38] sm:$0xf]
  %v159 = vld [vmem:[%s0 + $0x3c] sm:$0xf]
  %v160 = vld [vmem:[%s0 + $0x40] sm:$0xf]
  %v161 = vld [vmem:[%s0 + $0x44] sm:$0xf]
  %v162 = vld [vmem:[%s0 + $0x48] sm:$0xf]
  %v163 = vld [vmem:[%s0 + $0x4c] sm:$0xf]
  %v164 = vld [vmem:[%s0 + $0x50] sm:$0xf]
  %v165 = vld [vmem:[%s0 + $0x54] sm:$0xf]
  %v166 = vld [vmem:[%s0 + $0x58] sm:$0xf]
  %v167 = vld [vmem:[%s0 + $0x5c] sm:$0xf]
  %v168 = vld [vmem:[%s0 + $0x60] sm:$0xf]
  %v169 = vld [vmem:[%s0 + $0x64] sm:$0xf]
  %v170 = vld [vmem:[%s0 + $0x68] sm:$0xf]
  %v171 = vld [vmem:[%s0 + $0x6c] sm:$0xf]
  %v172 = vld [vmem:[%s0 + $0x70] sm:$0xf]
  %v173 = vld [vmem:[%s0 + $0x74] sm:$0xf]
  %v174 = vld [vmem:[%s0 + $0x78] sm:$0xf]
  %v175 = vld [vmem:[%s0 + $0x7c] sm:$0xf]
  %v176 = vld [vmem:[%s0 + $0x80] sm:$0xf]
  %v177 = vld [vmem:[%s0 + $0x84] sm:$0xf]
  %v178 = vld [vmem:[%s0 + $0x88] sm:$0xf]
  %v179 = vld [vmem:[%s0 + $0x8c] sm:$0xf]
  %v180 = vld [vmem:[%s0 + $0x90] sm:$0xf]
  %v181 = vld [vmem:[%s0 + $0x94] sm:$0xf]
  %v182 = vld [vmem:[%s0 + $0x98] sm:$0xf]
  %v183 = vld [vmem:[%s0 + $0x9c] sm:$0xf]
  %v184 = vld [vmem:[%s0 + $0xa0] sm:$0xf]
  %v185 = vld [vmem:[%s0 + $0xa4] sm:$0xf]
  %v186 = vld [vmem:[%s0 + $0xa8] sm:$0xf]
  %v187 = vld [vmem:[%s0 + $0xac] sm:$0xf]
  %v188 = vld [vmem:[%s0 + $0xb0] sm:$0xf]
  %v189 = vld [vmem:[%s0 + $0xb4] sm:$0xf]
  %v190 = vld [vmem:[%s0 + $0xb8] sm:$0xf]
  %v191 = vld [vmem:[%s0 + $0xbc] sm:$0xf]
  %v192 = vld [vmem:[%s0 + $0xc0] sm:$0xf]
  %v193 = vld [vmem:[%s0 + $0xc4] sm:$0xf]
  %v194 = vld [vmem:[%s0 + $0xc8] sm:$0xf]
  %v195 = vld [vmem:[%s0 + $0xcc] sm:$0xf]
  %v196 = vld [vmem:[%s0 + $0xd0] sm:$0xf]
  %v197 = vld [vmem:[%s0 + $0xd4] sm:$0xf]
  %v198 = vld [vmem:[%s0 + $0xd8] sm:$0xf]
  %v199 = vld [vmem:[%s0 + $0xdc] sm:$0xf]
  %v200 = vld [vmem:[%s0 + $0xe0] sm:$0xf]
  %v201 = vld [vmem:[%s0 + $0xe4] sm:$0xf]
  %v202 = vld [vmem:[%s0 + $0xe8] sm:$0xf]
  %v203 = vld [vmem:[%s0 + $0xec] sm:$0xf]
  %v204 = vld [vmem:[%s0 + $0xf0] sm:$0xf]
  %v205 = vld [vmem:[%s0 + $0xf4] sm:$0xf]
  %v206 = vld [vmem:[%s0 + $0xf8] sm:$0xf]
  %v207 = vld [vmem:[%s0 + $0xfc] sm:$0xf]
  %v208 = vld [vmem:[%s1] sm:$0xf]
  %v209 = vld [vmem:[%s1 + $0x4] sm:$0xf]
  %v210 = vld [vmem:[%s1 + $0x8] sm:$0xf]
  %v211 = vld [vmem:[%s1 + $0xc] sm:$0xf]
  %v212 = vld [vmem:[%s1 + $0x10] sm:$0xf]
  %v213 = vld [vmem:[%s1 + $0x14] sm:$0xf]
  %v214 = vld [vmem:[%s1 + $0x18] sm:$0xf]
  %v215 = vld [vmem:[%s1 + $0x1c] sm:$0xf]
  %v216 = vld [vmem:[%s1 + $0x20] sm:$0xf]
  %v217 = vld [vmem:[%s1 + $0x24] sm:$0xf]
  %v218 = vld [vmem:[%s1 + $0x28] sm:$0xf]
  %v219 = vld [vmem:[%s1 + $0x2c] sm:$0xf]
  %v220 = vld [vmem:[%s1 + $0x30] sm:$0xf]
  %v221 = vld [vmem:[%s1 + $0x34] sm:$0xf]
  %v222 = vld [vmem:[%s1 + $0x38] sm:$0xf]
  %v223 = vld [vmem:[%s1 + $0x3c] sm:$0xf]
  %v288 = vunpack.c.l.b16 %v144
  %v289 = vunpack.c.l.b16 %v145
  %v290 = vunpack.c.l.b16 %v146
  %v291 = vunpack.c.l.b16 %v147
  %v292 = vunpack.c.l.b16 %v148
  %v293 = vunpack.c.l.b16 %v149
  %v294 = vunpack.c.l.b16 %v150
  %v295 = vunpack.c.l.b16 %v151
  %v296 = vunpack.c.l.b16 %v152
  %v297 = vunpack.c.l.b16 %v153
  %v298 = vunpack.c.l.b16 %v154
  %v299 = vunpack.c.l.b16 %v155
  %v300 = vunpack.c.l.b16 %v156
  %v301 = vunpack.c.l.b16 %v157
  %v302 = vunpack.c.l.b16 %v158
  %v303 = vunpack.c.l.b16 %v159
  %v304 = vunpack.c.l.b16 %v160
  %v305 = vunpack.c.l.b16 %v161
  %v306 = vunpack.c.l.b16 %v162
  %v307 = vunpack.c.l.b16 %v163
  %v308 = vunpack.c.l.b16 %v164
  %v309 = vunpack.c.l.b16 %v165
  %v310 = vunpack.c.l.b16 %v166
  %v311 = vunpack.c.l.b16 %v167
  %v312 = vunpack.c.l.b16 %v168
  %v313 = vunpack.c.l.b16 %v169
  %v314 = vunpack.c.l.b16 %v170
  %v315 = vunpack.c.l.b16 %v171
  %v316 = vunpack.c.l.b16 %v172
  %v317 = vunpack.c.l.b16 %v173
  %v318 = vunpack.c.l.b16 %v174
  %v319 = vunpack.c.l.b16 %v175
  %v320 = vunpack.c.l.b16 %v176
  %v321 = vunpack.c.l.b16 %v177
  %v322 = vunpack.c.l.b16 %v178
  %v323 = vunpack.c.l.b16 %v179
  %v324 = vunpack.c.l.b16 %v180
  %v325 = vunpack.c.l.b16 %v181
  %v326 = vunpack.c.l.b16 %v182
  %v327 = vunpack.c.l.b16 %v183
  %v328 = vunpack.c.l.b16 %v184
  %v329 = vunpack.c.l.b16 %v185
  %v330 = vunpack.c.l.b16 %v186
  %v331 = vunpack.c.l.b16 %v187
  %v332 = vunpack.c.l.b16 %v188
  %v333 = vunpack.c.l.b16 %v189
  %v334 = vunpack.c.l.b16 %v190
  %v335 = vunpack.c.l.b16 %v191
  %v336 = vunpack.c.l.b16 %v192
  %v337 = vunpack.c.l.b16 %v193
  %v338 = vunpack.c.l.b16 %v194
  %v339 = vunpack.c.l.b16 %v195
  %v340 = vunpack.c.l.b16 %v196
  %v341 = vunpack.c.l.b16 %v197
  %v342 = vunpack.c.l.b16 %v198
  %v343 = vunpack.c.l.b16 %v199
  %v344 = vunpack.c.l.b16 %v200
  %v345 = vunpack.c.l.b16 %v201
  %v346 = vunpack.c.l.b16 %v202
  %v347 = vunpack.c.l.b16 %v203
  %v348 = vunpack.c.l.b16 %v204
  %v349 = vunpack.c.l.b16 %v205
  %v350 = vunpack.c.l.b16 %v206
  %v351 = vunpack.c.l.b16 %v207
  %v352 = vpack.c.b16 %v289, %v288
  %v353 = vpack.c.b16 %v291, %v290
  %v354 = vpack.c.b16 %v293, %v292
  %v355 = vpack.c.b16 %v295, %v294
  %v356 = vpack.c.b16 %v297, %v296
  %v357 = vpack.c.b16 %v299, %v298
  %v358 = vpack.c.b16 %v301, %v300
  %v359 = vpack.c.b16 %v303, %v302
  %v360 = vpack.c.b16 %v305, %v304
  %v361 = vpack.c.b16 %v307, %v306
  %v362 = vpack.c.b16 %v309, %v308
  %v363 = vpack.c.b16 %v311, %v310
  %v364 = vpack.c.b16 %v313, %v312
  %v365 = vpack.c.b16 %v315, %v314
  %v366 = vpack.c.b16 %v317, %v316
  %v367 = vpack.c.b16 %v319, %v318
  %v368 = vpack.c.b16 %v321, %v320
  %v369 = vpack.c.b16 %v323, %v322
  %v370 = vpack.c.b16 %v325, %v324
  %v371 = vpack.c.b16 %v327, %v326
  %v372 = vpack.c.b16 %v329, %v328
  %v373 = vpack.c.b16 %v331, %v330
  %v374 = vpack.c.b16 %v333, %v332
  %v375 = vpack.c.b16 %v335, %v334
  %v376 = vpack.c.b16 %v337, %v336
  %v377 = vpack.c.b16 %v339, %v338
  %v378 = vpack.c.b16 %v341, %v340
  %v379 = vpack.c.b16 %v343, %v342
  %v380 = vpack.c.b16 %v345, %v344
  %v381 = vpack.c.b16 %v347, %v346
  %v382 = vpack.c.b16 %v349, %v348
  %v383 = vpack.c.b16 %v351, %v350
  %v432 = vunpack.c.l.b16 %v208
  %v433 = vunpack.c.l.b16 %v209
  %v434 = vunpack.c.l.b16 %v210
  %v435 = vunpack.c.l.b16 %v211
  %v436 = vunpack.c.l.b16 %v212
  %v437 = vunpack.c.l.b16 %v213
  %v438 = vunpack.c.l.b16 %v214
  %v439 = vunpack.c.l.b16 %v215
  %v440 = vunpack.c.l.b16 %v216
  %v441 = vunpack.c.l.b16 %v217
  %v442 = vunpack.c.l.b16 %v218
  %v443 = vunpack.c.l.b16 %v219
  %v444 = vunpack.c.l.b16 %v220
  %v445 = vunpack.c.l.b16 %v221
  %v446 = vunpack.c.l.b16 %v222
  %v447 = vunpack.c.l.b16 %v223
  %v448 = vpack.c.b16 %v433, %v432
  %v449 = vpack.c.b16 %v435, %v434
  %v450 = vpack.c.b16 %v437, %v436
  %v451 = vpack.c.b16 %v439, %v438
  %v452 = vpack.c.b16 %v441, %v440
  %v453 = vpack.c.b16 %v443, %v442
  %v454 = vpack.c.b16 %v445, %v444
  %v455 = vpack.c.b16 %v447, %v446
  %464 = vmatprep.subr.bf16.mxu0 0
  %465 = vmatpush1.bf16.msra.mxu0 %v448
  %466 = vmatprep.subr.bf16.mxu0 0
  %467 = vmatpush1.bf16.msra.mxu0 %v449
  %468 = vmatprep.subr.bf16.mxu0 0
  %469 = vmatpush1.bf16.msra.mxu0 %v450
  %470 = vmatprep.subr.bf16.mxu0 0
  %471 = vmatpush1.bf16.msra.mxu0 %v451
  %472 = vmatprep.subr.bf16.mxu0 0
  %473 = vmatpush1.bf16.msra.mxu0 %v452
  %474 = vmatprep.subr.bf16.mxu0 0
  %475 = vmatpush1.bf16.msra.mxu0 %v453
  %476 = vmatprep.subr.bf16.mxu0 0
  %477 = vmatpush1.bf16.msra.mxu0 %v454
  %478 = vmatprep.subr.bf16.mxu0 0
  %479 = vmatpush1.bf16.msra.mxu0 %v455
  %480 = vmatprep.subr.bf16.mxu0 0
  %481 = vmatpush1.bf16.msra.mxu0 0
  %482 = vmatprep.subr.bf16.mxu0 0
  %483 = vmatpush1.bf16.msra.mxu0 0
  %484 = vmatprep.subr.bf16.mxu0 0
  %485 = vmatpush1.bf16.msra.mxu0 0
  %486 = vmatprep.subr.bf16.mxu0 0
  %487 = vmatpush1.bf16.msra.mxu0 0
  %488 = vmatprep.subr.bf16.mxu0 0
  %489 = vmatpush1.bf16.msra.mxu0 0
  %490 = vmatprep.subr.bf16.mxu0 0
  %491 = vmatpush1.bf16.msra.mxu0 0
  %492 = vmatprep.subr.bf16.mxu0 0
  %493 = vmatpush1.bf16.msra.mxu0 0
  %494 = vmatprep.subr.bf16.mxu0 0
  %495 = vmatpush1.bf16.msra.mxu0 0
  %496 = vmatprep.mubr.bf16.mxu0 0
  %497 = vmatmul.mubr.bf16.gmra.mrb[0].mxu0 %v352
  %v498 = vpop.f32.mrb[0].mxu0
  %v499 = vadd.f32 0.0, %v498
  %v500 = vpop.f32.mrb[0].mxu0
  %v501 = vpop.f32.mrb[0].mxu0
  %v502 = vadd.f32 0.0, %v501
  %v503 = vpop.f32.mrb[0].mxu0
  %504 = vmatprep.mubr.bf16.mxu0 0
  %505 = vmatmul.mubr.bf16.gmra.mrb[0].mxu0 %v353
  %v506 = vpop.f32.mrb[0].mxu0
  %v507 = vadd.f32 0.0, %v506
  %v508 = vpop.f32.mrb[0].mxu0
  %v509 = vpop.f32.mrb[0].mxu0
  %v510 = vadd.f32 0.0, %v509
  %v511 = vpop.f32.mrb[0].mxu0
  %512 = vmatprep.mubr.bf16.mxu0 0
  %513 = vmatmul.mubr.bf16.gmra.mrb[0].mxu0 %v354
  %v514 = vpop.f32.mrb[0].mxu0
  %v515 = vadd.f32 0.0, %v514
  %v516 = vpop.f32.mrb[0].mxu0
  %v517 = vpop.f32.mrb[0].mxu0
  %v518 = vadd.f32 0.0, %v517
  %v519 = vpop.f32.mrb[0].mxu0
  %520 = vmatprep.mubr.bf16.mxu0 0
  %521 = vmatmul.mubr.bf16.gmra.mrb[0].mxu0 %v355
  %v522 = vpop.f32.mrb[0].mxu0
  %v523 = vadd.f32 0.0, %v522
  %v524 = vpop.f32.mrb[0].mxu0
  %v525 = vpop.f32.mrb[0].mxu0
  %v526 = vadd.f32 0.0, %v525
  %v527 = vpop.f32.mrb[0].mxu0
  %528 = vmatprep.mubr.bf16.mxu0 0
  %529 = vmatmul.mubr.bf16.gmra.mrb[0].mxu0 %v356
  %v530 = vpop.f32.mrb[0].mxu0
  %v531 = vadd.f32 0.0, %v530
  %v532 = vpop.f32.mrb[0].mxu0
  %v533 = vpop.f32.mrb[0].mxu0
  %v534 = vadd.f32 0.0, %v533
  %v535 = vpop.f32.mrb[0].mxu0
  %536 = vmatprep.mubr.bf16.mxu0 0
  %537 = vmatmul.mubr.bf16.gmra.mrb[0].mxu0 %v357
  %v538 = vpop.f32.mrb[0].mxu0
  %v539 = vadd.f32 0.0, %v538
  %v540 = vpop.f32.mrb[0].mxu0
  %v541 = vpop.f32.mrb[0].mxu0
  %v542 = vadd.f32 0.0, %v541
  %v543 = vpop.f32.mrb[0].mxu0
  %544 = vmatprep.mubr.bf16.mxu0 0
  %545 = vmatmul.mubr.bf16.gmra.mrb[0].mxu0 %v358
  %v546 = vpop.f32.mrb[0].mxu0
  %v547 = vadd.f32 0.0, %v546
  %v548 = vpop.f32.mrb[0].mxu0
  %v549 = vpop.f32.mrb[0].mxu0
  %v550 = vadd.f32 0.0, %v549
  %v551 = vpop.f32.mrb[0].mxu0
  %552 = vmatprep.mubr.bf16.mxu0 0
  %553 = vmatmul.mubr.bf16.gmra.mrb[0].mxu0 %v359
  %v554 = vpop.f32.mrb[0].mxu0
  %v555 = vadd.f32 0.0, %v554
  %v556 = vpop.f32.mrb[0].mxu0
  %v557 = vpop.f32.mrb[0].mxu0
  %v558 = vadd.f32 0.0, %v557
  %v559 = vpop.f32.mrb[0].mxu0
  %560 = vmatprep.mubr.bf16.mxu0 0
  %561 = vmatmul.mubr.bf16.gmra.mrb[0].mxu0 %v360
  %v562 = vpop.f32.mrb[0].mxu0
  %v563 = vadd.f32 0.0, %v562
  %v564 = vpop.f32.mrb[0].mxu0
  %v565 = vpop.f32.mrb[0].mxu0
  %v566 = vadd.f32 0.0, %v565
  %v567 = vpop.f32.mrb[0].mxu0
  %568 = vmatprep.mubr.bf16.mxu0 0
  %569 = vmatmul.mubr.bf16.gmra.mrb[0].mxu0 %v361
  %v570 = vpop.f32.mrb[0].mxu0
  %v571 = vadd.f32 0.0, %v570
  %v572 = vpop.f32.mrb[0].mxu0
  %v573 = vpop.f32.mrb[0].mxu0
  %v574 = vadd.f32 0.0, %v573
  %v575 = vpop.f32.mrb[0].mxu0
  %576 = vmatprep.mubr.bf16.mxu0 0
  %577 = vmatmul.mubr.bf16.gmra.mrb[0].mxu0 %v362
  %v578 = vpop.f32.mrb[0].mxu0
  %v579 = vadd.f32 0.0, %v578
  %v580 = vpop.f32.mrb[0].mxu0
  %v581 = vpop.f32.mrb[0].mxu0
  %v582 = vadd.f32 0.0, %v581
  %v583 = vpop.f32.mrb[0].mxu0
  %584 = vmatprep.mubr.bf16.mxu0 0
  %585 = vmatmul.mubr.bf16.gmra.mrb[0].mxu0 %v363
  %v586 = vpop.f32.mrb[0].mxu0
  %v587 = vadd.f32 0.0, %v586
  %v588 = vpop.f32.mrb[0].mxu0
  %v589 = vpop.f32.mrb[0].mxu0
  %v590 = vadd.f32 0.0, %v589
  %v591 = vpop.f32.mrb[0].mxu0
  %592 = vmatprep.mubr.bf16.mxu0 0
  %593 = vmatmul.mubr.bf16.gmra.mrb[0].mxu0 %v364
  %v594 = vpop.f32.mrb[0].mxu0
  %v595 = vadd.f32 0.0, %v594
  %v596 = vpop.f32.mrb[0].mxu0
  %v597 = vpop.f32.mrb[0].mxu0
  %v598 = vadd.f32 0.0, %v597
  %v599 = vpop.f32.mrb[0].mxu0
  %600 = vmatprep.mubr.bf16.mxu0 0
  %601 = vmatmul.mubr.bf16.gmra.mrb[0].mxu0 %v365
  %v602 = vpop.f32.mrb[0].mxu0
  %v603 = vadd.f32 0.0, %v602
  %v604 = vpop.f32.mrb[0].mxu0
  %v605 = vpop.f32.mrb[0].mxu0
  %v606 = vadd.f32 0.0, %v605
  %v607 = vpop.f32.mrb[0].mxu0
  %608 = vmatprep.mubr.bf16.mxu0 0
  %609 = vmatmul.mubr.bf16.gmra.mrb[0].mxu0 %v366
  %v610 = vpop.f32.mrb[0].mxu0
  %v611 = vadd.f32 0.0, %v610
  %v612 = vpop.f32.mrb[0].mxu0
  %v613 = vpop.f32.mrb[0].mxu0
  %v614 = vadd.f32 0.0, %v613
  %v615 = vpop.f32.mrb[0].mxu0
  %616 = vmatprep.mubr.bf16.mxu0 0
  %617 = vmatmul.mubr.bf16.gmra.mrb[0].mxu0 %v367
  %v618 = vpop.f32.mrb[0].mxu0
  %v619 = vadd.f32 0.0, %v618
  %v620 = vpop.f32.mrb[0].mxu0
  %v621 = vpop.f32.mrb[0].mxu0
  %v622 = vadd.f32 0.0, %v621
  %v623 = vpop.f32.mrb[0].mxu0
  %624 = vmatprep.mubr.bf16.mxu0 0
  %625 = vmatmul.mubr.bf16.gmra.mrb[0].mxu0 %v368
  %v626 = vpop.f32.mrb[0].mxu0
  %v627 = vadd.f32 0.0, %v626
  %v628 = vpop.f32.mrb[0].mxu0
  %v629 = vpop.f32.mrb[0].mxu0
  %v630 = vadd.f32 0.0, %v629
  %v631 = vpop.f32.mrb[0].mxu0
  %632 = vmatprep.mubr.bf16.mxu0 0
  %633 = vmatmul.mubr.bf16.gmra.mrb[0].mxu0 %v369
  %v634 = vpop.f32.mrb[0].mxu0
  %v635 = vadd.f32 0.0, %v634
  %v636 = vpop.f32.mrb[0].mxu0
  %v637 = vpop.f32.mrb[0].mxu0
  %v638 = vadd.f32 0.0, %v637
  %v639 = vpop.f32.mrb[0].mxu0
  %640 = vmatprep.mubr.bf16.mxu0 0
  %641 = vmatmul.mubr.bf16.gmra.mrb[0].mxu0 %v370
  %v642 = vpop.f32.mrb[0].mxu0
  %v643 = vadd.f32 0.0, %v642
  %v644 = vpop.f32.mrb[0].mxu0
  %v645 = vpop.f32.mrb[0].mxu0
  %v646 = vadd.f32 0.0, %v645
  %v647 = vpop.f32.mrb[0].mxu0
  %648 = vmatprep.mubr.bf16.mxu0 0
  %649 = vmatmul.mubr.bf16.gmra.mrb[0].mxu0 %v371
  %v650 = vpop.f32.mrb[0].mxu0
  %v651 = vadd.f32 0.0, %v650
  %v652 = vpop.f32.mrb[0].mxu0
  %v653 = vpop.f32.mrb[0].mxu0
  %v654 = vadd.f32 0.0, %v653
  %v655 = vpop.f32.mrb[0].mxu0
  %656 = vmatprep.mubr.bf16.mxu0 0
  %657 = vmatmul.mubr.bf16.gmra.mrb[0].mxu0 %v372
  %v658 = vpop.f32.mrb[0].mxu0
  %v659 = vadd.f32 0.0, %v658
  %v660 = vpop.f32.mrb[0].mxu0
  %v661 = vpop.f32.mrb[0].mxu0
  %v662 = vadd.f32 0.0, %v661
  %v663 = vpop.f32.mrb[0].mxu0
  %664 = vmatprep.mubr.bf16.mxu0 0
  %665 = vmatmul.mubr.bf16.gmra.mrb[0].mxu0 %v373
  %v666 = vpop.f32.mrb[0].mxu0
  %v667 = vadd.f32 0.0, %v666
  %v668 = vpop.f32.mrb[0].mxu0
  %v669 = vpop.f32.mrb[0].mxu0
  %v670 = vadd.f32 0.0, %v669
  %v671 = vpop.f32.mrb[0].mxu0
  %672 = vmatprep.mubr.bf16.mxu0 0
  %673 = vmatmul.mubr.bf16.gmra.mrb[0].mxu0 %v374
  %v674 = vpop.f32.mrb[0].mxu0
  %v675 = vadd.f32 0.0, %v674
  %v676 = vpop.f32.mrb[0].mxu0
  %v677 = vpop.f32.mrb[0].mxu0
  %v678 = vadd.f32 0.0, %v677
  %v679 = vpop.f32.mrb[0].mxu0
  %680 = vmatprep.mubr.bf16.mxu0 0
  %681 = vmatmul.mubr.bf16.gmra.mrb[0].mxu0 %v375
  %v682 = vpop.f32.mrb[0].mxu0
  %v683 = vadd.f32 0.0, %v682
  %v684 = vpop.f32.mrb[0].mxu0
  %v685 = vpop.f32.mrb[0].mxu0
  %v686 = vadd.f32 0.0, %v685
  %v687 = vpop.f32.mrb[0].mxu0
  %688 = vmatprep.mubr.bf16.mxu0 0
  %689 = vmatmul.mubr.bf16.gmra.mrb[0].mxu0 %v376
  %v690 = vpop.f32.mrb[0].mxu0
  %v691 = vadd.f32 0.0, %v690
  %v692 = vpop.f32.mrb[0].mxu0
  %v693 = vpop.f32.mrb[0].mxu0
  %v694 = vadd.f32 0.0, %v693
  %v695 = vpop.f32.mrb[0].mxu0
  %696 = vmatprep.mubr.bf16.mxu0 0
  %697 = vmatmul.mubr.bf16.gmra.mrb[0].mxu0 %v377
  %v698 = vpop.f32.mrb[0].mxu0
  %v699 = vadd.f32 0.0, %v698
  %v700 = vpop.f32.mrb[0].mxu0
  %v701 = vpop.f32.mrb[0].mxu0
  %v702 = vadd.f32 0.0, %v701
  %v703 = vpop.f32.mrb[0].mxu0
  %704 = vmatprep.mubr.bf16.mxu0 0
  %705 = vmatmul.mubr.bf16.gmra.mrb[0].mxu0 %v378
  %v706 = vpop.f32.mrb[0].mxu0
  %v707 = vadd.f32 0.0, %v706
  %v708 = vpop.f32.mrb[0].mxu0
  %v709 = vpop.f32.mrb[0].mxu0
  %v710 = vadd.f32 0.0, %v709
  %v711 = vpop.f32.mrb[0].mxu0
  %712 = vmatprep.mubr.bf16.mxu0 0
  %713 = vmatmul.mubr.bf16.gmra.mrb[0].mxu0 %v379
  %v714 = vpop.f32.mrb[0].mxu0
  %v715 = vadd.f32 0.0, %v714
  %v716 = vpop.f32.mrb[0].mxu0
  %v717 = vpop.f32.mrb[0].mxu0
  %v718 = vadd.f32 0.0, %v717
  %v719 = vpop.f32.mrb[0].mxu0
  %720 = vmatprep.mubr.bf16.mxu0 0
  %721 = vmatmul.mubr.bf16.gmra.mrb[0].mxu0 %v380
  %v722 = vpop.f32.mrb[0].mxu0
  %v723 = vadd.f32 0.0, %v722
  %v724 = vpop.f32.mrb[0].mxu0
  %v725 = vpop.f32.mrb[0].mxu0
  %v726 = vadd.f32 0.0, %v725
  %v727 = vpop.f32.mrb[0].mxu0
  %728 = vmatprep.mubr.bf16.mxu0 0
  %729 = vmatmul.mubr.bf16.gmra.mrb[0].mxu0 %v381
  %v730 = vpop.f32.mrb[0].mxu0
  %v731 = vadd.f32 0.0, %v730
  %v732 = vpop.f32.mrb[0].mxu0
  %v733 = vpop.f32.mrb[0].mxu0
  %v734 = vadd.f32 0.0, %v733
  %v735 = vpop.f32.mrb[0].mxu0
  %736 = vmatprep.mubr.bf16.mxu0 0
  %737 = vmatmul.mubr.bf16.gmra.mrb[0].mxu0 %v382
  %v738 = vpop.f32.mrb[0].mxu0
  %v739 = vadd.f32 0.0, %v738
  %v740 = vpop.f32.mrb[0].mxu0
  %v741 = vpop.f32.mrb[0].mxu0
  %v742 = vadd.f32 0.0, %v741
  %v743 = vpop.f32.mrb[0].mxu0
  %744 = vmatprep.mubr.bf16.mxu0 0
  %745 = vmatmul.mubr.bf16.gmra.mrb[0].mxu0 %v383
  %v746 = vpop.f32.mrb[0].mxu0
  %v747 = vadd.f32 0.0, %v746
  %v748 = vpop.f32.mrb[0].mxu0
  %v749 = vpop.f32.mrb[0].mxu0
  %v750 = vadd.f32 0.0, %v749
  %v751 = vpop.f32.mrb[0].mxu0
  %752 = vdwg.mxu0
  %v753 = vadd.f32 %v80, %v499
  %v754 = vadd.f32 %v81, %v502
  %v755 = vadd.f32 %v82, %v507
  %v756 = vadd.f32 %v83, %v510
  %v757 = vadd.f32 %v84, %v515
  %v758 = vadd.f32 %v85, %v518
  %v759 = vadd.f32 %v86, %v523
  %v760 = vadd.f32 %v87, %v526
  %v761 = vadd.f32 %v88, %v531
  %v762 = vadd.f32 %v89, %v534
  %v763 = vadd.f32 %v90, %v539
  %v764 = vadd.f32 %v91, %v542
  %v765 = vadd.f32 %v92, %v547
  %v766 = vadd.f32 %v93, %v550
  %v767 = vadd.f32 %v94, %v555
  %v768 = vadd.f32 %v95, %v558
  %v769 = vadd.f32 %v96, %v563
  %v770 = vadd.f32 %v97, %v566
  %v771 = vadd.f32 %v98, %v571
  %v772 = vadd.f32 %v99, %v574
  %v773 = vadd.f32 %v100, %v579
  %v774 = vadd.f32 %v101, %v582
  %v775 = vadd.f32 %v102, %v587
  %v776 = vadd.f32 %v103, %v590
  %v777 = vadd.f32 %v104, %v595
  %v778 = vadd.f32 %v105, %v598
  %v779 = vadd.f32 %v106, %v603
  %v780 = vadd.f32 %v107, %v606
  %v781 = vadd.f32 %v108, %v611
  %v782 = vadd.f32 %v109, %v614
  %v783 = vadd.f32 %v110, %v619
  %v784 = vadd.f32 %v111, %v622
  %v785 = vadd.f32 %v112, %v627
  %v786 = vadd.f32 %v113, %v630
  %v787 = vadd.f32 %v114, %v635
  %v788 = vadd.f32 %v115, %v638
  %v789 = vadd.f32 %v116, %v643
  %v790 = vadd.f32 %v117, %v646
  %v791 = vadd.f32 %v118, %v651
  %v792 = vadd.f32 %v119, %v654
  %v793 = vadd.f32 %v120, %v659
  %v794 = vadd.f32 %v121, %v662
  %v795 = vadd.f32 %v122, %v667
  %v796 = vadd.f32 %v123, %v670
  %v797 = vadd.f32 %v124, %v675
  %v798 = vadd.f32 %v125, %v678
  %v799 = vadd.f32 %v126, %v683
  %v800 = vadd.f32 %v127, %v686
  %v801 = vadd.f32 %v128, %v691
  %v802 = vadd.f32 %v129, %v694
  %v803 = vadd.f32 %v130, %v699
  %v804 = vadd.f32 %v131, %v702
  %v805 = vadd.f32 %v132, %v707
  %v806 = vadd.f32 %v133, %v710
  %v807 = vadd.f32 %v134, %v715
  %v808 = vadd.f32 %v135, %v718
  %v809 = vadd.f32 %v136, %v723
  %v810 = vadd.f32 %v137, %v726
  %v811 = vadd.f32 %v138, %v731
  %v812 = vadd.f32 %v139, %v734
  %v813 = vadd.f32 %v140, %v739
  %v814 = vadd.f32 %v141, %v742
  %v815 = vadd.f32 %v142, %v747
  %v816 = vadd.f32 %v143, %v750
  %817 = vst [vmem:[#allocation2] sm:$0xff] %v753
  %818 = vst [vmem:[#allocation2 + $0x8] sm:$0xff] %v754
  %819 = vst [vmem:[#allocation2 + $0x10] sm:$0xff] %v755
  %820 = vst [vmem:[#allocation2 + $0x18] sm:$0xff] %v756
  %821 = vst [vmem:[#allocation2 + $0x20] sm:$0xff] %v757
  %822 = vst [vmem:[#allocation2 + $0x28] sm:$0xff] %v758
  %823 = vst [vmem:[#allocation2 + $0x30] sm:$0xff] %v759
  %824 = vst [vmem:[#allocation2 + $0x38] sm:$0xff] %v760
  %825 = vst [vmem:[#allocation2 + $0x40] sm:$0xff] %v761
  %826 = vst [vmem:[#allocation2 + $0x48] sm:$0xff] %v762
  %827 = vst [vmem:[#allocation2 + $0x50] sm:$0xff] %v763
  %828 = vst [vmem:[#allocation2 + $0x58] sm:$0xff] %v764
  %829 = vst [vmem:[#allocation2 + $0x60] sm:$0xff] %v765
  %830 = vst [vmem:[#allocation2 + $0x68] sm:$0xff] %v766
  %831 = vst [vmem:[#allocation2 + $0x70] sm:$0xff] %v767
  %832 = vst [vmem:[#allocation2 + $0x78] sm:$0xff] %v768
  %833 = vst [vmem:[#allocation2 + $0x80] sm:$0xff] %v769
  %834 = vst [vmem:[#allocation2 + $0x88] sm:$0xff] %v770
  %835 = vst [vmem:[#allocation2 + $0x90] sm:$0xff] %v771
  %836 = vst [vmem:[#allocation2 + $0x98] sm:$0xff] %v772
  %837 = vst [vmem:[#allocation2 + $0xa0] sm:$0xff] %v773
  %838 = vst [vmem:[#allocation2 + $0xa8] sm:$0xff] %v774
  %839 = vst [vmem:[#allocation2 + $0xb0] sm:$0xff] %v775
  %840 = vst [vmem:[#allocation2 + $0xb8] sm:$0xff] %v776
  %841 = vst [vmem:[#allocation2 + $0xc0] sm:$0xff] %v777
  %842 = vst [vmem:[#allocation2 + $0xc8] sm:$0xff] %v778
  %843 = vst [vmem:[#allocation2 + $0xd0] sm:$0xff] %v779
  %844 = vst [vmem:[#allocation2 + $0xd8] sm:$0xff] %v780
  %845 = vst [vmem:[#allocation2 + $0xe0] sm:$0xff] %v781
  %846 = vst [vmem:[#allocation2 + $0xe8] sm:$0xff] %v782
  %847 = vst [vmem:[#allocation2 + $0xf0] sm:$0xff] %v783
  %848 = vst [vmem:[#allocation2 + $0xf8] sm:$0xff] %v784
  %849 = vst [vmem:[#allocation2 + $0x100] sm:$0xff] %v785
  %850 = vst [vmem:[#allocation2 + $0x108] sm:$0xff] %v786
  %851 = vst [vmem:[#allocation2 + $0x110] sm:$0xff] %v787
  %852 = vst [vmem:[#allocation2 + $0x118] sm:$0xff] %v788
  %853 = vst [vmem:[#allocation2 + $0x120] sm:$0xff] %v789
  %854 = vst [vmem:[#allocation2 + $0x128] sm:$0xff] %v790
  %855 = vst [vmem:[#allocation2 + $0x130] sm:$0xff] %v791
  %856 = vst [vmem:[#allocation2 + $0x138] sm:$0xff] %v792
  %857 = vst [vmem:[#allocation2 + $0x140] sm:$0xff] %v793
  %858 = vst [vmem:[#allocation2 + $0x148] sm:$0xff] %v794
  %859 = vst [vmem:[#allocation2 + $0x150] sm:$0xff] %v795
  %860 = vst [vmem:[#allocation2 + $0x158] sm:$0xff] %v796
  %861 = vst [vmem:[#allocation2 + $0x160] sm:$0xff] %v797
  %862 = vst [vmem:[#allocation2 + $0x168] sm:$0xff] %v798
  %863 = vst [vmem:[#allocation2 + $0x170] sm:$0xff] %v799
  %864 = vst [vmem:[#allocation2 + $0x178] sm:$0xff] %v800
  %865 = vst [vmem:[#allocation2 + $0x180] sm:$0xff] %v801
  %866 = vst [vmem:[#allocation2 + $0x188] sm:$0xff] %v802
  %867 = vst [vmem:[#allocation2 + $0x190] sm:$0xff] %v803
  %868 = vst [vmem:[#allocation2 + $0x198] sm:$0xff] %v804
  %869 = vst [vmem:[#allocation2 + $0x1a0] sm:$0xff] %v805
  %870 = vst [vmem:[#allocation2 + $0x1a8] sm:$0xff] %v806
  %871 = vst [vmem:[#allocation2 + $0x1b0] sm:$0xff] %v807
  %872 = vst [vmem:[#allocation2 + $0x1b8] sm:$0xff] %v808
  %873 = vst [vmem:[#allocation2 + $0x1c0] sm:$0xff] %v809
  %874 = vst [vmem:[#allocation2 + $0x1c8] sm:$0xff] %v810
  %875 = vst [vmem:[#allocation2 + $0x1d0] sm:$0xff] %v811
  %876 = vst [vmem:[#allocation2 + $0x1d8] sm:$0xff] %v812
  %877 = vst [vmem:[#allocation2 + $0x1e0] sm:$0xff] %v813
  %878 = vst [vmem:[#allocation2 + $0x1e8] sm:$0xff] %v814
  %879 = vst [vmem:[#allocation2 + $0x1f0] sm:$0xff] %v815
  %880 = vst [vmem:[#allocation2 + $0x1f8] sm:$0xff] %v816
  // Predicated region
  $region14: #{unet_encoder_forward.5} parent=0 // pred_check
    %p881 = pneg %p12
  $region15: #{unet_encoder_forward.5} parent=0 // pred_check_branch
    %883 = sbr.rel (%p881) target = $region17
  $region16: #{unet_encoder_forward.5} parent=0 // pred_region
    %v884 = vld [vmem:[#allocation2] sm:$0xff]
    %v885 = vld [vmem:[#allocation2 + $0x8] sm:$0xff]
    %v886 = vld [vmem:[#allocation2 + $0x10] sm:$0xff]
    %v887 = vld [vmem:[#allocation2 + $0x18] sm:$0xff]
    %v888 = vld [vmem:[#allocation2 + $0x20] sm:$0xff]
    %v889 = vld [vmem:[#allocation2 + $0x28] sm:$0xff]
    %v890 = vld [vmem:[#allocation2 + $0x30] sm:$0xff]
    %v891 = vld [vmem:[#allocation2 + $0x38] sm:$0xff]
    %v892 = vld [vmem:[#allocation2 + $0x40] sm:$0xff]
    %v893 = vld [vmem:[#allocation2 + $0x48] sm:$0xff]
    %v894 = vld [vmem:[#allocation2 + $0x50] sm:$0xff]
    %v895 = vld [vmem:[#allocation2 + $0x58] sm:$0xff]
    %v896 = vld [vmem:[#allocation2 + $0x60] sm:$0xff]
    %v897 = vld [vmem:[#allocation2 + $0x68] sm:$0xff]
    %v898 = vld [vmem:[#allocation2 + $0x70] sm:$0xff]
    %v899 = vld [vmem:[#allocation2 + $0x78] sm:$0xff]
    %v900 = vld [vmem:[#allocation2 + $0x80] sm:$0xff]
    %v901 = vld [vmem:[#allocation2 + $0x88] sm:$0xff]
    %v902 = vld [vmem:[#allocation2 + $0x90] sm:$0xff]
    %v903 = vld [vmem:[#allocation2 + $0x98] sm:$0xff]
    %v904 = vld [vmem:[#allocation2 + $0xa0] sm:$0xff]
    %v905 = vld [vmem:[#allocation2 + $0xa8] sm:$0xff]
    %v906 = vld [vmem:[#allocation2 + $0xb0] sm:$0xff]
    %v907 = vld [vmem:[#allocation2 + $0xb8] sm:$0xff]
    %v908 = vld [vmem:[#allocation2 + $0xc0] sm:$0xff]
    %v909 = vld [vmem:[#allocation2 + $0xc8] sm:$0xff]
    %v910 = vld [vmem:[#allocation2 + $0xd0] sm:$0xff]
    %v911 = vld [vmem:[#allocation2 + $0xd8] sm:$0xff]
    %v912 = vld [vmem:[#allocation2 + $0xe0] sm:$0xff]
    %v913 = vld [vmem:[#allocation2 + $0xe8] sm:$0xff]
    %v914 = vld [vmem:[#allocation2 + $0xf0] sm:$0xff]
    %v915 = vld [vmem:[#allocation2 + $0xf8] sm:$0xff]
    %v916 = vld [vmem:[#allocation2 + $0x100] sm:$0xff]
    %v917 = vld [vmem:[#allocation2 + $0x108] sm:$0xff]
    %v918 = vld [vmem:[#allocation2 + $0x110] sm:$0xff]
    %v919 = vld [vmem:[#allocation2 + $0x118] sm:$0xff]
    %v920 = vld [vmem:[#allocation2 + $0x120] sm:$0xff]
    %v921 = vld [vmem:[#allocation2 + $0x128] sm:$0xff]
    %v922 = vld [vmem:[#allocation2 + $0x130] sm:$0xff]
    %v923 = vld [vmem:[#allocation2 + $0x138] sm:$0xff]
    %v924 = vld [vmem:[#allocation2 + $0x140] sm:$0xff]
    %v925 = vld [vmem:[#allocation2 + $0x148] sm:$0xff]
    %v926 = vld [vmem:[#allocation2 + $0x150] sm:$0xff]
    %v927 = vld [vmem:[#allocation2 + $0x158] sm:$0xff]
    %v928 = vld [vmem:[#allocation2 + $0x160] sm:$0xff]
    %v929 = vld [vmem:[#allocation2 + $0x168] sm:$0xff]
    %v930 = vld [vmem:[#allocation2 + $0x170] sm:$0xff]
    %v931 = vld [vmem:[#allocation2 + $0x178] sm:$0xff]
    %v932 = vld [vmem:[#allocation2 + $0x180] sm:$0xff]
    %v933 = vld [vmem:[#allocation2 + $0x188] sm:$0xff]
    %v934 = vld [vmem:[#allocation2 + $0x190] sm:$0xff]
    %v935 = vld [vmem:[#allocation2 + $0x198] sm:$0xff]
    %v936 = vld [vmem:[#allocation2 + $0x1a0] sm:$0xff]
    %v937 = vld [vmem:[#allocation2 + $0x1a8] sm:$0xff]
    %v938 = vld [vmem:[#allocation2 + $0x1b0] sm:$0xff]
    %v939 = vld [vmem:[#allocation2 + $0x1b8] sm:$0xff]
    %v940 = vld [vmem:[#allocation2 + $0x1c0] sm:$0xff]
    %v941 = vld [vmem:[#allocation2 + $0x1c8] sm:$0xff]
    %v942 = vld [vmem:[#allocation2 + $0x1d0] sm:$0xff]
    %v943 = vld [vmem:[#allocation2 + $0x1d8] sm:$0xff]
    %v944 = vld [vmem:[#allocation2 + $0x1e0] sm:$0xff]
    %v945 = vld [vmem:[#allocation2 + $0x1e8] sm:$0xff]
    %v946 = vld [vmem:[#allocation2 + $0x1f0] sm:$0xff]
    %v947 = vld [vmem:[#allocation2 + $0x1f8] sm:$0xff]
    %948 = vst [vmem:[%s2] sm:$0xff] %v884
    %949 = vst [vmem:[%s2 + $0x8] sm:$0xff] %v885
    %950 = vst [vmem:[%s2 + $0x10] sm:$0xff] %v886
    %951 = vst [vmem:[%s2 + $0x18] sm:$0xff] %v887
    %952 = vst [vmem:[%s2 + $0x20] sm:$0xff] %v888
    %953 = vst [vmem:[%s2 + $0x28] sm:$0xff] %v889
    %954 = vst [vmem:[%s2 + $0x30] sm:$0xff] %v890
    %955 = vst [vmem:[%s2 + $0x38] sm:$0xff] %v891
    %956 = vst [vmem:[%s2 + $0x40] sm:$0xff] %v892
    %957 = vst [vmem:[%s2 + $0x48] sm:$0xff] %v893
    %958 = vst [vmem:[%s2 + $0x50] sm:$0xff] %v894
    %959 = vst [vmem:[%s2 + $0x58] sm:$0xff] %v895
    %960 = vst [vmem:[%s2 + $0x60] sm:$0xff] %v896
    %961 = vst [vmem:[%s2 + $0x68] sm:$0xff] %v897
    %962 = vst [vmem:[%s2 + $0x70] sm:$0xff] %v898
    %963 = vst [vmem:[%s2 + $0x78] sm:$0xff] %v899
    %964 = vst [vmem:[%s2 + $0x80] sm:$0xff] %v900
    %965 = vst [vmem:[%s2 + $0x88] sm:$0xff] %v901
    %966 = vst [vmem:[%s2 + $0x90] sm:$0xff] %v902
    %967 = vst [vmem:[%s2 + $0x98] sm:$0xff] %v903
    %968 = vst [vmem:[%s2 + $0xa0] sm:$0xff] %v904
    %969 = vst [vmem:[%s2 + $0xa8] sm:$0xff] %v905
    %970 = vst [vmem:[%s2 + $0xb0] sm:$0xff] %v906
    %971 = vst [vmem:[%s2 + $0xb8] sm:$0xff] %v907
    %972 = vst [vmem:[%s2 + $0xc0] sm:$0xff] %v908
    %973 = vst [vmem:[%s2 + $0xc8] sm:$0xff] %v909
    %974 = vst [vmem:[%s2 + $0xd0] sm:$0xff] %v910
    %975 = vst [vmem:[%s2 + $0xd8] sm:$0xff] %v911
    %976 = vst [vmem:[%s2 + $0xe0] sm:$0xff] %v912
    %977 = vst [vmem:[%s2 + $0xe8] sm:$0xff] %v913
    %978 = vst [vmem:[%s2 + $0xf0] sm:$0xff] %v914
    %979 = vst [vmem:[%s2 + $0xf8] sm:$0xff] %v915
    %980 = vst [vmem:[%s2 + $0x100] sm:$0xff] %v916
    %981 = vst [vmem:[%s2 + $0x108] sm:$0xff] %v917
    %982 = vst [vmem:[%s2 + $0x110] sm:$0xff] %v918
    %983 = vst [vmem:[%s2 + $0x118] sm:$0xff] %v919
    %984 = vst [vmem:[%s2 + $0x120] sm:$0xff] %v920
    %985 = vst [vmem:[%s2 + $0x128] sm:$0xff] %v921
    %986 = vst [vmem:[%s2 + $0x130] sm:$0xff] %v922
    %987 = vst [vmem:[%s2 + $0x138] sm:$0xff] %v923
    %988 = vst [vmem:[%s2 + $0x140] sm:$0xff] %v924
    %989 = vst [vmem:[%s2 + $0x148] sm:$0xff] %v925
    %990 = vst [vmem:[%s2 + $0x150] sm:$0xff] %v926
    %991 = vst [vmem:[%s2 + $0x158] sm:$0xff] %v927
    %992 = vst [vmem:[%s2 + $0x160] sm:$0xff] %v928
    %993 = vst [vmem:[%s2 + $0x168] sm:$0xff] %v929
    %994 = vst [vmem:[%s2 + $0x170] sm:$0xff] %v930
    %995 = vst [vmem:[%s2 + $0x178] sm:$0xff] %v931
    %996 = vst [vmem:[%s2 + $0x180] sm:$0xff] %v932
    %997 = vst [vmem:[%s2 + $0x188] sm:$0xff] %v933
    %998 = vst [vmem:[%s2 + $0x190] sm:$0xff] %v934
    %999 = vst [vmem:[%s2 + $0x198] sm:$0xff] %v935
    %1000 = vst [vmem:[%s2 + $0x1a0] sm:$0xff] %v936
    %1001 = vst [vmem:[%s2 + $0x1a8] sm:$0xff] %v937
    %1002 = vst [vmem:[%s2 + $0x1b0] sm:$0xff] %v938
    %1003 = vst [vmem:[%s2 + $0x1b8] sm:$0xff] %v939
    %1004 = vst [vmem:[%s2 + $0x1c0] sm:$0xff] %v940
    %1005 = vst [vmem:[%s2 + $0x1c8] sm:$0xff] %v941
    %1006 = vst [vmem:[%s2 + $0x1d0] sm:$0xff] %v942
    %1007 = vst [vmem:[%s2 + $0x1d8] sm:$0xff] %v943
    %1008 = vst [vmem:[%s2 + $0x1e0] sm:$0xff] %v944
    %1009 = vst [vmem:[%s2 + $0x1e8] sm:$0xff] %v945
    %1010 = vst [vmem:[%s2 + $0x1f0] sm:$0xff] %v946
    %1011 = vst [vmem:[%s2 + $0x1f8] sm:$0xff] %v947
  $region17: #{unet_encoder_forward.5} parent=0 // pred_fallthru
    _
  // Predicated region
  $region18: #{unet_encoder_forward.5} parent=0 // pred_check
    _
  $region19: #{unet_encoder_forward.5} parent=0 // pred_check_branch
    %1013 = sbr.rel (0) target = $region21
  $region20: #{unet_encoder_forward.5} parent=0 // pred_region
    _
  $region21: #{unet_encoder_forward.5} parent=0 // pred_fallthru
    _
  // Predicated region
  $region22: #{unet_encoder_forward.5} parent=0 // pred_check
    _
  $region23: #{unet_encoder_forward.5} parent=0 // pred_check_branch
    %1015 = sbr.rel (0) target = $region25
  $region24: #{unet_encoder_forward.5} parent=0 // pred_region
    _
  $region25: #{unet_encoder_forward.5} parent=0 // pred_fallthru
    _

// kernel: unet_encoder_forward.6
$region0: #{unet_encoder_forward.6}
  #allocation0 [shape = 'u32[]', space=smem, size = 0x4, offset = 0x4, fixed_abs, tag = 'smem constant byte address 0x4 - core index']
  #allocation1 [shape = 'u32[144,128]{1,0:T(1,128)}', space=vmem, size = 0x12000, scoped, tag = 'internal scratch']
  #allocation2 [shape = 'f32[128,128]{1,0:T(8,128)}', space=vmem, size = 0x10000, scoped, tag = 'scratch operand']
  %s0 = inlined_call_operand.vmem [shape: bf16[128,128], index: 0, kind: input, shape index: {}]
  %s1 = inlined_call_operand.vmem [shape: bf16[128,128], index: 1, kind: input, shape index: {}]
  %s2 = inlined_call_operand.vmem [shape: f32[128,128], index: 2, kind: output, shape index: {0}]
  %s3 = inlined_call_operand.vmem [shape: f32[1,128], index: 3, kind: output, shape index: {1}]
  %s4 = inlined_call_operand.vmem [shape: f32[1,128], index: 4, kind: output, shape index: {2}]
  %5 = xla_tuple %s2, %s3, %s4
  %s6 = sld [smem:[#allocation0]]
  $region46: #{unet_encoder_forward.6} parent=0
    _
  %s8 = ssub.s32 1, %s6
  %s9 = scalar_select 0, %s8, %s6
  // Predicated region
  $region2: #{unet_encoder_forward.6} parent=0 // pred_check
    _
  $region3: #{unet_encoder_forward.6} parent=0 // pred_check_branch
    %11 = sbr.rel (0) target = $region5
  $region4: #{unet_encoder_forward.6} parent=0 // pred_region
    _
  $region5: #{unet_encoder_forward.6} parent=0 // pred_fallthru
    _
  // Predicated region
  $region6: #{unet_encoder_forward.6} parent=0 // pred_check
    _
  $region7: #{unet_encoder_forward.6} parent=0 // pred_check_branch
    %13 = sbr.rel (0) target = $region9
  $region8: #{unet_encoder_forward.6} parent=0 // pred_region
    _
  $region9: #{unet_encoder_forward.6} parent=0 // pred_fallthru
    _
  %p15 = scmp.eq.s32.totalorder 0, 0
  // Predicated region
  $region10: #{unet_encoder_forward.6} parent=0 // pred_check
    %p16 = pneg %p15
  $region11: #{unet_encoder_forward.6} parent=0 // pred_check_branch
    %18 = sbr.rel (%p16) target = $region13
  $region12: #{unet_encoder_forward.6} parent=0 // pred_region
    %19 = vst [vmem:[#allocation2] sm:$0xff] 0.0
    %20 = vst [vmem:[#allocation2 + $0x8] sm:$0xff] 0.0
    %21 = vst [vmem:[#allocation2 + $0x10] sm:$0xff] 0.0
    %22 = vst [vmem:[#allocation2 + $0x18] sm:$0xff] 0.0
    %23 = vst [vmem:[#allocation2 + $0x20] sm:$0xff] 0.0
    %24 = vst [vmem:[#allocation2 + $0x28] sm:$0xff] 0.0
    %25 = vst [vmem:[#allocation2 + $0x30] sm:$0xff] 0.0
    %26 = vst [vmem:[#allocation2 + $0x38] sm:$0xff] 0.0
    %27 = vst [vmem:[#allocation2 + $0x40] sm:$0xff] 0.0
    %28 = vst [vmem:[#allocation2 + $0x48] sm:$0xff] 0.0
    %29 = vst [vmem:[#allocation2 + $0x50] sm:$0xff] 0.0
    %30 = vst [vmem:[#allocation2 + $0x58] sm:$0xff] 0.0
    %31 = vst [vmem:[#allocation2 + $0x60] sm:$0xff] 0.0
    %32 = vst [vmem:[#allocation2 + $0x68] sm:$0xff] 0.0
    %33 = vst [vmem:[#allocation2 + $0x70] sm:$0xff] 0.0
    %34 = vst [vmem:[#allocation2 + $0x78] sm:$0xff] 0.0
  $region13: #{unet_encoder_forward.6} parent=0 // pred_fallthru
    _
  %v35 = vld [vmem:[#allocation2] sm:$0xff]
  %v36 = vld [vmem:[#allocation2 + $0x8] sm:$0xff]
  %v37 = vld [vmem:[#allocation2 + $0x10] sm:$0xff]
  %v38 = vld [vmem:[#allocation2 + $0x18] sm:$0xff]
  %v39 = vld [vmem:[#allocation2 + $0x20] sm:$0xff]
  %v40 = vld [vmem:[#allocation2 + $0x28] sm:$0xff]
  %v41 = vld [vmem:[#allocation2 + $0x30] sm:$0xff]
  %v42 = vld [vmem:[#allocation2 + $0x38] sm:$0xff]
  %v43 = vld [vmem:[#allocation2 + $0x40] sm:$0xff]
  %v44 = vld [vmem:[#allocation2 + $0x48] sm:$0xff]
  %v45 = vld [vmem:[#allocation2 + $0x50] sm:$0xff]
  %v46 = vld [vmem:[#allocation2 + $0x58] sm:$0xff]
  %v47 = vld [vmem:[#allocation2 + $0x60] sm:$0xff]
  %v48 = vld [vmem:[#allocation2 + $0x68] sm:$0xff]
  %v49 = vld [vmem:[#allocation2 + $0x70] sm:$0xff]
  %v50 = vld [vmem:[#allocation2 + $0x78] sm:$0xff]
  %v51 = vld [vmem:[%s0] sm:$0xf]
  %v52 = vld [vmem:[%s0 + $0x4] sm:$0xf]
  %v53 = vld [vmem:[%s0 + $0x8] sm:$0xf]
  %v54 = vld [vmem:[%s0 + $0xc] sm:$0xf]
  %v55 = vld [vmem:[%s0 + $0x10] sm:$0xf]
  %v56 = vld [vmem:[%s0 + $0x14] sm:$0xf]
  %v57 = vld [vmem:[%s0 + $0x18] sm:$0xf]
  %v58 = vld [vmem:[%s0 + $0x1c] sm:$0xf]
  %v59 = vld [vmem:[%s0 + $0x20] sm:$0xf]
  %v60 = vld [vmem:[%s0 + $0x24] sm:$0xf]
  %v61 = vld [vmem:[%s0 + $0x28] sm:$0xf]
  %v62 = vld [vmem:[%s0 + $0x2c] sm:$0xf]
  %v63 = vld [vmem:[%s0 + $0x30] sm:$0xf]
  %v64 = vld [vmem:[%s0 + $0x34] sm:$0xf]
  %v65 = vld [vmem:[%s0 + $0x38] sm:$0xf]
  %v66 = vld [vmem:[%s0 + $0x3c] sm:$0xf]
  %v67 = vld [vmem:[%s1] sm:$0xf]
  %v68 = vld [vmem:[%s1 + $0x4] sm:$0xf]
  %v69 = vld [vmem:[%s1 + $0x8] sm:$0xf]
  %v70 = vld [vmem:[%s1 + $0xc] sm:$0xf]
  %v71 = vld [vmem:[%s1 + $0x10] sm:$0xf]
  %v72 = vld [vmem:[%s1 + $0x14] sm:$0xf]
  %v73 = vld [vmem:[%s1 + $0x18] sm:$0xf]
  %v74 = vld [vmem:[%s1 + $0x1c] sm:$0xf]
  %v75 = vld [vmem:[%s1 + $0x20] sm:$0xf]
  %v76 = vld [vmem:[%s1 + $0x24] sm:$0xf]
  %v77 = vld [vmem:[%s1 + $0x28] sm:$0xf]
  %v78 = vld [vmem:[%s1 + $0x2c] sm:$0xf]
  %v79 = vld [vmem:[%s1 + $0x30] sm:$0xf]
  %v80 = vld [vmem:[%s1 + $0x34] sm:$0xf]
  %v81 = vld [vmem:[%s1 + $0x38] sm:$0xf]
  %v82 = vld [vmem:[%s1 + $0x3c] sm:$0xf]
  %v99 = vunpack.c.l.b16 %v51
  %v100 = vunpack.c.l.b16 %v52
  %v101 = vunpack.c.l.b16 %v53
  %v102 = vunpack.c.l.b16 %v54
  %v103 = vunpack.c.l.b16 %v55
  %v104 = vunpack.c.l.b16 %v56
  %v105 = vunpack.c.l.b16 %v57
  %v106 = vunpack.c.l.b16 %v58
  %v107 = vunpack.c.l.b16 %v59
  %v108 = vunpack.c.l.b16 %v60
  %v109 = vunpack.c.l.b16 %v61
  %v110 = vunpack.c.l.b16 %v62
  %v111 = vunpack.c.l.b16 %v63
  %v112 = vunpack.c.l.b16 %v64
  %v113 = vunpack.c.l.b16 %v65
  %v114 = vunpack.c.l.b16 %v66
  %v115 = vpack.c.b16 %v100, %v99
  %v116 = vpack.c.b16 %v102, %v101
  %v117 = vpack.c.b16 %v104, %v103
  %v118 = vpack.c.b16 %v106, %v105
  %v119 = vpack.c.b16 %v108, %v107
  %v120 = vpack.c.b16 %v110, %v109
  %v121 = vpack.c.b16 %v112, %v111
  %v122 = vpack.c.b16 %v114, %v113
  %v147 = vunpack.c.l.b16 %v67
  %v148 = vunpack.c.l.b16 %v68
  %v149 = vunpack.c.l.b16 %v69
  %v150 = vunpack.c.l.b16 %v70
  %v151 = vunpack.c.l.b16 %v71
  %v152 = vunpack.c.l.b16 %v72
  %v153 = vunpack.c.l.b16 %v73
  %v154 = vunpack.c.l.b16 %v74
  %v155 = vunpack.c.l.b16 %v75
  %v156 = vunpack.c.l.b16 %v76
  %v157 = vunpack.c.l.b16 %v77
  %v158 = vunpack.c.l.b16 %v78
  %v159 = vunpack.c.l.b16 %v79
  %v160 = vunpack.c.l.b16 %v80
  %v161 = vunpack.c.l.b16 %v81
  %v162 = vunpack.c.l.b16 %v82
  %v163 = vpack.c.b16 %v148, %v147
  %v164 = vpack.c.b16 %v150, %v149
  %v165 = vpack.c.b16 %v152, %v151
  %v166 = vpack.c.b16 %v154, %v153
  %v167 = vpack.c.b16 %v156, %v155
  %v168 = vpack.c.b16 %v158, %v157
  %v169 = vpack.c.b16 %v160, %v159
  %v170 = vpack.c.b16 %v162, %v161
  %179 = vmatprep.subr.bf16.mxu0 0
  %180 = vmatpush1.bf16.msra.mxu0 %v163
  %181 = vmatprep.subr.bf16.mxu0 0
  %182 = vmatpush1.bf16.msra.mxu0 %v164
  %183 = vmatprep.subr.bf16.mxu0 0
  %184 = vmatpush1.bf16.msra.mxu0 %v165
  %185 = vmatprep.subr.bf16.mxu0 0
  %186 = vmatpush1.bf16.msra.mxu0 %v166
  %187 = vmatprep.subr.bf16.mxu0 0
  %188 = vmatpush1.bf16.msra.mxu0 %v167
  %189 = vmatprep.subr.bf16.mxu0 0
  %190 = vmatpush1.bf16.msra.mxu0 %v168
  %191 = vmatprep.subr.bf16.mxu0 0
  %192 = vmatpush1.bf16.msra.mxu0 %v169
  %193 = vmatprep.subr.bf16.mxu0 0
  %194 = vmatpush1.bf16.msra.mxu0 %v170
  %195 = vmatprep.subr.bf16.mxu0 0
  %196 = vmatpush1.bf16.msra.mxu0 0
  %197 = vmatprep.subr.bf16.mxu0 0
  %198 = vmatpush1.bf16.msra.mxu0 0
  %199 = vmatprep.subr.bf16.mxu0 0
  %200 = vmatpush1.bf16.msra.mxu0 0
  %201 = vmatprep.subr.bf16.mxu0 0
  %202 = vmatpush1.bf16.msra.mxu0 0
  %203 = vmatprep.subr.bf16.mxu0 0
  %204 = vmatpush1.bf16.msra.mxu0 0
  %205 = vmatprep.subr.bf16.mxu0 0
  %206 = vmatpush1.bf16.msra.mxu0 0
  %207 = vmatprep.subr.bf16.mxu0 0
  %208 = vmatpush1.bf16.msra.mxu0 0
  %209 = vmatprep.subr.bf16.mxu0 0
  %210 = vmatpush1.bf16.msra.mxu0 0
  %211 = vmatprep.mubr.bf16.mxu0 0
  %212 = vmatmul.mubr.bf16.gmra.mrb[0].mxu0 %v115
  %v213 = vpop.f32.mrb[0].mxu0
  %v214 = vadd.f32 0.0, %v213
  %v215 = vpop.f32.mrb[0].mxu0
  %v216 = vpop.f32.mrb[0].mxu0
  %v217 = vadd.f32 0.0, %v216
  %v218 = vpop.f32.mrb[0].mxu0
  %219 = vmatprep.mubr.bf16.mxu0 0
  %220 = vmatmul.mubr.bf16.gmra.mrb[0].mxu0 %v116
  %v221 = vpop.f32.mrb[0].mxu0
  %v222 = vadd.f32 0.0, %v221
  %v223 = vpop.f32.mrb[0].mxu0
  %v224 = vpop.f32.mrb[0].mxu0
  %v225 = vadd.f32 0.0, %v224
  %v226 = vpop.f32.mrb[0].mxu0
  %227 = vmatprep.mubr.bf16.mxu0 0
  %228 = vmatmul.mubr.bf16.gmra.mrb[0].mxu0 %v117
  %v229 = vpop.f32.mrb[0].mxu0
  %v230 = vadd.f32 0.0, %v229
  %v231 = vpop.f32.mrb[0].mxu0
  %v232 = vpop.f32.mrb[0].mxu0
  %v233 = vadd.f32 0.0, %v232
  %v234 = vpop.f32.mrb[0].mxu0
  %235 = vmatprep.mubr.bf16.mxu0 0
  %236 = vmatmul.mubr.bf16.gmra.mrb[0].mxu0 %v118
  %v237 = vpop.f32.mrb[0].mxu0
  %v238 = vadd.f32 0.0, %v237
  %v239 = vpop.f32.mrb[0].mxu0
  %v240 = vpop.f32.mrb[0].mxu0
  %v241 = vadd.f32 0.0, %v240
  %v242 = vpop.f32.mrb[0].mxu0
  %243 = vmatprep.mubr.bf16.mxu0 0
  %244 = vmatmul.mubr.bf16.gmra.mrb[0].mxu0 %v119
  %v245 = vpop.f32.mrb[0].mxu0
  %v246 = vadd.f32 0.0, %v245
  %v247 = vpop.f32.mrb[0].mxu0
  %v248 = vpop.f32.mrb[0].mxu0
  %v249 = vadd.f32 0.0, %v248
  %v250 = vpop.f32.mrb[0].mxu0
  %251 = vmatprep.mubr.bf16.mxu0 0
  %252 = vmatmul.mubr.bf16.gmra.mrb[0].mxu0 %v120
  %v253 = vpop.f32.mrb[0].mxu0
  %v254 = vadd.f32 0.0, %v253
  %v255 = vpop.f32.mrb[0].mxu0
  %v256 = vpop.f32.mrb[0].mxu0
  %v257 = vadd.f32 0.0, %v256
  %v258 = vpop.f32.mrb[0].mxu0
  %259 = vmatprep.mubr.bf16.mxu0 0
  %260 = vmatmul.mubr.bf16.gmra.mrb[0].mxu0 %v121
  %v261 = vpop.f32.mrb[0].mxu0
  %v262 = vadd.f32 0.0, %v261
  %v263 = vpop.f32.mrb[0].mxu0
  %v264 = vpop.f32.mrb[0].mxu0
  %v265 = vadd.f32 0.0, %v264
  %v266 = vpop.f32.mrb[0].mxu0
  %267 = vmatprep.mubr.bf16.mxu0 0
  %268 = vmatmul.mubr.bf16.gmra.mrb[0].mxu0 %v122
  %v269 = vpop.f32.mrb[0].mxu0
  %v270 = vadd.f32 0.0, %v269
  %v271 = vpop.f32.mrb[0].mxu0
  %v272 = vpop.f32.mrb[0].mxu0
  %v273 = vadd.f32 0.0, %v272
  %v274 = vpop.f32.mrb[0].mxu0
  %275 = vdwg.mxu0
  %v276 = vadd.f32 %v35, %v214
  %v277 = vadd.f32 %v36, %v217
  %v278 = vadd.f32 %v37, %v222
  %v279 = vadd.f32 %v38, %v225
  %v280 = vadd.f32 %v39, %v230
  %v281 = vadd.f32 %v40, %v233
  %v282 = vadd.f32 %v41, %v238
  %v283 = vadd.f32 %v42, %v241
  %v284 = vadd.f32 %v43, %v246
  %v285 = vadd.f32 %v44, %v249
  %v286 = vadd.f32 %v45, %v254
  %v287 = vadd.f32 %v46, %v257
  %v288 = vadd.f32 %v47, %v262
  %v289 = vadd.f32 %v48, %v265
  %v290 = vadd.f32 %v49, %v270
  %v291 = vadd.f32 %v50, %v273
  %292 = vst [vmem:[#allocation2] sm:$0xff] %v276
  %293 = vst [vmem:[#allocation2 + $0x8] sm:$0xff] %v277
  %294 = vst [vmem:[#allocation2 + $0x10] sm:$0xff] %v278
  %295 = vst [vmem:[#allocation2 + $0x18] sm:$0xff] %v279
  %296 = vst [vmem:[#allocation2 + $0x20] sm:$0xff] %v280
  %297 = vst [vmem:[#allocation2 + $0x28] sm:$0xff] %v281
  %298 = vst [vmem:[#allocation2 + $0x30] sm:$0xff] %v282
  %299 = vst [vmem:[#allocation2 + $0x38] sm:$0xff] %v283
  %300 = vst [vmem:[#allocation2 + $0x40] sm:$0xff] %v284
  %301 = vst [vmem:[#allocation2 + $0x48] sm:$0xff] %v285
  %302 = vst [vmem:[#allocation2 + $0x50] sm:$0xff] %v286
  %303 = vst [vmem:[#allocation2 + $0x58] sm:$0xff] %v287
  %304 = vst [vmem:[#allocation2 + $0x60] sm:$0xff] %v288
  %305 = vst [vmem:[#allocation2 + $0x68] sm:$0xff] %v289
  %306 = vst [vmem:[#allocation2 + $0x70] sm:$0xff] %v290
  %307 = vst [vmem:[#allocation2 + $0x78] sm:$0xff] %v291
  %p308 = scmp.eq.s32.totalorder 0, 0
  %p309 = pnand %p15, %p308
  %p310 = pneg %p309
  // Predicated region
  $region14: #{unet_encoder_forward.6} parent=0 // pred_check
    _
  $region15: #{unet_encoder_forward.6} parent=0 // pred_check_branch
    %312 = sbr.rel (%p309) target = $region17
  $region16: #{unet_encoder_forward.6} parent=0 // pred_region
    %313 = vst [vmem:[%s3] sm:$0x1] 0.0
    %314 = vst [vmem:[%s4] sm:$0x1] 0.0
  $region17: #{unet_encoder_forward.6} parent=0 // pred_fallthru
    _
  // Predicated region
  $region18: #{unet_encoder_forward.6} parent=0 // pred_check
    %p315 = pneg %p15
  $region19: #{unet_encoder_forward.6} parent=0 // pred_check_branch
    %317 = sbr.rel (%p315) target = $region21
  $region20: #{unet_encoder_forward.6} parent=0 // pred_region
    %v318 = vld [vmem:[#allocation2] sm:$0xff]
    %v319 = vld [vmem:[#allocation2 + $0x8] sm:$0xff]
    %v320 = vld [vmem:[#allocation2 + $0x10] sm:$0xff]
    %v321 = vld [vmem:[#allocation2 + $0x18] sm:$0xff]
    %v322 = vld [vmem:[#allocation2 + $0x20] sm:$0xff]
    %v323 = vld [vmem:[#allocation2 + $0x28] sm:$0xff]
    %v324 = vld [vmem:[#allocation2 + $0x30] sm:$0xff]
    %v325 = vld [vmem:[#allocation2 + $0x38] sm:$0xff]
    %v326 = vld [vmem:[#allocation2 + $0x40] sm:$0xff]
    %v327 = vld [vmem:[#allocation2 + $0x48] sm:$0xff]
    %v328 = vld [vmem:[#allocation2 + $0x50] sm:$0xff]
    %v329 = vld [vmem:[#allocation2 + $0x58] sm:$0xff]
    %v330 = vld [vmem:[#allocation2 + $0x60] sm:$0xff]
    %v331 = vld [vmem:[#allocation2 + $0x68] sm:$0xff]
    %v332 = vld [vmem:[#allocation2 + $0x70] sm:$0xff]
    %v333 = vld [vmem:[#allocation2 + $0x78] sm:$0xff]
    %334 = vst [vmem:[%s2] sm:$0xff] %v318
    %335 = vst [vmem:[%s2 + $0x8] sm:$0xff] %v319
    %336 = vst [vmem:[%s2 + $0x10] sm:$0xff] %v320
    %337 = vst [vmem:[%s2 + $0x18] sm:$0xff] %v321
    %338 = vst [vmem:[%s2 + $0x20] sm:$0xff] %v322
    %339 = vst [vmem:[%s2 + $0x28] sm:$0xff] %v323
    %340 = vst [vmem:[%s2 + $0x30] sm:$0xff] %v324
    %341 = vst [vmem:[%s2 + $0x38] sm:$0xff] %v325
    %342 = vst [vmem:[%s2 + $0x40] sm:$0xff] %v326
    %343 = vst [vmem:[%s2 + $0x48] sm:$0xff] %v327
    %344 = vst [vmem:[%s2 + $0x50] sm:$0xff] %v328
    %345 = vst [vmem:[%s2 + $0x58] sm:$0xff] %v329
    %346 = vst [vmem:[%s2 + $0x60] sm:$0xff] %v330
    %347 = vst [vmem:[%s2 + $0x68] sm:$0xff] %v331
    %348 = vst [vmem:[%s2 + $0x70] sm:$0xff] %v332
    %349 = vst [vmem:[%s2 + $0x78] sm:$0xff] %v333
    %v350 = vld [vmem:[%s3] sm:$0x1]
    %v351 = vadd.f32 %v318, %v319
    %v352 = vadd.f32 %v351, %v320
    %v353 = vadd.f32 %v352, %v321
    %v354 = vadd.f32 %v353, %v322
    %v355 = vadd.f32 %v354, %v323
    %v356 = vadd.f32 %v355, %v324
    %v357 = vadd.f32 %v356, %v325
    %v358 = vadd.f32 %v357, %v326
    %v359 = vadd.f32 %v358, %v327
    %v360 = vadd.f32 %v359, %v328
    %v361 = vadd.f32 %v360, %v329
    %v362 = vadd.f32 %v361, %v330
    %v363 = vadd.f32 %v362, %v331
    %v364 = vadd.f32 %v363, %v332
    %v365 = vadd.f32 %v364, %v333
    %v366 = vrot.slane %v365, 4
    %v367 = vadd.f32 %v365, %v366
    %v368 = vrot.slane %v367, 2
    %v369 = vadd.f32 %v367, %v368
    %v370 = vrot.slane %v369, 1
    %v371 = vadd.f32 %v369, %v370
    %v372 = vadd.f32 %v350, %v371
    %373 = vst [vmem:[%s3] sm:$0x1] %v372
    %v374 = vld [vmem:[%s4] sm:$0x1]
    %v375 = vmul.f32 %v318, %v318
    %v376 = vmul.f32 %v319, %v319
    %v377 = vmul.f32 %v320, %v320
    %v378 = vmul.f32 %v321, %v321
    %v379 = vmul.f32 %v322, %v322
    %v380 = vmul.f32 %v323, %v323
    %v381 = vmul.f32 %v324, %v324
    %v382 = vmul.f32 %v325, %v325
    %v383 = vmul.f32 %v326, %v326
    %v384 = vmul.f32 %v327, %v327
    %v385 = vmul.f32 %v328, %v328
    %v386 = vmul.f32 %v329, %v329
    %v387 = vmul.f32 %v330, %v330
    %v388 = vmul.f32 %v331, %v331
    %v389 = vmul.f32 %v332, %v332
    %v390 = vmul.f32 %v333, %v333
    %v391 = vadd.f32 %v375, %v376
    %v392 = vadd.f32 %v391, %v377
    %v393 = vadd.f32 %v392, %v378
    %v394 = vadd.f32 %v393, %v379
    %v395 = vadd.f32 %v394, %v380
    %v396 = vadd.f32 %v395, %v381
    %v397 = vadd.f32 %v396, %v382
    %v398 = vadd.f32 %v397, %v383
    %v399 = vadd.f32 %v398, %v384
    %v400 = vadd.f32 %v399, %v385
    %v401 = vadd.f32 %v400, %v386
    %v402 = vadd.f32 %v401, %v387
    %v403 = vadd.f32 %v402, %v388
    %v404 = vadd.f32 %v403, %v389
    %v405 = vadd.f32 %v404, %v390
    %v406 = vrot.slane %v405, 4
    %v407 = vadd.f32 %v405, %v406
    %v408 = vrot.slane %v407, 2
    %v409 = vadd.f32 %v407, %v408
    %v410 = vrot.slane %v409, 1
    %v411 = vadd.f32 %v409, %v410
    %v412 = vadd.f32 %v374, %v411
    %413 = vst [vmem:[%s4] sm:$0x1] %v412
  $region21: #{unet_encoder_forward.6} parent=0 // pred_fallthru
    _
  // Predicated region
  $region22: #{unet_encoder_forward.6} parent=0 // pred_check
    _
  $region23: #{unet_encoder_forward.6} parent=0 // pred_check_branch
    %415 = sbr.rel (0) target = $region25
  $region24: #{unet_encoder_forward.6} parent=0 // pred_region
    _
  $region25: #{unet_encoder_forward.6} parent=0 // pred_fallthru
    _
  // Predicated region
  $region26: #{unet_encoder_forward.6} parent=0 // pred_check
    _
  $region27: #{unet_encoder_forward.6} parent=0 // pred_check_branch
    %417 = sbr.rel (0) target = $region29
  $region28: #{unet_encoder_forward.6} parent=0 // pred_region
    _
  $region29: #{unet_encoder_forward.6} parent=0 // pred_fallthru
    _
  // Predicated region
  $region30: #{unet_encoder_forward.6} parent=0 // pred_check
    _
  $region31: #{unet_encoder_forward.6} parent=0 // pred_check_branch
    %419 = sbr.rel (0) target = $region33
  $region32: #{unet_encoder_forward.6} parent=0 // pred_region
    _
  $region33: #{unet_encoder_forward.6} parent=0 // pred_fallthru
    _
  // Predicated region
  $region34: #{unet_encoder_forward.6} parent=0 // pred_check
    _
  $region35: #{unet_encoder_forward.6} parent=0 // pred_check_branch
    %421 = sbr.rel (0) target = $region37
  $region36: #{unet_encoder_forward.6} parent=0 // pred_region
    _
  $region37: #{unet_encoder_forward.6} parent=0 // pred_fallthru
    _
  // Predicated region
  $region38: #{unet_encoder_forward.6} parent=0 // pred_check
    _
  $region39: #{unet_encoder_forward.6} parent=0 // pred_check_branch
    %423 = sbr.rel (0) target = $region41
  $region40: #{unet_encoder_forward.6} parent=0 // pred_region
    _
  $region41: #{unet_encoder_forward.6} parent=0 // pred_fallthru
    _
  // Predicated region
  $region42: #{unet_encoder_forward.6} parent=0 // pred_check
    _
  $region43: #{unet_encoder_forward.6} parent=0 // pred_check_branch
    %425 = sbr.rel (0) target = $region45
  $region44: #{unet_encoder_forward.6} parent=0 // pred_region
    _
  $region45: #{unet_encoder_forward.6} parent=0 // pred_fallthru
    _

// kernel: unet_encoder_forward.7
$region0: #{unet_encoder_forward.7}
  #allocation0 [shape = 'u32[]', space=smem, size = 0x4, offset = 0x4, fixed_abs, tag = 'smem constant byte address 0x4 - core index']
  #allocation1 [shape = 'u32[144,128]{1,0:T(1,128)}', space=vmem, size = 0x12000, scoped, tag = 'internal scratch']
  #allocation2 [shape = 'f32[32,128]{1,0:T(8,128)}', space=vmem, size = 0x4000, scoped, tag = 'scratch operand']
  %s0 = inlined_call_operand.vmem [shape: bf16[32,256], index: 0, kind: input, shape index: {}]
  %s1 = inlined_call_operand.vmem [shape: bf16[256,128], index: 1, kind: input, shape index: {}]
  %s2 = inlined_call_operand.vmem [shape: f32[32,128], index: 2, kind: output, shape index: {0}]
  %s3 = inlined_call_operand.vmem [shape: f32[1,128], index: 3, kind: output, shape index: {1}]
  %s4 = inlined_call_operand.vmem [shape: f32[1,128], index: 4, kind: output, shape index: {2}]
  %5 = xla_tuple %s2, %s3, %s4
  %s6 = sld [smem:[#allocation0]]
  $region46: #{unet_encoder_forward.7} parent=0
    _
  %s8 = ssub.s32 1, %s6
  %s9 = scalar_select 0, %s8, %s6
  // Predicated region
  $region2: #{unet_encoder_forward.7} parent=0 // pred_check
    _
  $region3: #{unet_encoder_forward.7} parent=0 // pred_check_branch
    %11 = sbr.rel (0) target = $region5
  $region4: #{unet_encoder_forward.7} parent=0 // pred_region
    _
  $region5: #{unet_encoder_forward.7} parent=0 // pred_fallthru
    _
  // Predicated region
  $region6: #{unet_encoder_forward.7} parent=0 // pred_check
    _
  $region7: #{unet_encoder_forward.7} parent=0 // pred_check_branch
    %13 = sbr.rel (0) target = $region9
  $region8: #{unet_encoder_forward.7} parent=0 // pred_region
    _
  $region9: #{unet_encoder_forward.7} parent=0 // pred_fallthru
    _
  %p15 = scmp.eq.s32.totalorder 0, 0
  // Predicated region
  $region10: #{unet_encoder_forward.7} parent=0 // pred_check
    %p16 = pneg %p15
  $region11: #{unet_encoder_forward.7} parent=0 // pred_check_branch
    %18 = sbr.rel (%p16) target = $region13
  $region12: #{unet_encoder_forward.7} parent=0 // pred_region
    %19 = vst [vmem:[#allocation2] sm:$0xff] 0.0
    %20 = vst [vmem:[#allocation2 + $0x8] sm:$0xff] 0.0
    %21 = vst [vmem:[#allocation2 + $0x10] sm:$0xff] 0.0
    %22 = vst [vmem:[#allocation2 + $0x18] sm:$0xff] 0.0
  $region13: #{unet_encoder_forward.7} parent=0 // pred_fallthru
    _
  %v23 = vld [vmem:[#allocation2] sm:$0xff]
  %v24 = vld [vmem:[#allocation2 + $0x8] sm:$0xff]
  %v25 = vld [vmem:[#allocation2 + $0x10] sm:$0xff]
  %v26 = vld [vmem:[#allocation2 + $0x18] sm:$0xff]
  %v27 = vld [vmem:[%s0] sm:$0xff]
  %v28 = vld [vmem:[%s0 + $0x8] sm:$0xff]
  %v29 = vld [vmem:[%s0 + $0x10] sm:$0xff]
  %v30 = vld [vmem:[%s0 + $0x18] sm:$0xff]
  %v31 = vld [vmem:[%s1] sm:$0xf]
  %v32 = vld [vmem:[%s1 + $0x4] sm:$0xf]
  %v33 = vld [vmem:[%s1 + $0x8] sm:$0xf]
  %v34 = vld [vmem:[%s1 + $0xc] sm:$0xf]
  %v35 = vld [vmem:[%s1 + $0x10] sm:$0xf]
  %v36 = vld [vmem:[%s1 + $0x14] sm:$0xf]
  %v37 = vld [vmem:[%s1 + $0x18] sm:$0xf]
  %v38 = vld [vmem:[%s1 + $0x1c] sm:$0xf]
  %v39 = vld [vmem:[%s1 + $0x20] sm:$0xf]
  %v40 = vld [vmem:[%s1 + $0x24] sm:$0xf]
  %v41 = vld [vmem:[%s1 + $0x28] sm:$0xf]
  %v42 = vld [vmem:[%s1 + $0x2c] sm:$0xf]
  %v43 = vld [vmem:[%s1 + $0x30] sm:$0xf]
  %v44 = vld [vmem:[%s1 + $0x34] sm:$0xf]
  %v45 = vld [vmem:[%s1 + $0x38] sm:$0xf]
  %v46 = vld [vmem:[%s1 + $0x3c] sm:$0xf]
  %v47 = vld [vmem:[%s1 + $0x40] sm:$0xf]
  %v48 = vld [vmem:[%s1 + $0x44] sm:$0xf]
  %v49 = vld [vmem:[%s1 + $0x48] sm:$0xf]
  %v50 = vld [vmem:[%s1 + $0x4c] sm:$0xf]
  %v51 = vld [vmem:[%s1 + $0x50] sm:$0xf]
  %v52 = vld [vmem:[%s1 + $0x54] sm:$0xf]
  %v53 = vld [vmem:[%s1 + $0x58] sm:$0xf]
  %v54 = vld [vmem:[%s1 + $0x5c] sm:$0xf]
  %v55 = vld [vmem:[%s1 + $0x60] sm:$0xf]
  %v56 = vld [vmem:[%s1 + $0x64] sm:$0xf]
  %v57 = vld [vmem:[%s1 + $0x68] sm:$0xf]
  %v58 = vld [vmem:[%s1 + $0x6c] sm:$0xf]
  %v59 = vld [vmem:[%s1 + $0x70] sm:$0xf]
  %v60 = vld [vmem:[%s1 + $0x74] sm:$0xf]
  %v61 = vld [vmem:[%s1 + $0x78] sm:$0xf]
  %v62 = vld [vmem:[%s1 + $0x7c] sm:$0xf]
  %v67 = vunpack.c.l.b16 %v27
  %v68 = vunpack.c.h.b16 %v27
  %v69 = vunpack.c.l.b16 %v28
  %v70 = vunpack.c.h.b16 %v28
  %v71 = vunpack.c.l.b16 %v29
  %v72 = vunpack.c.h.b16 %v29
  %v73 = vunpack.c.l.b16 %v30
  %v74 = vunpack.c.h.b16 %v30
  %v75 = vpack.c.b16 %v69, %v67
  %v76 = vpack.c.b16 %v70, %v68
  %v77 = vpack.c.b16 %v73, %v71
  %v78 = vpack.c.b16 %v74, %v72
  %v115 = vunpack.c.l.b16 %v31
  %v116 = vunpack.c.l.b16 %v32
  %v117 = vunpack.c.l.b16 %v33
  %v118 = vunpack.c.l.b16 %v34
  %v119 = vunpack.c.l.b16 %v35
  %v120 = vunpack.c.l.b16 %v36
  %v121 = vunpack.c.l.b16 %v37
  %v122 = vunpack.c.l.b16 %v38
  %v123 = vunpack.c.l.b16 %v39
  %v124 = vunpack.c.l.b16 %v40
  %v125 = vunpack.c.l.b16 %v41
  %v126 = vunpack.c.l.b16 %v42
  %v127 = vunpack.c.l.b16 %v43
  %v128 = vunpack.c.l.b16 %v44
  %v129 = vunpack.c.l.b16 %v45
  %v130 = vunpack.c.l.b16 %v46
  %v131 = vunpack.c.l.b16 %v47
  %v132 = vunpack.c.l.b16 %v48
  %v133 = vunpack.c.l.b16 %v49
  %v134 = vunpack.c.l.b16 %v50
  %v135 = vunpack.c.l.b16 %v51
  %v136 = vunpack.c.l.b16 %v52
  %v137 = vunpack.c.l.b16 %v53
  %v138 = vunpack.c.l.b16 %v54
  %v139 = vunpack.c.l.b16 %v55
  %v140 = vunpack.c.l.b16 %v56
  %v141 = vunpack.c.l.b16 %v57
  %v142 = vunpack.c.l.b16 %v58
  %v143 = vunpack.c.l.b16 %v59
  %v144 = vunpack.c.l.b16 %v60
  %v145 = vunpack.c.l.b16 %v61
  %v146 = vunpack.c.l.b16 %v62
  %v147 = vpack.c.b16 %v116, %v115
  %v148 = vpack.c.b16 %v118, %v117
  %v149 = vpack.c.b16 %v120, %v119
  %v150 = vpack.c.b16 %v122, %v121
  %v151 = vpack.c.b16 %v124, %v123
  %v152 = vpack.c.b16 %v126, %v125
  %v153 = vpack.c.b16 %v128, %v127
  %v154 = vpack.c.b16 %v130, %v129
  %v155 = vpack.c.b16 %v132, %v131
  %v156 = vpack.c.b16 %v134, %v133
  %v157 = vpack.c.b16 %v136, %v135
  %v158 = vpack.c.b16 %v138, %v137
  %v159 = vpack.c.b16 %v140, %v139
  %v160 = vpack.c.b16 %v142, %v141
  %v161 = vpack.c.b16 %v144, %v143
  %v162 = vpack.c.b16 %v146, %v145
  %179 = vmatprep.subr.bf16.mxu0 0
  %180 = vmatpush1.bf16.msra.mxu0 %v147
  %181 = vmatprep.subr.bf16.mxu0 0
  %182 = vmatpush1.bf16.msra.mxu0 %v148
  %183 = vmatprep.subr.bf16.mxu0 0
  %184 = vmatpush1.bf16.msra.mxu0 %v149
  %185 = vmatprep.subr.bf16.mxu0 0
  %186 = vmatpush1.bf16.msra.mxu0 %v150
  %187 = vmatprep.subr.bf16.mxu0 0
  %188 = vmatpush1.bf16.msra.mxu0 %v151
  %189 = vmatprep.subr.bf16.mxu0 0
  %190 = vmatpush1.bf16.msra.mxu0 %v152
  %191 = vmatprep.subr.bf16.mxu0 0
  %192 = vmatpush1.bf16.msra.mxu0 %v153
  %193 = vmatprep.subr.bf16.mxu0 0
  %194 = vmatpush1.bf16.msra.mxu0 %v154
  %195 = vmatprep.subr.bf16.mxu0 0
  %196 = vmatpush1.bf16.msra.mxu0 %v155
  %197 = vmatprep.subr.bf16.mxu0 0
  %198 = vmatpush1.bf16.msra.mxu0 %v156
  %199 = vmatprep.subr.bf16.mxu0 0
  %200 = vmatpush1.bf16.msra.mxu0 %v157
  %201 = vmatprep.subr.bf16.mxu0 0
  %202 = vmatpush1.bf16.msra.mxu0 %v158
  %203 = vmatprep.subr.bf16.mxu0 0
  %204 = vmatpush1.bf16.msra.mxu0 %v159
  %205 = vmatprep.subr.bf16.mxu0 0
  %206 = vmatpush1.bf16.msra.mxu0 %v160
  %207 = vmatprep.subr.bf16.mxu0 0
  %208 = vmatpush1.bf16.msra.mxu0 %v161
  %209 = vmatprep.subr.bf16.mxu0 0
  %210 = vmatpush1.bf16.msra.mxu0 %v162
  %211 = vmatprep.mubr.bf16.mxu0 %v76
  %212 = vmatmul.mubr.bf16.gmra.mrb[0].mxu0 %v75
  %v213 = vpop.f32.mrb[0].mxu0
  %v214 = vadd.f32 0.0, %v213
  %v215 = vpop.f32.mrb[0].mxu0
  %v216 = vpop.f32.mrb[0].mxu0
  %v217 = vadd.f32 0.0, %v216
  %v218 = vpop.f32.mrb[0].mxu0
  %219 = vmatprep.mubr.bf16.mxu0 %v78
  %220 = vmatmul.mubr.bf16.gmra.mrb[0].mxu0 %v77
  %v221 = vpop.f32.mrb[0].mxu0
  %v222 = vadd.f32 0.0, %v221
  %v223 = vpop.f32.mrb[0].mxu0
  %v224 = vpop.f32.mrb[0].mxu0
  %v225 = vadd.f32 0.0, %v224
  %v226 = vpop.f32.mrb[0].mxu0
  %227 = vdwg.mxu0
  %v228 = vadd.f32 %v23, %v214
  %v229 = vadd.f32 %v24, %v217
  %v230 = vadd.f32 %v25, %v222
  %v231 = vadd.f32 %v26, %v225
  %232 = vst [vmem:[#allocation2] sm:$0xff] %v228
  %233 = vst [vmem:[#allocation2 + $0x8] sm:$0xff] %v229
  %234 = vst [vmem:[#allocation2 + $0x10] sm:$0xff] %v230
  %235 = vst [vmem:[#allocation2 + $0x18] sm:$0xff] %v231
  %p236 = scmp.eq.s32.totalorder 0, 0
  %p237 = pnand %p15, %p236
  %p238 = pneg %p237
  // Predicated region
  $region14: #{unet_encoder_forward.7} parent=0 // pred_check
    _
  $region15: #{unet_encoder_forward.7} parent=0 // pred_check_branch
    %240 = sbr.rel (%p237) target = $region17
  $region16: #{unet_encoder_forward.7} parent=0 // pred_region
    %241 = vst [vmem:[%s3] sm:$0x1] 0.0
    %242 = vst [vmem:[%s4] sm:$0x1] 0.0
  $region17: #{unet_encoder_forward.7} parent=0 // pred_fallthru
    _
  // Predicated region
  $region18: #{unet_encoder_forward.7} parent=0 // pred_check
    %p243 = pneg %p15
  $region19: #{unet_encoder_forward.7} parent=0 // pred_check_branch
    %245 = sbr.rel (%p243) target = $region21
  $region20: #{unet_encoder_forward.7} parent=0 // pred_region
    %v246 = vld [vmem:[#allocation2] sm:$0xff]
    %v247 = vld [vmem:[#allocation2 + $0x8] sm:$0xff]
    %v248 = vld [vmem:[#allocation2 + $0x10] sm:$0xff]
    %v249 = vld [vmem:[#allocation2 + $0x18] sm:$0xff]
    %250 = vst [vmem:[%s2] sm:$0xff] %v246
    %251 = vst [vmem:[%s2 + $0x8] sm:$0xff] %v247
    %252 = vst [vmem:[%s2 + $0x10] sm:$0xff] %v248
    %253 = vst [vmem:[%s2 + $0x18] sm:$0xff] %v249
    %v254 = vld [vmem:[%s3] sm:$0x1]
    %v255 = vadd.f32 %v246, %v247
    %v256 = vadd.f32 %v255, %v248
    %v257 = vadd.f32 %v256, %v249
    %v258 = vrot.slane %v257, 4
    %v259 = vadd.f32 %v257, %v258
    %v260 = vrot.slane %v259, 2
    %v261 = vadd.f32 %v259, %v260
    %v262 = vrot.slane %v261, 1
    %v263 = vadd.f32 %v261, %v262
    %v264 = vadd.f32 %v254, %v263
    %265 = vst [vmem:[%s3] sm:$0x1] %v264
    %v266 = vld [vmem:[%s4] sm:$0x1]
    %v267 = vmul.f32 %v246, %v246
    %v268 = vmul.f32 %v247, %v247
    %v269 = vmul.f32 %v248, %v248
    %v270 = vmul.f32 %v249, %v249
    %v271 = vadd.f32 %v267, %v268
    %v272 = vadd.f32 %v271, %v269
    %v273 = vadd.f32 %v272, %v270
    %v274 = vrot.slane %v273, 4
    %v275 = vadd.f32 %v273, %v274
    %v276 = vrot.slane %v275, 2
    %v277 = vadd.f32 %v275, %v276
    %v278 = vrot.slane %v277, 1
    %v279 = vadd.f32 %v277, %v278
    %v280 = vadd.f32 %v266, %v279
    %281 = vst [vmem:[%s4] sm:$0x1] %v280
  $region21: #{unet_encoder_forward.7} parent=0 // pred_fallthru
    _
  // Predicated region
  $region22: #{unet_encoder_forward.7} parent=0 // pred_check
    _
  $region23: #{unet_encoder_forward.7} parent=0 // pred_check_branch
    %283 = sbr.rel (0) target = $region25
  $region24: #{unet_encoder_forward.7} parent=0 // pred_region
    _
  $region25: #{unet_encoder_forward.7} parent=0 // pred_fallthru
    _
  // Predicated region
  $region26: #{unet_encoder_forward.7} parent=0 // pred_check
    _
  $region27: #{unet_encoder_forward.7} parent=0 // pred_check_branch
    %285 = sbr.rel (0) target = $region29
  $region28: #{unet_encoder_forward.7} parent=0 // pred_region
    _
  $region29: #{unet_encoder_forward.7} parent=0 // pred_fallthru
    _
  // Predicated region
  $region30: #{unet_encoder_forward.7} parent=0 // pred_check
    _
  $region31: #{unet_encoder_forward.7} parent=0 // pred_check_branch
    %287 = sbr.rel (0) target = $region33
  $region32: #{unet_encoder_forward.7} parent=0 // pred_region
    _
  $region33: #{unet_encoder_forward.7} parent=0 // pred_fallthru
    _
  // Predicated region
  $region34: #{unet_encoder_forward.7} parent=0 // pred_check
    _
  $region35: #{unet_encoder_forward.7} parent=0 // pred_check_branch
    %289 = sbr.rel (0) target = $region37
  $region36: #{unet_encoder_forward.7} parent=0 // pred_region
    _
  $region37: #{unet_encoder_forward.7} parent=0 // pred_fallthru
    _
  // Predicated region
  $region38: #{unet_encoder_forward.7} parent=0 // pred_check
    _
  $region39: #{unet_encoder_forward.7} parent=0 // pred_check_branch
    %291 = sbr.rel (0) target = $region41
  $region40: #{unet_encoder_forward.7} parent=0 // pred_region
    _
  $region41: #{unet_encoder_forward.7} parent=0 // pred_fallthru
    _
  // Predicated region
  $region42: #{unet_encoder_forward.7} parent=0 // pred_check
    _
  $region43: #{unet_encoder_forward.7} parent=0 // pred_check_branch
    %293 = sbr.rel (0) target = $region45
  $region44: #{unet_encoder_forward.7} parent=0 // pred_region
    _
  $region45: #{unet_encoder_forward.7} parent=0 // pred_fallthru
    _

// kernel: unet_encoder_forward.8
$region0: #{unet_encoder_forward.8}
  #allocation0 [shape = 'u32[]', space=smem, size = 0x4, offset = 0x4, fixed_abs, tag = 'smem constant byte address 0x4 - core index']
  #allocation1 [shape = 'u32[144,128]{1,0:T(1,128)}', space=vmem, size = 0x12000, scoped, tag = 'internal scratch']
  #allocation2 [shape = 'f32[24,128]{1,0:T(8,128)}', space=vmem, size = 0x3000, scoped, tag = 'scratch operand']
  %s0 = inlined_call_operand.vmem [shape: bf16[24,512], index: 0, kind: input, shape index: {}]
  %s1 = inlined_call_operand.vmem [shape: bf16[512,128], index: 1, kind: input, shape index: {}]
  %s2 = inlined_call_operand.vmem [shape: f32[24,128], index: 2, kind: output, shape index: {0}]
  %s3 = inlined_call_operand.vmem [shape: f32[1,128], index: 3, kind: output, shape index: {1}]
  %s4 = inlined_call_operand.vmem [shape: f32[1,128], index: 4, kind: output, shape index: {2}]
  %5 = xla_tuple %s2, %s3, %s4
  %s6 = sld [smem:[#allocation0]]
  $region46: #{unet_encoder_forward.8} parent=0
    _
  %s8 = ssub.s32 1, %s6
  %s9 = scalar_select 0, %s8, %s6
  // Predicated region
  $region2: #{unet_encoder_forward.8} parent=0 // pred_check
    _
  $region3: #{unet_encoder_forward.8} parent=0 // pred_check_branch
    %11 = sbr.rel (0) target = $region5
  $region4: #{unet_encoder_forward.8} parent=0 // pred_region
    _
  $region5: #{unet_encoder_forward.8} parent=0 // pred_fallthru
    _
  // Predicated region
  $region6: #{unet_encoder_forward.8} parent=0 // pred_check
    _
  $region7: #{unet_encoder_forward.8} parent=0 // pred_check_branch
    %13 = sbr.rel (0) target = $region9
  $region8: #{unet_encoder_forward.8} parent=0 // pred_region
    _
  $region9: #{unet_encoder_forward.8} parent=0 // pred_fallthru
    _
  %p15 = scmp.eq.s32.totalorder 0, 0
  // Predicated region
  $region10: #{unet_encoder_forward.8} parent=0 // pred_check
    %p16 = pneg %p15
  $region11: #{unet_encoder_forward.8} parent=0 // pred_check_branch
    %18 = sbr.rel (%p16) target = $region13
  $region12: #{unet_encoder_forward.8} parent=0 // pred_region
    %19 = vst [vmem:[#allocation2] sm:$0xff] 0.0
    %20 = vst [vmem:[#allocation2 + $0x8] sm:$0xff] 0.0
    %21 = vst [vmem:[#allocation2 + $0x10] sm:$0xff] 0.0
  $region13: #{unet_encoder_forward.8} parent=0 // pred_fallthru
    _
  %v22 = vld [vmem:[#allocation2] sm:$0xff]
  %v23 = vld [vmem:[#allocation2 + $0x8] sm:$0xff]
  %v24 = vld [vmem:[#allocation2 + $0x10] sm:$0xff]
  %v25 = vld [vmem:[%s0] sm:$0xff]
  %v26 = vld [vmem:[%s0 + $0x8] sm:$0xff]
  %v27 = vld [vmem:[%s0 + $0x10] sm:$0xff]
  %v28 = vld [vmem:[%s0 + $0x18] sm:$0xff]
  %v29 = vld [vmem:[%s0 + $0x20] sm:$0xff]
  %v30 = vld [vmem:[%s0 + $0x28] sm:$0xff]
  %v31 = vld [vmem:[%s1] sm:$0xf]
  %v32 = vld [vmem:[%s1 + $0x4] sm:$0xf]
  %v33 = vld [vmem:[%s1 + $0x8] sm:$0xf]
  %v34 = vld [vmem:[%s1 + $0xc] sm:$0xf]
  %v35 = vld [vmem:[%s1 + $0x10] sm:$0xf]
  %v36 = vld [vmem:[%s1 + $0x14] sm:$0xf]
  %v37 = vld [vmem:[%s1 + $0x18] sm:$0xf]
  %v38 = vld [vmem:[%s1 + $0x1c] sm:$0xf]
  %v39 = vld [vmem:[%s1 + $0x20] sm:$0xf]
  %v40 = vld [vmem:[%s1 + $0x24] sm:$0xf]
  %v41 = vld [vmem:[%s1 + $0x28] sm:$0xf]
  %v42 = vld [vmem:[%s1 + $0x2c] sm:$0xf]
  %v43 = vld [vmem:[%s1 + $0x30] sm:$0xf]
  %v44 = vld [vmem:[%s1 + $0x34] sm:$0xf]
  %v45 = vld [vmem:[%s1 + $0x38] sm:$0xf]
  %v46 = vld [vmem:[%s1 + $0x3c] sm:$0xf]
  %v47 = vld [vmem:[%s1 + $0x40] sm:$0xf]
  %v48 = vld [vmem:[%s1 + $0x44] sm:$0xf]
  %v49 = vld [vmem:[%s1 + $0x48] sm:$0xf]
  %v50 = vld [vmem:[%s1 + $0x4c] sm:$0xf]
  %v51 = vld [vmem:[%s1 + $0x50] sm:$0xf]
  %v52 = vld [vmem:[%s1 + $0x54] sm:$0xf]
  %v53 = vld [vmem:[%s1 + $0x58] sm:$0xf]
  %v54 = vld [vmem:[%s1 + $0x5c] sm:$0xf]
  %v55 = vld [vmem:[%s1 + $0x60] sm:$0xf]
  %v56 = vld [vmem:[%s1 + $0x64] sm:$0xf]
  %v57 = vld [vmem:[%s1 + $0x68] sm:$0xf]
  %v58 = vld [vmem:[%s1 + $0x6c] sm:$0xf]
  %v59 = vld [vmem:[%s1 + $0x70] sm:$0xf]
  %v60 = vld [vmem:[%s1 + $0x74] sm:$0xf]
  %v61 = vld [vmem:[%s1 + $0x78] sm:$0xf]
  %v62 = vld [vmem:[%s1 + $0x7c] sm:$0xf]
  %v63 = vld [vmem:[%s1 + $0x80] sm:$0xf]
  %v64 = vld [vmem:[%s1 + $0x84] sm:$0xf]
  %v65 = vld [vmem:[%s1 + $0x88] sm:$0xf]
  %v66 = vld [vmem:[%s1 + $0x8c] sm:$0xf]
  %v67 = vld [vmem:[%s1 + $0x90] sm:$0xf]
  %v68 = vld [vmem:[%s1 + $0x94] sm:$0xf]
  %v69 = vld [vmem:[%s1 + $0x98] sm:$0xf]
  %v70 = vld [vmem:[%s1 + $0x9c] sm:$0xf]
  %v71 = vld [vmem:[%s1 + $0xa0] sm:$0xf]
  %v72 = vld [vmem:[%s1 + $0xa4] sm:$0xf]
  %v73 = vld [vmem:[%s1 + $0xa8] sm:$0xf]
  %v74 = vld [vmem:[%s1 + $0xac] sm:$0xf]
  %v75 = vld [vmem:[%s1 + $0xb0] sm:$0xf]
  %v76 = vld [vmem:[%s1 + $0xb4] sm:$0xf]
  %v77 = vld [vmem:[%s1 + $0xb8] sm:$0xf]
  %v78 = vld [vmem:[%s1 + $0xbc] sm:$0xf]
  %v79 = vld [vmem:[%s1 + $0xc0] sm:$0xf]
  %v80 = vld [vmem:[%s1 + $0xc4] sm:$0xf]
  %v81 = vld [vmem:[%s1 + $0xc8] sm:$0xf]
  %v82 = vld [vmem:[%s1 + $0xcc] sm:$0xf]
  %v83 = vld [vmem:[%s1 + $0xd0] sm:$0xf]
  %v84 = vld [vmem:[%s1 + $0xd4] sm:$0xf]
  %v85 = vld [vmem:[%s1 + $0xd8] sm:$0xf]
  %v86 = vld [vmem:[%s1 + $0xdc] sm:$0xf]
  %v87 = vld [vmem:[%s1 + $0xe0] sm:$0xf]
  %v88 = vld [vmem:[%s1 + $0xe4] sm:$0xf]
  %v89 = vld [vmem:[%s1 + $0xe8] sm:$0xf]
  %v90 = vld [vmem:[%s1 + $0xec] sm:$0xf]
  %v91 = vld [vmem:[%s1 + $0xf0] sm:$0xf]
  %v92 = vld [vmem:[%s1 + $0xf4] sm:$0xf]
  %v93 = vld [vmem:[%s1 + $0xf8] sm:$0xf]
  %v94 = vld [vmem:[%s1 + $0xfc] sm:$0xf]
  %v101 = vunpack.c.l.b16 %v25
  %v102 = vunpack.c.h.b16 %v25
  %v103 = vunpack.c.l.b16 %v26
  %v104 = vunpack.c.h.b16 %v26
  %v105 = vunpack.c.l.b16 %v27
  %v106 = vunpack.c.h.b16 %v27
  %v107 = vunpack.c.l.b16 %v28
  %v108 = vunpack.c.h.b16 %v28
  %v109 = vunpack.c.l.b16 %v29
  %v110 = vunpack.c.h.b16 %v29
  %v111 = vunpack.c.l.b16 %v30
  %v112 = vunpack.c.h.b16 %v30
  %v113 = vpack.c.b16 %v105, %v101
  %v114 = vpack.c.b16 %v106, %v102
  %v115 = vpack.c.b16 %v107, %v103
  %v116 = vpack.c.b16 %v108, %v104
  %v117 = vpack.c.b16 %v109, %v109
  %v118 = vpack.c.b16 %v110, %v110
  %v119 = vpack.c.b16 %v111, %v111
  %v120 = vpack.c.b16 %v112, %v112
  %v193 = vunpack.c.l.b16 %v31
  %v194 = vunpack.c.l.b16 %v32
  %v195 = vunpack.c.l.b16 %v33
  %v196 = vunpack.c.l.b16 %v34
  %v197 = vunpack.c.l.b16 %v35
  %v198 = vunpack.c.l.b16 %v36
  %v199 = vunpack.c.l.b16 %v37
  %v200 = vunpack.c.l.b16 %v38
  %v201 = vunpack.c.l.b16 %v39
  %v202 = vunpack.c.l.b16 %v40
  %v203 = vunpack.c.l.b16 %v41
  %v204 = vunpack.c.l.b16 %v42
  %v205 = vunpack.c.l.b16 %v43
  %v206 = vunpack.c.l.b16 %v44
  %v207 = vunpack.c.l.b16 %v45
  %v208 = vunpack.c.l.b16 %v46
  %v209 = vunpack.c.l.b16 %v47
  %v210 = vunpack.c.l.b16 %v48
  %v211 = vunpack.c.l.b16 %v49
  %v212 = vunpack.c.l.b16 %v50
  %v213 = vunpack.c.l.b16 %v51
  %v214 = vunpack.c.l.b16 %v52
  %v215 = vunpack.c.l.b16 %v53
  %v216 = vunpack.c.l.b16 %v54
  %v217 = vunpack.c.l.b16 %v55
  %v218 = vunpack.c.l.b16 %v56
  %v219 = vunpack.c.l.b16 %v57
  %v220 = vunpack.c.l.b16 %v58
  %v221 = vunpack.c.l.b16 %v59
  %v222 = vunpack.c.l.b16 %v60
  %v223 = vunpack.c.l.b16 %v61
  %v224 = vunpack.c.l.b16 %v62
  %v225 = vunpack.c.l.b16 %v63
  %v226 = vunpack.c.l.b16 %v64
  %v227 = vunpack.c.l.b16 %v65
  %v228 = vunpack.c.l.b16 %v66
  %v229 = vunpack.c.l.b16 %v67
  %v230 = vunpack.c.l.b16 %v68
  %v231 = vunpack.c.l.b16 %v69
  %v232 = vunpack.c.l.b16 %v70
  %v233 = vunpack.c.l.b16 %v71
  %v234 = vunpack.c.l.b16 %v72
  %v235 = vunpack.c.l.b16 %v73
  %v236 = vunpack.c.l.b16 %v74
  %v237 = vunpack.c.l.b16 %v75
  %v238 = vunpack.c.l.b16 %v76
  %v239 = vunpack.c.l.b16 %v77
  %v240 = vunpack.c.l.b16 %v78
  %v241 = vunpack.c.l.b16 %v79
  %v242 = vunpack.c.l.b16 %v80
  %v243 = vunpack.c.l.b16 %v81
  %v244 = vunpack.c.l.b16 %v82
  %v245 = vunpack.c.l.b16 %v83
  %v246 = vunpack.c.l.b16 %v84
  %v247 = vunpack.c.l.b16 %v85
  %v248 = vunpack.c.l.b16 %v86
  %v249 = vunpack.c.l.b16 %v87
  %v250 = vunpack.c.l.b16 %v88
  %v251 = vunpack.c.l.b16 %v89
  %v252 = vunpack.c.l.b16 %v90
  %v253 = vunpack.c.l.b16 %v91
  %v254 = vunpack.c.l.b16 %v92
  %v255 = vunpack.c.l.b16 %v93
  %v256 = vunpack.c.l.b16 %v94
  %v257 = vpack.c.b16 %v194, %v193
  %v258 = vpack.c.b16 %v196, %v195
  %v259 = vpack.c.b16 %v198, %v197
  %v260 = vpack.c.b16 %v200, %v199
  %v261 = vpack.c.b16 %v202, %v201
  %v262 = vpack.c.b16 %v204, %v203
  %v263 = vpack.c.b16 %v206, %v205
  %v264 = vpack.c.b16 %v208, %v207
  %v265 = vpack.c.b16 %v210, %v209
  %v266 = vpack.c.b16 %v212, %v211
  %v267 = vpack.c.b16 %v214, %v213
  %v268 = vpack.c.b16 %v216, %v215
  %v269 = vpack.c.b16 %v218, %v217
  %v270 = vpack.c.b16 %v220, %v219
  %v271 = vpack.c.b16 %v222, %v221
  %v272 = vpack.c.b16 %v224, %v223
  %v273 = vpack.c.b16 %v226, %v225
  %v274 = vpack.c.b16 %v228, %v227
  %v275 = vpack.c.b16 %v230, %v229
  %v276 = vpack.c.b16 %v232, %v231
  %v277 = vpack.c.b16 %v234, %v233
  %v278 = vpack.c.b16 %v236, %v235
  %v279 = vpack.c.b16 %v238, %v237
  %v280 = vpack.c.b16 %v240, %v239
  %v281 = vpack.c.b16 %v242, %v241
  %v282 = vpack.c.b16 %v244, %v243
  %v283 = vpack.c.b16 %v246, %v245
  %v284 = vpack.c.b16 %v248, %v247
  %v285 = vpack.c.b16 %v250, %v249
  %v286 = vpack.c.b16 %v252, %v251
  %v287 = vpack.c.b16 %v254, %v253
  %v288 = vpack.c.b16 %v256, %v255
  %321 = vmatprep.subr.bf16.mxu0 0
  %322 = vmatpush1.bf16.msra.mxu0 %v257
  %323 = vmatprep.subr.bf16.mxu0 0
  %324 = vmatpush1.bf16.msra.mxu0 %v258
  %325 = vmatprep.subr.bf16.mxu0 0
  %326 = vmatpush1.bf16.msra.mxu0 %v259
  %327 = vmatprep.subr.bf16.mxu0 0
  %328 = vmatpush1.bf16.msra.mxu0 %v260
  %329 = vmatprep.subr.bf16.mxu0 0
  %330 = vmatpush1.bf16.msra.mxu0 %v261
  %331 = vmatprep.subr.bf16.mxu0 0
  %332 = vmatpush1.bf16.msra.mxu0 %v262
  %333 = vmatprep.subr.bf16.mxu0 0
  %334 = vmatpush1.bf16.msra.mxu0 %v263
  %335 = vmatprep.subr.bf16.mxu0 0
  %336 = vmatpush1.bf16.msra.mxu0 %v264
  %337 = vmatprep.subr.bf16.mxu0 0
  %338 = vmatpush1.bf16.msra.mxu0 %v265
  %339 = vmatprep.subr.bf16.mxu0 0
  %340 = vmatpush1.bf16.msra.mxu0 %v266
  %341 = vmatprep.subr.bf16.mxu0 0
  %342 = vmatpush1.bf16.msra.mxu0 %v267
  %343 = vmatprep.subr.bf16.mxu0 0
  %344 = vmatpush1.bf16.msra.mxu0 %v268
  %345 = vmatprep.subr.bf16.mxu0 0
  %346 = vmatpush1.bf16.msra.mxu0 %v269
  %347 = vmatprep.subr.bf16.mxu0 0
  %348 = vmatpush1.bf16.msra.mxu0 %v270
  %349 = vmatprep.subr.bf16.mxu0 0
  %350 = vmatpush1.bf16.msra.mxu0 %v271
  %351 = vmatprep.subr.bf16.mxu0 0
  %352 = vmatpush1.bf16.msra.mxu0 %v272
  %353 = vmatprep.mubr.bf16.mxu0 %v114
  %354 = vmatmul.mubr.bf16.gmra.mrb[0].mxu0 %v113
  %v355 = vpop.f32.mrb[0].mxu0
  %v356 = vadd.f32 0.0, %v355
  %v357 = vpop.f32.mrb[0].mxu0
  %v358 = vpop.f32.mrb[0].mxu0
  %v359 = vadd.f32 0.0, %v358
  %v360 = vpop.f32.mrb[0].mxu0
  %361 = vmatprep.mubr.bf16.mxu0 %v118
  %362 = vmatmul.mubr.bf16.gmra.mrb[0].mxu0 %v117
  %v363 = vpop.f32.mrb[0].mxu0
  %v364 = vadd.f32 0.0, %v363
  %v365 = vpop.f32.mrb[0].mxu0
  %v366 = vpop.f32.mrb[0].mxu0
  %v367 = vpop.f32.mrb[0].mxu0
  %368 = vdwg.mxu0
  %369 = vmatprep.subr.bf16.mxu0 0
  %370 = vmatpush1.bf16.msra.mxu0 %v273
  %371 = vmatprep.subr.bf16.mxu0 0
  %372 = vmatpush1.bf16.msra.mxu0 %v274
  %373 = vmatprep.subr.bf16.mxu0 0
  %374 = vmatpush1.bf16.msra.mxu0 %v275
  %375 = vmatprep.subr.bf16.mxu0 0
  %376 = vmatpush1.bf16.msra.mxu0 %v276
  %377 = vmatprep.subr.bf16.mxu0 0
  %378 = vmatpush1.bf16.msra.mxu0 %v277
  %379 = vmatprep.subr.bf16.mxu0 0
  %380 = vmatpush1.bf16.msra.mxu0 %v278
  %381 = vmatprep.subr.bf16.mxu0 0
  %382 = vmatpush1.bf16.msra.mxu0 %v279
  %383 = vmatprep.subr.bf16.mxu0 0
  %384 = vmatpush1.bf16.msra.mxu0 %v280
  %385 = vmatprep.subr.bf16.mxu0 0
  %386 = vmatpush1.bf16.msra.mxu0 %v281
  %387 = vmatprep.subr.bf16.mxu0 0
  %388 = vmatpush1.bf16.msra.mxu0 %v282
  %389 = vmatprep.subr.bf16.mxu0 0
  %390 = vmatpush1.bf16.msra.mxu0 %v283
  %391 = vmatprep.subr.bf16.mxu0 0
  %392 = vmatpush1.bf16.msra.mxu0 %v284
  %393 = vmatprep.subr.bf16.mxu0 0
  %394 = vmatpush1.bf16.msra.mxu0 %v285
  %395 = vmatprep.subr.bf16.mxu0 0
  %396 = vmatpush1.bf16.msra.mxu0 %v286
  %397 = vmatprep.subr.bf16.mxu0 0
  %398 = vmatpush1.bf16.msra.mxu0 %v287
  %399 = vmatprep.subr.bf16.mxu0 0
  %400 = vmatpush1.bf16.msra.mxu0 %v288
  %401 = vmatprep.mubr.bf16.mxu0 %v116
  %402 = vmatmul.mubr.bf16.gmra.mrb[0].mxu0 %v115
  %v403 = vpop.f32.mrb[0].mxu0
  %v404 = vadd.f32 %v356, %v403
  %v405 = vpop.f32.mrb[0].mxu0
  %v406 = vpop.f32.mrb[0].mxu0
  %v407 = vadd.f32 %v359, %v406
  %v408 = vpop.f32.mrb[0].mxu0
  %409 = vmatprep.mubr.bf16.mxu0 %v120
  %410 = vmatmul.mubr.bf16.gmra.mrb[0].mxu0 %v119
  %v411 = vpop.f32.mrb[0].mxu0
  %v412 = vadd.f32 %v364, %v411
  %v413 = vpop.f32.mrb[0].mxu0
  %v414 = vpop.f32.mrb[0].mxu0
  %v415 = vpop.f32.mrb[0].mxu0
  %416 = vdwg.mxu0
  %v417 = vadd.f32 %v22, %v404
  %v418 = vadd.f32 %v23, %v407
  %v419 = vadd.f32 %v24, %v412
  %420 = vst [vmem:[#allocation2] sm:$0xff] %v417
  %421 = vst [vmem:[#allocation2 + $0x8] sm:$0xff] %v418
  %422 = vst [vmem:[#allocation2 + $0x10] sm:$0xff] %v419
  %p423 = scmp.eq.s32.totalorder 0, 0
  %p424 = pnand %p15, %p423
  %p425 = pneg %p424
  // Predicated region
  $region14: #{unet_encoder_forward.8} parent=0 // pred_check
    _
  $region15: #{unet_encoder_forward.8} parent=0 // pred_check_branch
    %427 = sbr.rel (%p424) target = $region17
  $region16: #{unet_encoder_forward.8} parent=0 // pred_region
    %428 = vst [vmem:[%s3] sm:$0x1] 0.0
    %429 = vst [vmem:[%s4] sm:$0x1] 0.0
  $region17: #{unet_encoder_forward.8} parent=0 // pred_fallthru
    _
  // Predicated region
  $region18: #{unet_encoder_forward.8} parent=0 // pred_check
    %p430 = pneg %p15
  $region19: #{unet_encoder_forward.8} parent=0 // pred_check_branch
    %432 = sbr.rel (%p430) target = $region21
  $region20: #{unet_encoder_forward.8} parent=0 // pred_region
    %v433 = vld [vmem:[#allocation2] sm:$0xff]
    %v434 = vld [vmem:[#allocation2 + $0x8] sm:$0xff]
    %v435 = vld [vmem:[#allocation2 + $0x10] sm:$0xff]
    %436 = vst [vmem:[%s2] sm:$0xff] %v433
    %437 = vst [vmem:[%s2 + $0x8] sm:$0xff] %v434
    %438 = vst [vmem:[%s2 + $0x10] sm:$0xff] %v435
    %v439 = vld [vmem:[%s3] sm:$0x1]
    %v440 = vadd.f32 %v433, %v434
    %v441 = vadd.f32 %v440, %v435
    %v442 = vrot.slane %v441, 4
    %v443 = vadd.f32 %v441, %v442
    %v444 = vrot.slane %v443, 2
    %v445 = vadd.f32 %v443, %v444
    %v446 = vrot.slane %v445, 1
    %v447 = vadd.f32 %v445, %v446
    %v448 = vadd.f32 %v439, %v447
    %449 = vst [vmem:[%s3] sm:$0x1] %v448
    %v450 = vld [vmem:[%s4] sm:$0x1]
    %v451 = vmul.f32 %v433, %v433
    %v452 = vmul.f32 %v434, %v434
    %v453 = vmul.f32 %v435, %v435
    %v454 = vadd.f32 %v451, %v452
    %v455 = vadd.f32 %v454, %v453
    %v456 = vrot.slane %v455, 4
    %v457 = vadd.f32 %v455, %v456
    %v458 = vrot.slane %v457, 2
    %v459 = vadd.f32 %v457, %v458
    %v460 = vrot.slane %v459, 1
    %v461 = vadd.f32 %v459, %v460
    %v462 = vadd.f32 %v450, %v461
    %463 = vst [vmem:[%s4] sm:$0x1] %v462
  $region21: #{unet_encoder_forward.8} parent=0 // pred_fallthru
    _
  // Predicated region
  $region22: #{unet_encoder_forward.8} parent=0 // pred_check
    _
  $region23: #{unet_encoder_forward.8} parent=0 // pred_check_branch
    %465 = sbr.rel (0) target = $region25
  $region24: #{unet_encoder_forward.8} parent=0 // pred_region
    _
  $region25: #{unet_encoder_forward.8} parent=0 // pred_fallthru
    _
  // Predicated region
  $region26: #{unet_encoder_forward.8} parent=0 // pred_check
    _
  $region27: #{unet_encoder_forward.8} parent=0 // pred_check_branch
    %467 = sbr.rel (0) target = $region29
  $region28: #{unet_encoder_forward.8} parent=0 // pred_region
    _
  $region29: #{unet_encoder_forward.8} parent=0 // pred_fallthru
    _
  // Predicated region
  $region30: #{unet_encoder_forward.8} parent=0 // pred_check
    _
  $region31: #{unet_encoder_forward.8} parent=0 // pred_check_branch
    %469 = sbr.rel (0) target = $region33
  $region32: #{unet_encoder_forward.8} parent=0 // pred_region
    _
  $region33: #{unet_encoder_forward.8} parent=0 // pred_fallthru
    _
  // Predicated region
  $region34: #{unet_encoder_forward.8} parent=0 // pred_check
    _
  $region35: #{unet_encoder_forward.8} parent=0 // pred_check_branch
    %471 = sbr.rel (0) target = $region37
  $region36: #{unet_encoder_forward.8} parent=0 // pred_region
    _
  $region37: #{unet_encoder_forward.8} parent=0 // pred_fallthru
    _
  // Predicated region
  $region38: #{unet_encoder_forward.8} parent=0 // pred_check
    _
  $region39: #{unet_encoder_forward.8} parent=0 // pred_check_branch
    %473 = sbr.rel (0) target = $region41
  $region40: #{unet_encoder_forward.8} parent=0 // pred_region
    _
  $region41: #{unet_encoder_forward.8} parent=0 // pred_fallthru
    _
  // Predicated region
  $region42: #{unet_encoder_forward.8} parent=0 // pred_check
    _
  $region43: #{unet_encoder_forward.8} parent=0 // pred_check_branch
    %475 = sbr.rel (0) target = $region45
  $region44: #{unet_encoder_forward.8} parent=0 // pred_region
    _
  $region45: #{unet_encoder_forward.8} parent=0 // pred_fallthru
    _

// kernel: unet_encoder_forward.9
$region0: #{unet_encoder_forward.9}
  #allocation0 [shape = 'u32[]', space=smem, size = 0x4, offset = 0x4, fixed_abs, tag = 'smem constant byte address 0x4 - core index']
  #allocation1 [shape = 'u32[144,128]{1,0:T(1,128)}', space=vmem, size = 0x12000, scoped, tag = 'internal scratch']
  #allocation2 [shape = 'f32[8,128]{1,0:T(8,128)}', space=vmem, size = 0x1000, scoped, tag = 'scratch operand']
  %s0 = inlined_call_operand.vmem [shape: bf16[8,1024], index: 0, kind: input, shape index: {}]
  %s1 = inlined_call_operand.vmem [shape: bf16[1024,128], index: 1, kind: input, shape index: {}]
  %s2 = inlined_call_operand.vmem [shape: f32[8,128], index: 2, kind: output, shape index: {}]
  %s3 = sld [smem:[#allocation0]]
  $region49: #{unet_encoder_forward.9} parent=0
    _
  %s5 = ssub.s32 1, %s3
  %s6 = scalar_select 0, %s5, %s3
  loop: start=0, step=1, limit=4
  $region2: #{unet_encoder_forward.9} parent=0 // loop_pre_header
    _
  $region3: #{unet_encoder_forward.9} parent=0 // loop_header
    %s8 = sphi 0, %s12
    %p9 = scmp.ge.s32.totalorder %s8, 4
    %s15 = sphi 0, %s34
    %s16 = sphi 0, %s30
    %s17 = sphi 0, %s26
    %s18 = sphi 0, %s15
    %s19 = sphi 0, %s16
    %s20 = sphi 0, %s17
    %s21 = sphi 0, %s18
    %s22 = sphi 0, %s19
    %s23 = sphi 0, %s20
    %s39 = sphi 0, %s41
    %s42 = sphi 0, %s39
    %s43 = sphi 0, %s42
    %s59 = sphi 0, %s43
    %s67 = sphi 0, %s69
    %s70 = sphi 0, %s67
    %s71 = sphi 0, %s70
    %s87 = sphi 0, %s71
    %s95 = sphi 0, %s97
    %s98 = sphi 0, %s95
    %s99 = sphi 0, %s98
    %s115 = sphi 0, %s99
  $region4: #{unet_encoder_forward.9} parent=0 // loop_header_branch
    %11 = sbr.rel (%p9) target = $region8
  $region5: #{unet_encoder_forward.9} parent=0 // loop_body
    %s13 = ssub.s32 %s8, 1
    %s14 = ssub.s32 %s8, 2
    %s24 = sadd.s32 1, %s17
    %p25 = scmp.ge.s32.totalorder %s24, 2
    %s26 = scalar_select %p25, 0, %s24
    %s27 = sadd.s32 1, %s16
    %s28 = scalar_select %p25, %s27, %s16
    %p29 = scmp.ge.s32.totalorder %s28, 1
    %s30 = scalar_select %p29, 0, %s28
    %s31 = sadd.s32 1, %s15
    %s32 = scalar_select %p29, %s31, %s15
    %p33 = scmp.ge.s32.totalorder %s32, 1
    %s34 = scalar_select %p33, 0, %s32
    %s35 = ssub.s32 %s16, %s30
    %s36 = ssub.s32 %s17, %s26
    %s37 = sor.u32 %s35, %s36
    %p38 = scmp.eq.s32.totalorder %s37, 0
    %s40 = sadd.s32 %s39, 1
    %s41 = scalar_select %p38, %s39, %s40
    %p44 = pneg %p38
    %p45 = scmp.eq.s32.totalorder %s8, 1
    %p46 = por %p44, %p45
    %p47 = scmp.ne.s32.totalorder %s39, %s42
    %p48 = scmp.eq.s32.totalorder %s8, 0
    %p49 = por %p47, %p48
    %p50 = scmp.ne.s32.totalorder %s39, %s42
    %p51 = scmp.eq.s32.totalorder %s13, 1
    %p52 = por %p50, %p51
    %p53 = scmp.ne.s32.totalorder %s42, %s43
    %p54 = scmp.eq.s32.totalorder %s13, 0
    %p55 = por %p53, %p54
    %p56 = scmp.ne.s32.totalorder %s42, %s43
    %p57 = scmp.eq.s32.totalorder %s14, 1
    %p58 = por %p56, %p57
    %p60 = scmp.ne.s32.totalorder %s43, %s59
    %p61 = scmp.eq.s32.totalorder %s14, 0
    %p62 = por %p60, %p61
    %s63 = ssub.s32 %s17, %s26
    %s64 = ssub.s32 %s15, %s34
    %s65 = sor.u32 %s63, %s64
    %p66 = scmp.eq.s32.totalorder %s65, 0
    %s68 = sadd.s32 %s67, 1
    %s69 = scalar_select %p66, %s67, %s68
    %p72 = pneg %p66
    %p73 = scmp.eq.s32.totalorder %s8, 1
    %p74 = por %p72, %p73
    %p75 = scmp.ne.s32.totalorder %s67, %s70
    %p76 = scmp.eq.s32.totalorder %s8, 0
    %p77 = por %p75, %p76
    %p78 = scmp.ne.s32.totalorder %s67, %s70
    %p79 = scmp.eq.s32.totalorder %s13, 1
    %p80 = por %p78, %p79
    %p81 = scmp.ne.s32.totalorder %s70, %s71
    %p82 = scmp.eq.s32.totalorder %s13, 0
    %p83 = por %p81, %p82
    %p84 = scmp.ne.s32.totalorder %s70, %s71
    %p85 = scmp.eq.s32.totalorder %s14, 1
    %p86 = por %p84, %p85
    %p88 = scmp.ne.s32.totalorder %s71, %s87
    %p89 = scmp.eq.s32.totalorder %s14, 0
    %p90 = por %p88, %p89
    %s91 = ssub.s32 %s16, %s30
    %s92 = ssub.s32 %s15, %s34
    %s93 = sor.u32 %s91, %s92
    %p94 = scmp.eq.s32.totalorder %s93, 0
    %s96 = sadd.s32 %s95, 1
    %s97 = scalar_select %p94, %s95, %s96
    %p100 = pneg %p94
    %p101 = scmp.eq.s32.totalorder %s8, 1
    %p102 = por %p100, %p101
    %p103 = scmp.ne.s32.totalorder %s95, %s98
    %p104 = scmp.eq.s32.totalorder %s8, 0
    %p105 = por %p103, %p104
    %p106 = scmp.ne.s32.totalorder %s95, %s98
    %p107 = scmp.eq.s32.totalorder %s13, 1
    %p108 = por %p106, %p107
    %p109 = scmp.ne.s32.totalorder %s98, %s99
    %p110 = scmp.eq.s32.totalorder %s13, 0
    %p111 = por %p109, %p110
    %p112 = scmp.ne.s32.totalorder %s98, %s99
    %p113 = scmp.eq.s32.totalorder %s14, 1
    %p114 = por %p112, %p113
    %p116 = scmp.ne.s32.totalorder %s99, %s115
    %p117 = scmp.eq.s32.totalorder %s14, 0
    %p118 = por %p116, %p117
    %p119 = scmp.le.s32.totalorder 1, %s8
    %p120 = scmp.lt.s32.totalorder %s8, 3
    %p121 = pnand %p119, %p120
    %p122 = pneg %p121
    // Predicated region
    $region9: #{unet_encoder_forward.9} parent=5 // pred_check
      _
    $region10: #{unet_encoder_forward.9} parent=5 // pred_check_branch
      %124 = sbr.rel (%p121) target = $region12
    $region11: #{unet_encoder_forward.9} parent=5 // pred_region
      %s125 = ssub.s32 %s8, 1
    $region12: #{unet_encoder_forward.9} parent=5 // pred_fallthru
      _
    %p126 = scmp.lt.s32.totalorder %s8, 2
    // Predicated region
    $region13: #{unet_encoder_forward.9} parent=5 // pred_check
      %p127 = pneg %p126
    $region14: #{unet_encoder_forward.9} parent=5 // pred_check_branch
      %129 = sbr.rel (%p127) target = $region16
    $region15: #{unet_encoder_forward.9} parent=5 // pred_region
      // Predicated region
      $region17: #{unet_encoder_forward.9} parent=15 // pred_check
        %p130 = pneg %p49
      $region18: #{unet_encoder_forward.9} parent=15 // pred_check_branch
        %132 = sbr.rel (%p130) target = $region20
      $region19: #{unet_encoder_forward.9} parent=15 // pred_region
        %s133 = smul.u32 4, %s17
        %p134 = scmp.lt.s32.totalorder %s16, 0
        %s135 = scalar_select %p134, %s16, 0
        %p136 = scmp.lt.s32.totalorder %s133, 7
        %s137 = scalar_select %p136, %s133, 7
        %s138 = smul.addr %s135, 8
        %s139 = sadd.s32 %s137, %s138
        %s140 = smul.addr %s139, 4
        %s141 = scalar_lea.vmem %s0, %s140
        %s142 = smul.u32 4, %s17
      $region20: #{unet_encoder_forward.9} parent=15 // pred_fallthru
        _
      // Predicated region
      $region21: #{unet_encoder_forward.9} parent=15 // pred_check
        %p143 = pneg %p77
      $region22: #{unet_encoder_forward.9} parent=15 // pred_check_branch
        %145 = sbr.rel (%p143) target = $region24
      $region23: #{unet_encoder_forward.9} parent=15 // pred_region
        %s146 = smul.u32 64, %s17
        %p147 = scmp.lt.s32.totalorder %s146, 127
        %s148 = scalar_select %p147, %s146, 127
        %p149 = scmp.lt.s32.totalorder %s15, 0
        %s150 = scalar_select %p149, %s15, 0
        %s151 = sadd.s32 %s150, %s148
        %s152 = smul.addr %s151, 4
        %s153 = scalar_lea.vmem %s1, %s152
        %s154 = smul.u32 64, %s17
      $region24: #{unet_encoder_forward.9} parent=15 // pred_fallthru
        _
    $region16: #{unet_encoder_forward.9} parent=5 // pred_fallthru
      _
    %p155 = scmp.le.s32.totalorder 1, %s8
    %p156 = scmp.lt.s32.totalorder %s8, 3
    %p157 = pnand %p155, %p156
    %p158 = pneg %p157
    // Predicated region
    $region25: #{unet_encoder_forward.9} parent=5 // pred_check
      _
    $region26: #{unet_encoder_forward.9} parent=5 // pred_check_branch
      %160 = sbr.rel (%p157) target = $region28
    $region27: #{unet_encoder_forward.9} parent=5 // pred_region
      %s161 = ssub.s32 %s8, 1
      %s162 = smul.u32 4, %s20
      %p163 = scmp.lt.s32.totalorder %s19, 0
      %s164 = scalar_select %p163, %s19, 0
      %p165 = scmp.lt.s32.totalorder %s162, 7
      %s166 = scalar_select %p165, %s162, 7
      %s167 = smul.addr %s164, 8
      %s168 = sadd.s32 %s166, %s167
      %s169 = smul.addr %s168, 4
      %s170 = scalar_lea.vmem %s0, %s169
      %p171 = pneg %p55
      %p172 = pneg %p52
      %s173 = smul.u32 64, %s20
      %p174 = scmp.lt.s32.totalorder %s173, 127
      %s175 = scalar_select %p174, %s173, 127
      %p176 = scmp.lt.s32.totalorder %s18, 0
      %s177 = scalar_select %p176, %s18, 0
      %s178 = sadd.s32 %s177, %s175
      %s179 = smul.addr %s178, 4
      %s180 = scalar_lea.vmem %s1, %s179
      %p181 = pneg %p83
      %p182 = pneg %p80
      %p183 = pneg %p111
      %p184 = pneg %p108
      %p185 = scmp.lt.s32.totalorder %s19, 0
      %s186 = scalar_select %p185, %s19, 0
      %p187 = scmp.lt.s32.totalorder %s18, 0
      %s188 = scalar_select %p187, %s18, 0
      %s189 = sadd.s32 %s188, %s186
      %s190 = smul.addr %s189, 8
      %s191 = scalar_lea.vmem %s2, %s190
      %s192 = smul.u32 4, %s20
      %p193 = scmp.lt.s32.totalorder %s19, 0
      %s194 = scalar_select %p193, %s19, 0
      %p195 = scmp.lt.s32.totalorder %s192, 7
      %s196 = scalar_select %p195, %s192, 7
      %s197 = smul.addr %s194, 8
      %s198 = sadd.s32 %s196, %s197
      %s199 = smul.addr %s198, 4
      %s200 = scalar_lea.vmem %s0, %s199
      %s201 = smul.u32 4, %s20
      %s202 = smul.u32 64, %s20
      %p203 = scmp.lt.s32.totalorder %s202, 127
      %s204 = scalar_select %p203, %s202, 127
      %p205 = scmp.lt.s32.totalorder %s18, 0
      %s206 = scalar_select %p205, %s18, 0
      %s207 = sadd.s32 %s206, %s204
      %s208 = smul.addr %s207, 4
      %s209 = scalar_lea.vmem %s1, %s208
      %s210 = smul.u32 64, %s20
      %p211 = scmp.lt.s32.totalorder %s19, 0
      %s212 = scalar_select %p211, %s19, 0
      %p213 = scmp.lt.s32.totalorder %s18, 0
      %s214 = scalar_select %p213, %s18, 0
      %s215 = sadd.s32 %s214, %s212
      %s216 = smul.addr %s215, 8
      %s217 = scalar_lea.vmem %s2, %s216
      %p219 = scmp.eq.s32.totalorder %s20, 0
      // Predicated region
      $region29: #{unet_encoder_forward.9} parent=27 // pred_check
        %p220 = pneg %p219
      $region30: #{unet_encoder_forward.9} parent=27 // pred_check_branch
        %222 = sbr.rel (%p220) target = $region32
      $region31: #{unet_encoder_forward.9} parent=27 // pred_region
        %223 = vst [vmem:[#allocation2] sm:$0xff] 0.0
      $region32: #{unet_encoder_forward.9} parent=27 // pred_fallthru
        _
      %v224 = vld [vmem:[#allocation2] sm:$0xff]
      %v225 = vld [vmem:[%s200] sm:$0xff]
      %v226 = vld [vmem:[%s200 + $0x8] sm:$0xff]
      %v227 = vld [vmem:[%s209] sm:$0xf]
      %v228 = vld [vmem:[%s209 + $0x4] sm:$0xf]
      %v229 = vld [vmem:[%s209 + $0x8] sm:$0xf]
      %v230 = vld [vmem:[%s209 + $0xc] sm:$0xf]
      %v231 = vld [vmem:[%s209 + $0x10] sm:$0xf]
      %v232 = vld [vmem:[%s209 + $0x14] sm:$0xf]
      %v233 = vld [vmem:[%s209 + $0x18] sm:$0xf]
      %v234 = vld [vmem:[%s209 + $0x1c] sm:$0xf]
      %v235 = vld [vmem:[%s209 + $0x20] sm:$0xf]
      %v236 = vld [vmem:[%s209 + $0x24] sm:$0xf]
      %v237 = vld [vmem:[%s209 + $0x28] sm:$0xf]
      %v238 = vld [vmem:[%s209 + $0x2c] sm:$0xf]
      %v239 = vld [vmem:[%s209 + $0x30] sm:$0xf]
      %v240 = vld [vmem:[%s209 + $0x34] sm:$0xf]
      %v241 = vld [vmem:[%s209 + $0x38] sm:$0xf]
      %v242 = vld [vmem:[%s209 + $0x3c] sm:$0xf]
      %v243 = vld [vmem:[%s209 + $0x40] sm:$0xf]
      %v244 = vld [vmem:[%s209 + $0x44] sm:$0xf]
      %v245 = vld [vmem:[%s209 + $0x48] sm:$0xf]
      %v246 = vld [vmem:[%s209 + $0x4c] sm:$0xf]
      %v247 = vld [vmem:[%s209 + $0x50] sm:$0xf]
      %v248 = vld [vmem:[%s209 + $0x54] sm:$0xf]
      %v249 = vld [vmem:[%s209 + $0x58] sm:$0xf]
      %v250 = vld [vmem:[%s209 + $0x5c] sm:$0xf]
      %v251 = vld [vmem:[%s209 + $0x60] sm:$0xf]
      %v252 = vld [vmem:[%s209 + $0x64] sm:$0xf]
      %v253 = vld [vmem:[%s209 + $0x68] sm:$0xf]
      %v254 = vld [vmem:[%s209 + $0x6c] sm:$0xf]
      %v255 = vld [vmem:[%s209 + $0x70] sm:$0xf]
      %v256 = vld [vmem:[%s209 + $0x74] sm:$0xf]
      %v257 = vld [vmem:[%s209 + $0x78] sm:$0xf]
      %v258 = vld [vmem:[%s209 + $0x7c] sm:$0xf]
      %v259 = vld [vmem:[%s209 + $0x80] sm:$0xf]
      %v260 = vld [vmem:[%s209 + $0x84] sm:$0xf]
      %v261 = vld [vmem:[%s209 + $0x88] sm:$0xf]
      %v262 = vld [vmem:[%s209 + $0x8c] sm:$0xf]
      %v263 = vld [vmem:[%s209 + $0x90] sm:$0xf]
      %v264 = vld [vmem:[%s209 + $0x94] sm:$0xf]
      %v265 = vld [vmem:[%s209 + $0x98] sm:$0xf]
      %v266 = vld [vmem:[%s209 + $0x9c] sm:$0xf]
      %v267 = vld [vmem:[%s209 + $0xa0] sm:$0xf]
      %v268 = vld [vmem:[%s209 + $0xa4] sm:$0xf]
      %v269 = vld [vmem:[%s209 + $0xa8] sm:$0xf]
      %v270 = vld [vmem:[%s209 + $0xac] sm:$0xf]
      %v271 = vld [vmem:[%s209 + $0xb0] sm:$0xf]
      %v272 = vld [vmem:[%s209 + $0xb4] sm:$0xf]
      %v273 = vld [vmem:[%s209 + $0xb8] sm:$0xf]
      %v274 = vld [vmem:[%s209 + $0xbc] sm:$0xf]
      %v275 = vld [vmem:[%s209 + $0xc0] sm:$0xf]
      %v276 = vld [vmem:[%s209 + $0xc4] sm:$0xf]
      %v277 = vld [vmem:[%s209 + $0xc8] sm:$0xf]
      %v278 = vld [vmem:[%s209 + $0xcc] sm:$0xf]
      %v279 = vld [vmem:[%s209 + $0xd0] sm:$0xf]
      %v280 = vld [vmem:[%s209 + $0xd4] sm:$0xf]
      %v281 = vld [vmem:[%s209 + $0xd8] sm:$0xf]
      %v282 = vld [vmem:[%s209 + $0xdc] sm:$0xf]
      %v283 = vld [vmem:[%s209 + $0xe0] sm:$0xf]
      %v284 = vld [vmem:[%s209 + $0xe4] sm:$0xf]
      %v285 = vld [vmem:[%s209 + $0xe8] sm:$0xf]
      %v286 = vld [vmem:[%s209 + $0xec] sm:$0xf]
      %v287 = vld [vmem:[%s209 + $0xf0] sm:$0xf]
      %v288 = vld [vmem:[%s209 + $0xf4] sm:$0xf]
      %v289 = vld [vmem:[%s209 + $0xf8] sm:$0xf]
      %v290 = vld [vmem:[%s209 + $0xfc] sm:$0xf]
      %v293 = vunpack.c.l.b16 %v225
      %v294 = vunpack.c.h.b16 %v225
      %v295 = vunpack.c.l.b16 %v226
      %v296 = vunpack.c.h.b16 %v226
      %v297 = vpack.c.b16 %v293, %v293
      %v298 = vpack.c.b16 %v294, %v294
      %v299 = vpack.c.b16 %v295, %v295
      %v300 = vpack.c.b16 %v296, %v296
      %v369 = vunpack.c.l.b16 %v227
      %v370 = vunpack.c.l.b16 %v228
      %v371 = vunpack.c.l.b16 %v229
      %v372 = vunpack.c.l.b16 %v230
      %v373 = vunpack.c.l.b16 %v231
      %v374 = vunpack.c.l.b16 %v232
      %v375 = vunpack.c.l.b16 %v233
      %v376 = vunpack.c.l.b16 %v234
      %v377 = vunpack.c.l.b16 %v235
      %v378 = vunpack.c.l.b16 %v236
      %v379 = vunpack.c.l.b16 %v237
      %v380 = vunpack.c.l.b16 %v238
      %v381 = vunpack.c.l.b16 %v239
      %v382 = vunpack.c.l.b16 %v240
      %v383 = vunpack.c.l.b16 %v241
      %v384 = vunpack.c.l.b16 %v242
      %v385 = vunpack.c.l.b16 %v243
      %v386 = vunpack.c.l.b16 %v244
      %v387 = vunpack.c.l.b16 %v245
      %v388 = vunpack.c.l.b16 %v246
      %v389 = vunpack.c.l.b16 %v247
      %v390 = vunpack.c.l.b16 %v248
      %v391 = vunpack.c.l.b16 %v249
      %v392 = vunpack.c.l.b16 %v250
      %v393 = vunpack.c.l.b16 %v251
      %v394 = vunpack.c.l.b16 %v252
      %v395 = vunpack.c.l.b16 %v253
      %v396 = vunpack.c.l.b16 %v254
      %v397 = vunpack.c.l.b16 %v255
      %v398 = vunpack.c.l.b16 %v256
      %v399 = vunpack.c.l.b16 %v257
      %v400 = vunpack.c.l.b16 %v258
      %v401 = vunpack.c.l.b16 %v259
      %v402 = vunpack.c.l.b16 %v260
      %v403 = vunpack.c.l.b16 %v261
      %v404 = vunpack.c.l.b16 %v262
      %v405 = vunpack.c.l.b16 %v263
      %v406 = vunpack.c.l.b16 %v264
      %v407 = vunpack.c.l.b16 %v265
      %v408 = vunpack.c.l.b16 %v266
      %v409 = vunpack.c.l.b16 %v267
      %v410 = vunpack.c.l.b16 %v268
      %v411 = vunpack.c.l.b16 %v269
      %v412 = vunpack.c.l.b16 %v270
      %v413 = vunpack.c.l.b16 %v271
      %v414 = vunpack.c.l.b16 %v272
      %v415 = vunpack.c.l.b16 %v273
      %v416 = vunpack.c.l.b16 %v274
      %v417 = vunpack.c.l.b16 %v275
      %v418 = vunpack.c.l.b16 %v276
      %v419 = vunpack.c.l.b16 %v277
      %v420 = vunpack.c.l.b16 %v278
      %v421 = vunpack.c.l.b16 %v279
      %v422 = vunpack.c.l.b16 %v280
      %v423 = vunpack.c.l.b16 %v281
      %v424 = vunpack.c.l.b16 %v282
      %v425 = vunpack.c.l.b16 %v283
      %v426 = vunpack.c.l.b16 %v284
      %v427 = vunpack.c.l.b16 %v285
      %v428 = vunpack.c.l.b16 %v286
      %v429 = vunpack.c.l.b16 %v287
      %v430 = vunpack.c.l.b16 %v288
      %v431 = vunpack.c.l.b16 %v289
      %v432 = vunpack.c.l.b16 %v290
      %v433 = vpack.c.b16 %v370, %v369
      %v434 = vpack.c.b16 %v372, %v371
      %v435 = vpack.c.b16 %v374, %v373
      %v436 = vpack.c.b16 %v376, %v375
      %v437 = vpack.c.b16 %v378, %v377
      %v438 = vpack.c.b16 %v380, %v379
      %v439 = vpack.c.b16 %v382, %v381
      %v440 = vpack.c.b16 %v384, %v383
      %v441 = vpack.c.b16 %v386, %v385
      %v442 = vpack.c.b16 %v388, %v387
      %v443 = vpack.c.b16 %v390, %v389
      %v444 = vpack.c.b16 %v392, %v391
      %v445 = vpack.c.b16 %v394, %v393
      %v446 = vpack.c.b16 %v396, %v395
      %v447 = vpack.c.b16 %v398, %v397
      %v448 = vpack.c.b16 %v400, %v399
      %v449 = vpack.c.b16 %v402, %v401
      %v450 = vpack.c.b16 %v404, %v403
      %v451 = vpack.c.b16 %v406, %v405
      %v452 = vpack.c.b16 %v408, %v407
      %v453 = vpack.c.b16 %v410, %v409
      %v454 = vpack.c.b16 %v412, %v411
      %v455 = vpack.c.b16 %v414, %v413
      %v456 = vpack.c.b16 %v416, %v415
      %v457 = vpack.c.b16 %v418, %v417
      %v458 = vpack.c.b16 %v420, %v419
      %v459 = vpack.c.b16 %v422, %v421
      %v460 = vpack.c.b16 %v424, %v423
      %v461 = vpack.c.b16 %v426, %v425
      %v462 = vpack.c.b16 %v428, %v427
      %v463 = vpack.c.b16 %v430, %v429
      %v464 = vpack.c.b16 %v432, %v431
      %497 = vmatprep.subr.bf16.mxu0 0
      %498 = vmatpush1.bf16.msra.mxu0 %v433
      %499 = vmatprep.subr.bf16.mxu0 0
      %500 = vmatpush1.bf16.msra.mxu0 %v434
      %501 = vmatprep.subr.bf16.mxu0 0
      %502 = vmatpush1.bf16.msra.mxu0 %v435
      %503 = vmatprep.subr.bf16.mxu0 0
      %504 = vmatpush1.bf16.msra.mxu0 %v436
      %505 = vmatprep.subr.bf16.mxu0 0
      %506 = vmatpush1.bf16.msra.mxu0 %v437
      %507 = vmatprep.subr.bf16.mxu0 0
      %508 = vmatpush1.bf16.msra.mxu0 %v438
      %509 = vmatprep.subr.bf16.mxu0 0
      %510 = vmatpush1.bf16.msra.mxu0 %v439
      %511 = vmatprep.subr.bf16.mxu0 0
      %512 = vmatpush1.bf16.msra.mxu0 %v440
      %513 = vmatprep.subr.bf16.mxu0 0
      %514 = vmatpush1.bf16.msra.mxu0 %v441
      %515 = vmatprep.subr.bf16.mxu0 0
      %516 = vmatpush1.bf16.msra.mxu0 %v442
      %517 = vmatprep.subr.bf16.mxu0 0
      %518 = vmatpush1.bf16.msra.mxu0 %v443
      %519 = vmatprep.subr.bf16.mxu0 0
      %520 = vmatpush1.bf16.msra.mxu0 %v444
      %521 = vmatprep.subr.bf16.mxu0 0
      %522 = vmatpush1.bf16.msra.mxu0 %v445
      %523 = vmatprep.subr.bf16.mxu0 0
      %524 = vmatpush1.bf16.msra.mxu0 %v446
      %525 = vmatprep.subr.bf16.mxu0 0
      %526 = vmatpush1.bf16.msra.mxu0 %v447
      %527 = vmatprep.subr.bf16.mxu0 0
      %528 = vmatpush1.bf16.msra.mxu0 %v448
      %529 = vmatprep.mubr.bf16.mxu0 %v298
      %530 = vmatmul.mubr.bf16.gmra.mrb[0].mxu0 %v297
      %v531 = vpop.f32.mrb[0].mxu0
      %v532 = vadd.f32 0.0, %v531
      %v533 = vpop.f32.mrb[0].mxu0
      %v534 = vpop.f32.mrb[0].mxu0
      %v535 = vpop.f32.mrb[0].mxu0
      %536 = vdwg.mxu0
      %537 = vmatprep.subr.bf16.mxu0 0
      %538 = vmatpush1.bf16.msra.mxu0 %v449
      %539 = vmatprep.subr.bf16.mxu0 0
      %540 = vmatpush1.bf16.msra.mxu0 %v450
      %541 = vmatprep.subr.bf16.mxu0 0
      %542 = vmatpush1.bf16.msra.mxu0 %v451
      %543 = vmatprep.subr.bf16.mxu0 0
      %544 = vmatpush1.bf16.msra.mxu0 %v452
      %545 = vmatprep.subr.bf16.mxu0 0
      %546 = vmatpush1.bf16.msra.mxu0 %v453
      %547 = vmatprep.subr.bf16.mxu0 0
      %548 = vmatpush1.bf16.msra.mxu0 %v454
      %549 = vmatprep.subr.bf16.mxu0 0
      %550 = vmatpush1.bf16.msra.mxu0 %v455
      %551 = vmatprep.subr.bf16.mxu0 0
      %552 = vmatpush1.bf16.msra.mxu0 %v456
      %553 = vmatprep.subr.bf16.mxu0 0
      %554 = vmatpush1.bf16.msra.mxu0 %v457
      %555 = vmatprep.subr.bf16.mxu0 0
      %556 = vmatpush1.bf16.msra.mxu0 %v458
      %557 = vmatprep.subr.bf16.mxu0 0
      %558 = vmatpush1.bf16.msra.mxu0 %v459
      %559 = vmatprep.subr.bf16.mxu0 0
      %560 = vmatpush1.bf16.msra.mxu0 %v460
      %561 = vmatprep.subr.bf16.mxu0 0
      %562 = vmatpush1.bf16.msra.mxu0 %v461
      %563 = vmatprep.subr.bf16.mxu0 0
      %564 = vmatpush1.bf16.msra.mxu0 %v462
      %565 = vmatprep.subr.bf16.mxu0 0
      %566 = vmatpush1.bf16.msra.mxu0 %v463
      %567 = vmatprep.subr.bf16.mxu0 0
      %568 = vmatpush1.bf16.msra.mxu0 %v464
      %569 = vmatprep.mubr.bf16.mxu0 %v300
      %570 = vmatmul.mubr.bf16.gmra.mrb[0].mxu0 %v299
      %v571 = vpop.f32.mrb[0].mxu0
      %v572 = vadd.f32 %v532, %v571
      %v573 = vpop.f32.mrb[0].mxu0
      %v574 = vpop.f32.mrb[0].mxu0
      %v575 = vpop.f32.mrb[0].mxu0
      %576 = vdwg.mxu0
      %v577 = vadd.f32 %v224, %v572
      %578 = vst [vmem:[#allocation2] sm:$0xff] %v577
      %p579 = scmp.eq.s32.totalorder %s20, 1
      // Predicated region
      $region33: #{unet_encoder_forward.9} parent=27 // pred_check
        %p580 = pneg %p579
      $region34: #{unet_encoder_forward.9} parent=27 // pred_check_branch
        %582 = sbr.rel (%p580) target = $region36
      $region35: #{unet_encoder_forward.9} parent=27 // pred_region
        %v583 = vld [vmem:[#allocation2] sm:$0xff]
        %v584 = vsub.f32 0.0, %v583
        %v585 = vmul.f32 %v584, 1.442695
        %v586 = vpow.pop %v585
        %v587 = vadd.f32 %v586, 1.0
        %v588 = vrcp.pop %v587
        %v589 = vmul.f32 1.0, %v588
        %590 = vst [vmem:[%s217] sm:$0xff] %v589
      $region36: #{unet_encoder_forward.9} parent=27 // pred_fallthru
        _
      %p591 = scmp.lt.s32.totalorder %s19, 0
      %s592 = scalar_select %p591, %s19, 0
      %p593 = scmp.lt.s32.totalorder %s18, 0
      %s594 = scalar_select %p593, %s18, 0
      %s595 = sadd.s32 %s594, %s592
      %s596 = smul.addr %s595, 8
      %s597 = scalar_lea.vmem %s2, %s596
      // Predicated region
      $region37: #{unet_encoder_forward.9} parent=27 // pred_check
        %p598 = pneg %p108
      $region38: #{unet_encoder_forward.9} parent=27 // pred_check_branch
        %600 = sbr.rel (%p598) target = $region40
      $region39: #{unet_encoder_forward.9} parent=27 // pred_region
        _
      $region40: #{unet_encoder_forward.9} parent=27 // pred_fallthru
        _
      // Predicated region
      $region41: #{unet_encoder_forward.9} parent=27 // pred_check
        %p601 = pneg %p108
      $region42: #{unet_encoder_forward.9} parent=27 // pred_check_branch
        %603 = sbr.rel (%p601) target = $region44
      $region43: #{unet_encoder_forward.9} parent=27 // pred_region
        %p604 = scmp.lt.s32.totalorder %s19, 0
        %s605 = scalar_select %p604, %s19, 0
        %p606 = scmp.lt.s32.totalorder %s18, 0
        %s607 = scalar_select %p606, %s18, 0
        %s608 = sadd.s32 %s607, %s605
        %s609 = smul.addr %s608, 8
        %s610 = scalar_lea.vmem %s2, %s609
      $region44: #{unet_encoder_forward.9} parent=27 // pred_fallthru
        _
    $region28: #{unet_encoder_forward.9} parent=5 // pred_fallthru
      _
    %p611 = scmp.le.s32.totalorder 2, %s8
    // Predicated region
    $region45: #{unet_encoder_forward.9} parent=5 // pred_check
      %p612 = pneg %p611
    $region46: #{unet_encoder_forward.9} parent=5 // pred_check_branch
      %614 = sbr.rel (%p612) target = $region48
    $region47: #{unet_encoder_forward.9} parent=5 // pred_region
      %s615 = ssub.s32 %s8, 2
    $region48: #{unet_encoder_forward.9} parent=5 // pred_fallthru
      _
  $region6: #{unet_encoder_forward.9} parent=0 // loop_footer
    %s12 = sadd.s32 1, %s8
  $region7: #{unet_encoder_forward.9} parent=0 // loop_footer_branch
    %7 = sbr.rel target = $region3
  $region8: #{unet_encoder_forward.9} parent=0 // loop_exit
    _

</llo_original>
